<compile_context>
chip_gen: v7x
topology: tpu7x:2x2x1
jax: 0.10.0
libtpu: 0.0.40
codegen_flags: <defaults>
</compile_context>

<pallas_src>
import functools

import jax
import jax.numpy as jnp
from jax.experimental import pallas as pl
from jax.experimental.pallas import tpu as pltpu

D_MODEL = 512
D_FF = 2048
LN_EPS = 1e-5

_FF_CHUNK = 1024                 # D_FF handled in 2 chunks of 1024
_N_FF_CHUNKS = D_FF // _FF_CHUNK


def _round_up(n: int, m: int) -> int:
    return ((n + m - 1) // m) * m


def _cdiv(n: int, m: int) -> int:
    return (n + m - 1) // m


def _ffn_ln_kernel(x_ref, w1_ref, b1_ref, w2_ref, b2_ref, g_ref, beta_ref, o_ref):
    # x_ref: (tm, D_MODEL) tile of rows; parameter blocks are resident (single-buffered).
    x_f32 = x_ref[...].astype(jnp.float32)
    mm_dtype = w1_ref.dtype                # bf16 (fast MXU path) or f32 (exact check path)
    x_mm = x_f32.astype(mm_dtype)

    # Hoist parameter reads once per tile.
    b2 = b2_ref[...]
    gamma = g_ref[...]
    beta = beta_ref[...]

    # FFN with D_FF chunked: never materialize the full (tm, 2048) hidden in f32,
    # and interleave bias/ReLU/cast VPU work with the next chunk's MXU pushes.
    y = jnp.zeros((x_ref.shape[0], D_MODEL), jnp.float32)
    for c in range(_N_FF_CHUNKS):          # static 2-iteration unroll
        cs = c * _FF_CHUNK
        h = jnp.dot(x_mm, w1_ref[:, cs:cs + _FF_CHUNK],
                    preferred_element_type=jnp.float32)
        h = jnp.maximum(h + b1_ref[:, cs:cs + _FF_CHUNK], 0.0)
        y = y + jnp.dot(h.astype(mm_dtype), w2_ref[cs:cs + _FF_CHUNK, :],
                        preferred_element_type=jnp.float32)

    # Bias + residual in f32.
    z = y + b2 + x_f32

    # LayerNorm over the feature axis (biased variance, eps=1e-5, like torch).
    mean = jnp.mean(z, axis=-1, keepdims=True)
    zc = z - mean
    var = jnp.mean(zc * zc, axis=-1, keepdims=True)
    o_ref[...] = (zc * jax.lax.rsqrt(var + LN_EPS) * gamma + beta).astype(o_ref.dtype)


def _pick_row_tile(M: int, tm_max: int) -> int:
    """MXU-friendly row tile: least ragged waste, prefer >=2 (even) grid steps."""
    if M <= 256:
        return min(_round_up(M, 8), tm_max)
    cands = [t for t in (1024, 512, 384, 256) if t <= tm_max] or [tm_max]

    def score(t):
        steps = _cdiv(M, t)
        waste = steps * t - M                       # OOB rows on the ragged last block
        single = int(steps < 2)                     # grid=(1,) leaves a v7x core idle
        odd = steps % 2 if steps > 1 else 0
        return (waste, single, odd, -t)

    return min(cands, key=score)


@functools.partial(jax.jit, static_argnames=("tm", "use_bf16_matmul"))
def pos_wise_ffn(x, w1, b1, w2, b2, gamma, beta, *, tm=None, use_bf16_matmul=True):
    """x: (B, S, D_MODEL) float32. Returns same shape/dtype."""
    B, S, D = x.shape
    assert D == D_MODEL
    M = B * S
    x2d = x.reshape(M, D)

    if tm is None:
        tm_max = 1024 if M >= 8192 else 512    # huge tiles only when the grid stays deep
    else:
        tm_max = max(8, _round_up(tm, 8))
    tm_eff = _pick_row_tile(M, tm_max)
    grid = (_cdiv(M, tm_eff),)                 # ragged last block; no pad / slice round-trip

    mm_dtype = jnp.bfloat16 if use_bf16_matmul else jnp.float32
    w1c = w1.astype(mm_dtype)
    w2c = w2.astype(mm_dtype)

    # Biases / LN params as (1, D) rows (broadcast inside the tile), f32.
    b1r = b1.reshape(1, D_FF).astype(jnp.float32)
    b2r = b2.reshape(1, D_MODEL).astype(jnp.float32)
    gr = gamma.reshape(1, D_MODEL).astype(jnp.float32)
    br = beta.reshape(1, D_MODEL).astype(jnp.float32)

    def resident(shape):
        # Constant index_map + single buffer: DMA'd once, stays resident, no 2nd copy.
        return pl.BlockSpec(shape, lambda i: (0, 0), pipeline_mode=pl.Buffered(1))

    # ~32 MiB covers <=512-row bf16 tiles; allow 48 MiB for 1024-row tiles or the
    # f32 check path. Both are well inside v7x's 64 MiB/TC (and tiny vs. 128 MiB
    # on v5e/v6e).
    vmem_limit = (32 if (use_bf16_matmul and tm_eff <= 512) else 48) << 20

    out2d = pl.pallas_call(
        _ffn_ln_kernel,
        out_shape=jax.ShapeDtypeStruct((M, D_MODEL), x.dtype),
        grid_spec=pltpu.PrefetchScalarGridSpec(
            num_scalar_prefetch=0,
            grid=grid,
            in_specs=[
                pl.BlockSpec((tm_eff, D_MODEL), lambda i: (i, 0)),   # x row tile
                resident((D_MODEL, D_FF)),                           # W1
                resident((1, D_FF)),                                 # b1
                resident((D_FF, D_MODEL)),                           # W2
                resident((1, D_MODEL)),                              # b2
                resident((1, D_MODEL)),                              # gamma
                resident((1, D_MODEL)),                              # beta
            ],
            out_specs=pl.BlockSpec((tm_eff, D_MODEL), lambda i: (i, 0)),
        ),
        compiler_params=pltpu.CompilerParams(
            dimension_semantics=("parallel",),
            vmem_limit_bytes=vmem_limit,
        ),
    )(x2d, w1c, b1r, w2c, b2r, gr, br)

    return out2d.reshape(B, S, D_MODEL)


def _reference(x, w1, b1, w2, b2, gamma, beta):
    h = jnp.maximum(x @ w1 + b1, 0.0)
    y = h @ w2 + b2
    z = y + x
    mean = jnp.mean(z, axis=-1, keepdims=True)
    var = jnp.mean((z - mean) ** 2, axis=-1, keepdims=True)
    return (z - mean) * jax.lax.rsqrt(var + LN_EPS) * gamma + beta


if __name__ == "__main__":
    key = jax.random.PRNGKey(0)
    k_x, k_w1, k_b1, k_w2, k_b2, k_x2 = jax.random.split(key, 6)

    B, S = 2, 8  # small batch / seq; feature dims fixed by the module
    x = jax.random.normal(k_x, (B, S, D_MODEL), dtype=jnp.float32)

    # Deterministic parameter init (uniform like torch's default Linear init).
    lim1 = 1.0 / (D_MODEL ** 0.5)
    lim2 = 1.0 / (D_FF ** 0.5)
    w1 = jax.random.uniform(k_w1, (D_MODEL, D_FF), jnp.float32, -lim1, lim1)
    b1 = jax.random.uniform(k_b1, (D_FF,), jnp.float32, -lim1, lim1)
    w2 = jax.random.uniform(k_w2, (D_FF, D_MODEL), jnp.float32, -lim2, lim2)
    b2 = jax.random.uniform(k_b2, (D_MODEL,), jnp.float32, -lim2, lim2)
    gamma = jnp.ones((D_MODEL,), jnp.float32)   # nn.LayerNorm default weight
    beta = jnp.zeros((D_MODEL,), jnp.float32)   # nn.LayerNorm default bias

    ref = _reference(x, w1, b1, w2, b2, gamma, beta)

    # 1) Exact f32 path (proves semantics match the module).
    out_f32 = pos_wise_ffn(x, w1, b1, w2, b2, gamma, beta, use_bf16_matmul=False)
    out_f32 = jax.block_until_ready(out_f32)
    assert out_f32.shape == (B, S, D_MODEL)
    assert jnp.allclose(out_f32, ref, atol=1e-4, rtol=1e-4), "f32 path mismatch"

    # 2) Default optimized bf16-matmul path (f32 accumulation + f32 LN) -> looser tol.
    out_bf16 = pos_wise_ffn(x, w1, b1, w2, b2, gamma, beta)
    out_bf16 = jax.block_until_ready(out_bf16)
    assert jnp.allclose(out_bf16, ref, atol=5e-2, rtol=5e-2), "bf16 path mismatch"

    # 3) Non-multiple row count: exercises ragged last block + multi-step grid.
    B2, S2 = 2, 200  # M = 400 -> tile 256, grid=(2,), last block ragged (112 OOB rows)
    x2 = jax.random.normal(k_x2, (B2, S2, D_MODEL), dtype=jnp.float32)
    ref2 = _reference(x2, w1, b1, w2, b2, gamma, beta)
    out2 = pos_wise_ffn(x2, w1, b1, w2, b2, gamma, beta)
    out2 = jax.block_until_ready(out2)
    assert out2.shape == (B2, S2, D_MODEL)
    assert jnp.allclose(out2, ref2, atol=5e-2, rtol=5e-2), "ragged path mismatch"

    print("KERNEL_OK")
</pallas_src>

<mosaic_0001>
module attributes {stable_mosaic.version = 11 : i64} {
  func.func @_ffn_ln_kernel(%arg0: i32, %arg1: memref<16x512xf32, #tpu.memory_space<vmem>>, %arg2: memref<512x2048xf32, #tpu.memory_space<vmem>>, %arg3: memref<1x2048xf32, #tpu.memory_space<vmem>>, %arg4: memref<2048x512xf32, #tpu.memory_space<vmem>>, %arg5: memref<1x512xf32, #tpu.memory_space<vmem>>, %arg6: memref<1x512xf32, #tpu.memory_space<vmem>>, %arg7: memref<1x512xf32, #tpu.memory_space<vmem>>, %arg8: memref<16x512xf32, #tpu.memory_space<vmem>>) attributes {dimension_semantics = [#tpu.dimension_semantics<parallel>], iteration_bounds = array<i64: 1>, scalar_prefetch = 0 : i64, scratch_operands = 0 : i64, tpu.core_type = #tpu.core_type<tc>, window_params = [{transform_indices = @transform_0, window_bounds = array<i64: 16, 512>}, {pipeline_mode = #tpu.pipeline_mode<synchronous>, transform_indices = @transform_1, window_bounds = array<i64: 512, 2048>}, {pipeline_mode = #tpu.pipeline_mode<synchronous>, transform_indices = @transform_2, window_bounds = array<i64: 1, 2048>}, {pipeline_mode = #tpu.pipeline_mode<synchronous>, transform_indices = @transform_3, window_bounds = array<i64: 2048, 512>}, {pipeline_mode = #tpu.pipeline_mode<synchronous>, transform_indices = @transform_4, window_bounds = array<i64: 1, 512>}, {pipeline_mode = #tpu.pipeline_mode<synchronous>, transform_indices = @transform_5, window_bounds = array<i64: 1, 512>}, {pipeline_mode = #tpu.pipeline_mode<synchronous>, transform_indices = @transform_6, window_bounds = array<i64: 1, 512>}, {transform_indices = @transform_7, window_bounds = array<i64: 16, 512>}]} {
    %c0 = arith.constant 0 : index
    %c0_0 = arith.constant 0 : index
    %0 = vector.load %arg1[%c0, %c0_0] : memref<16x512xf32, #tpu.memory_space<vmem>>, vector<16x512xf32>
    %c0_1 = arith.constant 0 : index
    %c0_2 = arith.constant 0 : index
    %1 = vector.load %arg5[%c0_1, %c0_2] : memref<1x512xf32, #tpu.memory_space<vmem>>, vector<1x512xf32>
    %c0_3 = arith.constant 0 : index
    %c0_4 = arith.constant 0 : index
    %2 = vector.load %arg6[%c0_3, %c0_4] : memref<1x512xf32, #tpu.memory_space<vmem>>, vector<1x512xf32>
    %c0_5 = arith.constant 0 : index
    %c0_6 = arith.constant 0 : index
    %3 = vector.load %arg7[%c0_5, %c0_6] : memref<1x512xf32, #tpu.memory_space<vmem>>, vector<1x512xf32>
    %cst = arith.constant 0.000000e+00 : f32
    %4 = vector.broadcast %cst : f32 to vector<16x512xf32>
    %c0_7 = arith.constant 0 : index
    %c0_8 = arith.constant 0 : index
    %5 = vector.load %arg2[%c0_7, %c0_8] : memref<512x2048xf32, #tpu.memory_space<vmem>>, vector<512x1024xf32>
    %cst_9 = arith.constant dense<0.000000e+00> : vector<16x1024xf32>
    %6 = tpu.matmul %0, %5, %cst_9 {dimension_numbers = #tpu.dot_dimension_numbers<[1], [0], [0], [1], [0, 0, 1, 1], [], []>} : vector<16x512xf32>, vector<512x1024xf32>, vector<16x1024xf32> -> vector<16x1024xf32>
    %c0_10 = arith.constant 0 : index
    %c0_11 = arith.constant 0 : index
    %7 = vector.load %arg3[%c0_10, %c0_11] : memref<1x2048xf32, #tpu.memory_space<vmem>>, vector<1x1024xf32>
    %8 = vector.broadcast %7 : vector<1x1024xf32> to vector<16x1024xf32>
    %9 = arith.addf %6, %8 : vector<16x1024xf32>
    %cst_12 = arith.constant 0.000000e+00 : f32
    %10 = vector.broadcast %cst_12 : f32 to vector<16x1024xf32>
    %11 = arith.maximumf %9, %10 : vector<16x1024xf32>
    %c0_13 = arith.constant 0 : index
    %c0_14 = arith.constant 0 : index
    %12 = vector.load %arg4[%c0_13, %c0_14] : memref<2048x512xf32, #tpu.memory_space<vmem>>, vector<1024x512xf32>
    %cst_15 = arith.constant dense<0.000000e+00> : vector<16x512xf32>
    %13 = tpu.matmul %11, %12, %cst_15 {dimension_numbers = #tpu.dot_dimension_numbers<[1], [0], [0], [1], [0, 0, 1, 1], [], []>} : vector<16x1024xf32>, vector<1024x512xf32>, vector<16x512xf32> -> vector<16x512xf32>
    %14 = arith.addf %4, %13 : vector<16x512xf32>
    %c0_16 = arith.constant 0 : index
    %c1024 = arith.constant 1024 : index
    %15 = vector.load %arg2[%c0_16, %c1024] : memref<512x2048xf32, #tpu.memory_space<vmem>>, vector<512x1024xf32>
    %cst_17 = arith.constant dense<0.000000e+00> : vector<16x1024xf32>
    %16 = tpu.matmul %0, %15, %cst_17 {dimension_numbers = #tpu.dot_dimension_numbers<[1], [0], [0], [1], [0, 0, 1, 1], [], []>} : vector<16x512xf32>, vector<512x1024xf32>, vector<16x1024xf32> -> vector<16x1024xf32>
    %c0_18 = arith.constant 0 : index
    %c1024_19 = arith.constant 1024 : index
    %17 = vector.load %arg3[%c0_18, %c1024_19] : memref<1x2048xf32, #tpu.memory_space<vmem>>, vector<1x1024xf32>
    %18 = vector.broadcast %17 : vector<1x1024xf32> to vector<16x1024xf32>
    %19 = arith.addf %16, %18 : vector<16x1024xf32>
    %cst_20 = arith.constant 0.000000e+00 : f32
    %20 = vector.broadcast %cst_20 : f32 to vector<16x1024xf32>
    %21 = arith.maximumf %19, %20 : vector<16x1024xf32>
    %c1024_21 = arith.constant 1024 : index
    %c0_22 = arith.constant 0 : index
    %22 = vector.load %arg4[%c1024_21, %c0_22] : memref<2048x512xf32, #tpu.memory_space<vmem>>, vector<1024x512xf32>
    %cst_23 = arith.constant dense<0.000000e+00> : vector<16x512xf32>
    %23 = tpu.matmul %21, %22, %cst_23 {dimension_numbers = #tpu.dot_dimension_numbers<[1], [0], [0], [1], [0, 0, 1, 1], [], []>} : vector<16x1024xf32>, vector<1024x512xf32>, vector<16x512xf32> -> vector<16x512xf32>
    %24 = arith.addf %14, %23 : vector<16x512xf32>
    %25 = vector.broadcast %1 : vector<1x512xf32> to vector<16x512xf32>
    %26 = arith.addf %24, %25 : vector<16x512xf32>
    %27 = arith.addf %26, %0 : vector<16x512xf32>
    %cst_24 = arith.constant dense<0.000000e+00> : vector<16xf32>
    %28 = vector.multi_reduction <add>, %27, %cst_24 [1] : vector<16x512xf32> to vector<16xf32>
    %29 = vector.shape_cast %28 : vector<16xf32> to vector<16x1xf32>
    %cst_25 = arith.constant 5.120000e+02 : f32
    %30 = vector.broadcast %cst_25 : f32 to vector<16x1xf32>
    %31 = arith.divf %29, %30 : vector<16x1xf32>
    %32 = vector.broadcast %31 : vector<16x1xf32> to vector<16x512xf32>
    %33 = arith.subf %27, %32 : vector<16x512xf32>
    %34 = arith.mulf %33, %33 : vector<16x512xf32>
    %cst_26 = arith.constant dense<0.000000e+00> : vector<16xf32>
    %35 = vector.multi_reduction <add>, %34, %cst_26 [1] : vector<16x512xf32> to vector<16xf32>
    %36 = vector.shape_cast %35 : vector<16xf32> to vector<16x1xf32>
    %cst_27 = arith.constant 5.120000e+02 : f32
    %37 = vector.broadcast %cst_27 : f32 to vector<16x1xf32>
    %38 = arith.divf %36, %37 : vector<16x1xf32>
    %cst_28 = arith.constant 9.99999974E-6 : f32
    %39 = vector.broadcast %cst_28 : f32 to vector<16x1xf32>
    %40 = arith.addf %38, %39 : vector<16x1xf32>
    %41 = math.rsqrt %40 : vector<16x1xf32>
    %42 = vector.broadcast %41 : vector<16x1xf32> to vector<16x512xf32>
    %43 = arith.mulf %33, %42 : vector<16x512xf32>
    %44 = vector.broadcast %2 : vector<1x512xf32> to vector<16x512xf32>
    %45 = arith.mulf %43, %44 : vector<16x512xf32>
    %46 = vector.broadcast %3 : vector<1x512xf32> to vector<16x512xf32>
    %47 = arith.addf %45, %46 : vector<16x512xf32>
    %c0_29 = arith.constant 0 : index
    %c0_30 = arith.constant 0 : index
    %48 = vector.load %arg8[%c0_29, %c0_30] : memref<16x512xf32, #tpu.memory_space<vmem>>, vector<16x512xf32>
    tpu.vector_store %arg8[%c0_29, %c0_30], %47 {strides = array<i32>} : memref<16x512xf32, #tpu.memory_space<vmem>>, vector<16x512xf32>,
    return
  }
  func.func @transform_0(%arg0: i32) -> (i32, i32) {
    %c0_i32 = arith.constant 0 : i32
    %c0_i32_0 = arith.constant 0 : i32
    return %arg0, %c0_i32 : i32, i32
  }
  func.func @transform_1(%arg0: i32) -> (i32, i32) {
    %c0_i32 = arith.constant 0 : i32
    %c0_i32_0 = arith.constant 0 : i32
    %c0_i32_1 = arith.constant 0 : i32
    return %c0_i32, %c0_i32_0 : i32, i32
  }
  func.func @transform_2(%arg0: i32) -> (i32, i32) {
    %c0_i32 = arith.constant 0 : i32
    %c0_i32_0 = arith.constant 0 : i32
    %c0_i32_1 = arith.constant 0 : i32
    return %c0_i32, %c0_i32_0 : i32, i32
  }
  func.func @transform_3(%arg0: i32) -> (i32, i32) {
    %c0_i32 = arith.constant 0 : i32
    %c0_i32_0 = arith.constant 0 : i32
    %c0_i32_1 = arith.constant 0 : i32
    return %c0_i32, %c0_i32_0 : i32, i32
  }
  func.func @transform_4(%arg0: i32) -> (i32, i32) {
    %c0_i32 = arith.constant 0 : i32
    %c0_i32_0 = arith.constant 0 : i32
    %c0_i32_1 = arith.constant 0 : i32
    return %c0_i32, %c0_i32_0 : i32, i32
  }
  func.func @transform_5(%arg0: i32) -> (i32, i32) {
    %c0_i32 = arith.constant 0 : i32
    %c0_i32_0 = arith.constant 0 : i32
    %c0_i32_1 = arith.constant 0 : i32
    return %c0_i32, %c0_i32_0 : i32, i32
  }
  func.func @transform_6(%arg0: i32) -> (i32, i32) {
    %c0_i32 = arith.constant 0 : i32
    %c0_i32_0 = arith.constant 0 : i32
    %c0_i32_1 = arith.constant 0 : i32
    return %c0_i32, %c0_i32_0 : i32, i32
  }
  func.func @transform_7(%arg0: i32) -> (i32, i32) {
    %c0_i32 = arith.constant 0 : i32
    %c0_i32_0 = arith.constant 0 : i32
    return %arg0, %c0_i32 : i32, i32
  }
}

</mosaic_0001>

<llo_original>
// kernel: pos_wise_ffn.1
$region0: #{pos_wise_ffn.1}
  #allocation0 [shape = 'u32[]', space=smem, size = 0x4, offset = 0x4, fixed_abs, tag = 'smem constant byte address 0x4 - core index']
  #allocation1 [shape = 'u32[144,128]{1,0:T(1,128)}', space=vmem, size = 0x12000, scoped, tag = 'internal scratch']
  %s0 = inlined_call_operand.hbm [shape: f32[16,512], index: 0, kind: input, shape index: {}]
  %s1 = inlined_call_operand.hbm [shape: f32[512,2048], index: 1, kind: input, shape index: {}]
  %s2 = inlined_call_operand.hbm [shape: f32[1,2048], index: 2, kind: input, shape index: {}]
  %s3 = inlined_call_operand.hbm [shape: f32[2048,512], index: 3, kind: input, shape index: {}]
  %s4 = inlined_call_operand.hbm [shape: f32[1,512], index: 4, kind: input, shape index: {}]
  %s5 = inlined_call_operand.hbm [shape: f32[1,512], index: 5, kind: input, shape index: {}]
  %s6 = inlined_call_operand.hbm [shape: f32[1,512], index: 6, kind: input, shape index: {}]
  %s7 = inlined_call_operand.hbm [shape: f32[16,512], index: 7, kind: output, shape index: {}]
  %s8 = sld [smem:[#allocation0]]
  $region66: #{pos_wise_ffn.1} parent=0
    _
  %s10 = ssub.s32 1, %s8
  %s11 = scalar_select 0, %s10, %s8
  $region1: #{pos_wise_ffn.1} parent=0
    #allocation2 [shape = 'u8[32768]{0}', space=vmem, size = 0x8000, scoped, tag = 'input window, operand 0, single buffered']
    #allocation3 [shape = 's32[1]{0}', space=sflag, size = 0x4, scoped, tag = 'scoped memory for pos_wise_ffn.1']
    #allocation4 [shape = 's32[1]{0}', space=sflag, size = 0x4, scoped, tag = 'scoped memory for pos_wise_ffn.1']
    #allocation5 [shape = 'u8[4194304]{0}', space=vmem, size = 0x400000, scoped, tag = 'input window, operand 1, single buffered']
    #allocation6 [shape = 's32[1]{0}', space=sflag, size = 0x4, scoped, tag = 'scoped memory for pos_wise_ffn.1']
    #allocation7 [shape = 'u8[8192]{0}', space=vmem, size = 0x2000, scoped, tag = 'input window, operand 2, single buffered']
    #allocation8 [shape = 'u8[4194304]{0}', space=vmem, size = 0x400000, scoped, tag = 'input window, operand 3, single buffered']
    #allocation9 [shape = 's32[1]{0}', space=sflag, size = 0x4, scoped, tag = 'scoped memory for pos_wise_ffn.1']
    #allocation10 [shape = 'u8[2048]{0}', space=vmem, size = 0x800, scoped, tag = 'input window, operand 4, single buffered']
    #allocation11 [shape = 'u8[2048]{0}', space=vmem, size = 0x800, scoped, tag = 'input window, operand 5, single buffered']
    #allocation12 [shape = 's32[1]{0}', space=sflag, size = 0x4, scoped, tag = 'scoped memory for pos_wise_ffn.1']
    #allocation13 [shape = 'u8[2048]{0}', space=vmem, size = 0x800, scoped, tag = 'input window, operand 6, single buffered']
    #allocation14 [shape = 'u8[32768]{0}', space=vmem, size = 0x8000, scoped, tag = 'output window, operand 0, single buffered']
    %12 = vsyncpa [#allocation3], 0
    %13 = vsyncpa [#allocation6], 0
    %14 = vsyncpa [#allocation9], 0
    %15 = vsyncpa [#allocation12], 0
    %16 = vsyncpa [#allocation4], 0
    // Predicated region
    $region2: #{pos_wise_ffn.1} parent=1 // pred_check
      _
    $region3: #{pos_wise_ffn.1} parent=1 // pred_check_branch
      %18 = sbr.rel (0) target = $region5
    $region4: #{pos_wise_ffn.1} parent=1 // pred_region
      %s20 = ssub.s32 1024, 1024
      %21 = vsyncadd [#allocation3], %s20
      %s22 = sshll.u32 [#allocation2], 4
      %s23 = int_to_ptr.vmem [resolvable:$true] %s22
      %28 = dma.hbm_to_vmem [thread:$0]  %s0, 1024, %s23, [#allocation3], 512, 512, 32
    $region5: #{pos_wise_ffn.1} parent=1 // pred_fallthru
      _
    // Predicated region
    $region6: #{pos_wise_ffn.1} parent=1 // pred_check
      _
    $region7: #{pos_wise_ffn.1} parent=1 // pred_check_branch
      %30 = sbr.rel (0) target = $region9
    $region8: #{pos_wise_ffn.1} parent=1 // pred_region
      %s32 = ssub.s32 131072, 131072
      %33 = vsyncadd [#allocation6], %s32
      %s34 = sshll.u32 [#allocation5], 4
      %s35 = int_to_ptr.vmem [resolvable:$true] %s34
      %40 = dma.hbm_to_vmem [thread:$0]  %s1, 131072, %s35, [#allocation6], 2048, 2048, 128
    $region9: #{pos_wise_ffn.1} parent=1 // pred_fallthru
      _
    // Predicated region
    $region10: #{pos_wise_ffn.1} parent=1 // pred_check
      _
    $region11: #{pos_wise_ffn.1} parent=1 // pred_check_branch
      %42 = sbr.rel (0) target = $region13
    $region12: #{pos_wise_ffn.1} parent=1 // pred_region
      %s44 = ssub.s32 256, 256
      %45 = vsyncadd [#allocation6], %s44
      %s47 = sshll.u32 [#allocation7], 4
      %s48 = int_to_ptr.vmem [resolvable:$true] %s47
      %50 = dma.hbm_to_vmem [thread:$0]  %s2, 256, %s48, [#allocation6]
    $region13: #{pos_wise_ffn.1} parent=1 // pred_fallthru
      _
    // Predicated region
    $region14: #{pos_wise_ffn.1} parent=1 // pred_check
      _
    $region15: #{pos_wise_ffn.1} parent=1 // pred_check_branch
      %52 = sbr.rel (0) target = $region17
    $region16: #{pos_wise_ffn.1} parent=1 // pred_region
      %s54 = ssub.s32 131072, 131072
      %55 = vsyncadd [#allocation9], %s54
      %s56 = sshll.u32 [#allocation8], 4
      %s57 = int_to_ptr.vmem [resolvable:$true] %s56
      %62 = dma.hbm_to_vmem [thread:$0]  %s3, 131072, %s57, [#allocation9], 512, 512, 32
    $region17: #{pos_wise_ffn.1} parent=1 // pred_fallthru
      _
    // Predicated region
    $region18: #{pos_wise_ffn.1} parent=1 // pred_check
      _
    $region19: #{pos_wise_ffn.1} parent=1 // pred_check_branch
      %64 = sbr.rel (0) target = $region21
    $region20: #{pos_wise_ffn.1} parent=1 // pred_region
      %s66 = ssub.s32 64, 64
      %67 = vsyncadd [#allocation9], %s66
      %s69 = sshll.u32 [#allocation10], 4
      %s70 = int_to_ptr.vmem [resolvable:$true] %s69
      %72 = dma.hbm_to_vmem [thread:$0]  %s4, 64, %s70, [#allocation9]
    $region21: #{pos_wise_ffn.1} parent=1 // pred_fallthru
      _
    // Predicated region
    $region22: #{pos_wise_ffn.1} parent=1 // pred_check
      _
    $region23: #{pos_wise_ffn.1} parent=1 // pred_check_branch
      %74 = sbr.rel (0) target = $region25
    $region24: #{pos_wise_ffn.1} parent=1 // pred_region
      %s76 = ssub.s32 64, 64
      %77 = vsyncadd [#allocation12], %s76
      %s79 = sshll.u32 [#allocation11], 4
      %s80 = int_to_ptr.vmem [resolvable:$true] %s79
      %82 = dma.hbm_to_vmem [thread:$0]  %s5, 64, %s80, [#allocation12]
    $region25: #{pos_wise_ffn.1} parent=1 // pred_fallthru
      _
    // Predicated region
    $region26: #{pos_wise_ffn.1} parent=1 // pred_check
      _
    $region27: #{pos_wise_ffn.1} parent=1 // pred_check_branch
      %84 = sbr.rel (0) target = $region29
    $region28: #{pos_wise_ffn.1} parent=1 // pred_region
      %s86 = ssub.s32 64, 64
      %87 = vsyncadd [#allocation12], %s86
      %s89 = sshll.u32 [#allocation13], 4
      %s90 = int_to_ptr.vmem [resolvable:$true] %s89
      %92 = dma.hbm_to_vmem [thread:$0]  %s6, 64, %s90, [#allocation12]
    $region29: #{pos_wise_ffn.1} parent=1 // pred_fallthru
      _
    // Predicated region
    $region30: #{pos_wise_ffn.1} parent=1 // pred_check
      _
    $region31: #{pos_wise_ffn.1} parent=1 // pred_check_branch
      %94 = sbr.rel (0) target = $region33
    $region32: #{pos_wise_ffn.1} parent=1 // pred_region
      %95 = dma.done [#allocation3], 1024
    $region33: #{pos_wise_ffn.1} parent=1 // pred_fallthru
      _
    // Predicated region
    $region34: #{pos_wise_ffn.1} parent=1 // pred_check
      _
    $region35: #{pos_wise_ffn.1} parent=1 // pred_check_branch
      %97 = sbr.rel (0) target = $region37
    $region36: #{pos_wise_ffn.1} parent=1 // pred_region
      %98 = dma.done [#allocation6], 131072
    $region37: #{pos_wise_ffn.1} parent=1 // pred_fallthru
      _
    // Predicated region
    $region38: #{pos_wise_ffn.1} parent=1 // pred_check
      _
    $region39: #{pos_wise_ffn.1} parent=1 // pred_check_branch
      %100 = sbr.rel (0) target = $region41
    $region40: #{pos_wise_ffn.1} parent=1 // pred_region
      %101 = dma.done [#allocation6], 256
    $region41: #{pos_wise_ffn.1} parent=1 // pred_fallthru
      _
    // Predicated region
    $region42: #{pos_wise_ffn.1} parent=1 // pred_check
      _
    $region43: #{pos_wise_ffn.1} parent=1 // pred_check_branch
      %103 = sbr.rel (0) target = $region45
    $region44: #{pos_wise_ffn.1} parent=1 // pred_region
      %104 = dma.done [#allocation9], 131072
    $region45: #{pos_wise_ffn.1} parent=1 // pred_fallthru
      _
    // Predicated region
    $region46: #{pos_wise_ffn.1} parent=1 // pred_check
      _
    $region47: #{pos_wise_ffn.1} parent=1 // pred_check_branch
      %106 = sbr.rel (0) target = $region49
    $region48: #{pos_wise_ffn.1} parent=1 // pred_region
      %107 = dma.done [#allocation9], 64
    $region49: #{pos_wise_ffn.1} parent=1 // pred_fallthru
      _
    // Predicated region
    $region50: #{pos_wise_ffn.1} parent=1 // pred_check
      _
    $region51: #{pos_wise_ffn.1} parent=1 // pred_check_branch
      %109 = sbr.rel (0) target = $region53
    $region52: #{pos_wise_ffn.1} parent=1 // pred_region
      %110 = dma.done [#allocation12], 64
    $region53: #{pos_wise_ffn.1} parent=1 // pred_fallthru
      _
    // Predicated region
    $region54: #{pos_wise_ffn.1} parent=1 // pred_check
      _
    $region55: #{pos_wise_ffn.1} parent=1 // pred_check_branch
      %112 = sbr.rel (0) target = $region57
    $region56: #{pos_wise_ffn.1} parent=1 // pred_region
      %113 = dma.done [#allocation12], 64
    $region57: #{pos_wise_ffn.1} parent=1 // pred_fallthru
      _
    %v114 = vld [vmem:[#allocation2] sm:$0xff]
    %v115 = vld [vmem:[#allocation2 + $0x8] sm:$0xff]
    %v116 = vld [vmem:[#allocation2 + $0x10] sm:$0xff]
    %v117 = vld [vmem:[#allocation2 + $0x18] sm:$0xff]
    %v118 = vld [vmem:[#allocation2 + $0x20] sm:$0xff]
    %v119 = vld [vmem:[#allocation2 + $0x28] sm:$0xff]
    %v120 = vld [vmem:[#allocation2 + $0x30] sm:$0xff]
    %v121 = vld [vmem:[#allocation2 + $0x38] sm:$0xff]
    %v122 = vld [vmem:[#allocation10] sm:$0xf]
    %v123 = vld [vmem:[#allocation11] sm:$0xf]
    %v124 = vld [vmem:[#allocation13] sm:$0xf]
    %v125 = vld [vmem:[#allocation5] sm:$0xff]
    %v126 = vld [vmem:[#allocation5 + $0x8] sm:$0xff]
    %v127 = vld [vmem:[#allocation5 + $0x10] sm:$0xff]
    %v128 = vld [vmem:[#allocation5 + $0x18] sm:$0xff]
    %v129 = vld [vmem:[#allocation5 + $0x20] sm:$0xff]
    %v130 = vld [vmem:[#allocation5 + $0x28] sm:$0xff]
    %v131 = vld [vmem:[#allocation5 + $0x30] sm:$0xff]
    %v132 = vld [vmem:[#allocation5 + $0x38] sm:$0xff]
    %v133 = vld [vmem:[#allocation5 + $0x80] sm:$0xff]
    %v134 = vld [vmem:[#allocation5 + $0x88] sm:$0xff]
    %v135 = vld [vmem:[#allocation5 + $0x90] sm:$0xff]
    %v136 = vld [vmem:[#allocation5 + $0x98] sm:$0xff]
    %v137 = vld [vmem:[#allocation5 + $0xa0] sm:$0xff]
    %v138 = vld [vmem:[#allocation5 + $0xa8] sm:$0xff]
    %v139 = vld [vmem:[#allocation5 + $0xb0] sm:$0xff]
    %v140 = vld [vmem:[#allocation5 + $0xb8] sm:$0xff]
    %v141 = vld [vmem:[#allocation5 + $0x100] sm:$0xff]
    %v142 = vld [vmem:[#allocation5 + $0x108] sm:$0xff]
    %v143 = vld [vmem:[#allocation5 + $0x110] sm:$0xff]
    %v144 = vld [vmem:[#allocation5 + $0x118] sm:$0xff]
    %v145 = vld [vmem:[#allocation5 + $0x120] sm:$0xff]
    %v146 = vld [vmem:[#allocation5 + $0x128] sm:$0xff]
    %v147 = vld [vmem:[#allocation5 + $0x130] sm:$0xff]
    %v148 = vld [vmem:[#allocation5 + $0x138] sm:$0xff]
    %v149 = vld [vmem:[#allocation5 + $0x180] sm:$0xff]
    %v150 = vld [vmem:[#allocation5 + $0x188] sm:$0xff]
    %v151 = vld [vmem:[#allocation5 + $0x190] sm:$0xff]
    %v152 = vld [vmem:[#allocation5 + $0x198] sm:$0xff]
    %v153 = vld [vmem:[#allocation5 + $0x1a0] sm:$0xff]
    %v154 = vld [vmem:[#allocation5 + $0x1a8] sm:$0xff]
    %v155 = vld [vmem:[#allocation5 + $0x1b0] sm:$0xff]
    %v156 = vld [vmem:[#allocation5 + $0x1b8] sm:$0xff]
    %v157 = vld [vmem:[#allocation5 + $0x200] sm:$0xff]
    %v158 = vld [vmem:[#allocation5 + $0x208] sm:$0xff]
    %v159 = vld [vmem:[#allocation5 + $0x210] sm:$0xff]
    %v160 = vld [vmem:[#allocation5 + $0x218] sm:$0xff]
    %v161 = vld [vmem:[#allocation5 + $0x220] sm:$0xff]
    %v162 = vld [vmem:[#allocation5 + $0x228] sm:$0xff]
    %v163 = vld [vmem:[#allocation5 + $0x230] sm:$0xff]
    %v164 = vld [vmem:[#allocation5 + $0x238] sm:$0xff]
    %v165 = vld [vmem:[#allocation5 + $0x280] sm:$0xff]
    %v166 = vld [vmem:[#allocation5 + $0x288] sm:$0xff]
    %v167 = vld [vmem:[#allocation5 + $0x290] sm:$0xff]
    %v168 = vld [vmem:[#allocation5 + $0x298] sm:$0xff]
    %v169 = vld [vmem:[#allocation5 + $0x2a0] sm:$0xff]
    %v170 = vld [vmem:[#allocation5 + $0x2a8] sm:$0xff]
    %v171 = vld [vmem:[#allocation5 + $0x2b0] sm:$0xff]
    %v172 = vld [vmem:[#allocation5 + $0x2b8] sm:$0xff]
    %v173 = vld [vmem:[#allocation5 + $0x300] sm:$0xff]
    %v174 = vld [vmem:[#allocation5 + $0x308] sm:$0xff]
    %v175 = vld [vmem:[#allocation5 + $0x310] sm:$0xff]
    %v176 = vld [vmem:[#allocation5 + $0x318] sm:$0xff]
    %v177 = vld [vmem:[#allocation5 + $0x320] sm:$0xff]
    %v178 = vld [vmem:[#allocation5 + $0x328] sm:$0xff]
    %v179 = vld [vmem:[#allocation5 + $0x330] sm:$0xff]
    %v180 = vld [vmem:[#allocation5 + $0x338] sm:$0xff]
    %v181 = vld [vmem:[#allocation5 + $0x380] sm:$0xff]
    %v182 = vld [vmem:[#allocation5 + $0x388] sm:$0xff]
    %v183 = vld [vmem:[#allocation5 + $0x390] sm:$0xff]
    %v184 = vld [vmem:[#allocation5 + $0x398] sm:$0xff]
    %v185 = vld [vmem:[#allocation5 + $0x3a0] sm:$0xff]
    %v186 = vld [vmem:[#allocation5 + $0x3a8] sm:$0xff]
    %v187 = vld [vmem:[#allocation5 + $0x3b0] sm:$0xff]
    %v188 = vld [vmem:[#allocation5 + $0x3b8] sm:$0xff]
    %v189 = vld [vmem:[#allocation5 + $0x400] sm:$0xff]
    %v190 = vld [vmem:[#allocation5 + $0x408] sm:$0xff]
    %v191 = vld [vmem:[#allocation5 + $0x410] sm:$0xff]
    %v192 = vld [vmem:[#allocation5 + $0x418] sm:$0xff]
    %v193 = vld [vmem:[#allocation5 + $0x420] sm:$0xff]
    %v194 = vld [vmem:[#allocation5 + $0x428] sm:$0xff]
    %v195 = vld [vmem:[#allocation5 + $0x430] sm:$0xff]
    %v196 = vld [vmem:[#allocation5 + $0x438] sm:$0xff]
    %v197 = vld [vmem:[#allocation5 + $0x480] sm:$0xff]
    %v198 = vld [vmem:[#allocation5 + $0x488] sm:$0xff]
    %v199 = vld [vmem:[#allocation5 + $0x490] sm:$0xff]
    %v200 = vld [vmem:[#allocation5 + $0x498] sm:$0xff]
    %v201 = vld [vmem:[#allocation5 + $0x4a0] sm:$0xff]
    %v202 = vld [vmem:[#allocation5 + $0x4a8] sm:$0xff]
    %v203 = vld [vmem:[#allocation5 + $0x4b0] sm:$0xff]
    %v204 = vld [vmem:[#allocation5 + $0x4b8] sm:$0xff]
    %v205 = vld [vmem:[#allocation5 + $0x500] sm:$0xff]
    %v206 = vld [vmem:[#allocation5 + $0x508] sm:$0xff]
    %v207 = vld [vmem:[#allocation5 + $0x510] sm:$0xff]
    %v208 = vld [vmem:[#allocation5 + $0x518] sm:$0xff]
    %v209 = vld [vmem:[#allocation5 + $0x520] sm:$0xff]
    %v210 = vld [vmem:[#allocation5 + $0x528] sm:$0xff]
    %v211 = vld [vmem:[#allocation5 + $0x530] sm:$0xff]
    %v212 = vld [vmem:[#allocation5 + $0x538] sm:$0xff]
    %v213 = vld [vmem:[#allocation5 + $0x580] sm:$0xff]
    %v214 = vld [vmem:[#allocation5 + $0x588] sm:$0xff]
    %v215 = vld [vmem:[#allocation5 + $0x590] sm:$0xff]
    %v216 = vld [vmem:[#allocation5 + $0x598] sm:$0xff]
    %v217 = vld [vmem:[#allocation5 + $0x5a0] sm:$0xff]
    %v218 = vld [vmem:[#allocation5 + $0x5a8] sm:$0xff]
    %v219 = vld [vmem:[#allocation5 + $0x5b0] sm:$0xff]
    %v220 = vld [vmem:[#allocation5 + $0x5b8] sm:$0xff]
    %v221 = vld [vmem:[#allocation5 + $0x600] sm:$0xff]
    %v222 = vld [vmem:[#allocation5 + $0x608] sm:$0xff]
    %v223 = vld [vmem:[#allocation5 + $0x610] sm:$0xff]
    %v224 = vld [vmem:[#allocation5 + $0x618] sm:$0xff]
    %v225 = vld [vmem:[#allocation5 + $0x620] sm:$0xff]
    %v226 = vld [vmem:[#allocation5 + $0x628] sm:$0xff]
    %v227 = vld [vmem:[#allocation5 + $0x630] sm:$0xff]
    %v228 = vld [vmem:[#allocation5 + $0x638] sm:$0xff]
    %v229 = vld [vmem:[#allocation5 + $0x680] sm:$0xff]
    %v230 = vld [vmem:[#allocation5 + $0x688] sm:$0xff]
    %v231 = vld [vmem:[#allocation5 + $0x690] sm:$0xff]
    %v232 = vld [vmem:[#allocation5 + $0x698] sm:$0xff]
    %v233 = vld [vmem:[#allocation5 + $0x6a0] sm:$0xff]
    %v234 = vld [vmem:[#allocation5 + $0x6a8] sm:$0xff]
    %v235 = vld [vmem:[#allocation5 + $0x6b0] sm:$0xff]
    %v236 = vld [vmem:[#allocation5 + $0x6b8] sm:$0xff]
    %v237 = vld [vmem:[#allocation5 + $0x700] sm:$0xff]
    %v238 = vld [vmem:[#allocation5 + $0x708] sm:$0xff]
    %v239 = vld [vmem:[#allocation5 + $0x710] sm:$0xff]
    %v240 = vld [vmem:[#allocation5 + $0x718] sm:$0xff]
    %v241 = vld [vmem:[#allocation5 + $0x720] sm:$0xff]
    %v242 = vld [vmem:[#allocation5 + $0x728] sm:$0xff]
    %v243 = vld [vmem:[#allocation5 + $0x730] sm:$0xff]
    %v244 = vld [vmem:[#allocation5 + $0x738] sm:$0xff]
    %v245 = vld [vmem:[#allocation5 + $0x780] sm:$0xff]
    %v246 = vld [vmem:[#allocation5 + $0x788] sm:$0xff]
    %v247 = vld [vmem:[#allocation5 + $0x790] sm:$0xff]
    %v248 = vld [vmem:[#allocation5 + $0x798] sm:$0xff]
    %v249 = vld [vmem:[#allocation5 + $0x7a0] sm:$0xff]
    %v250 = vld [vmem:[#allocation5 + $0x7a8] sm:$0xff]
    %v251 = vld [vmem:[#allocation5 + $0x7b0] sm:$0xff]
    %v252 = vld [vmem:[#allocation5 + $0x7b8] sm:$0xff]
    %v253 = vld [vmem:[#allocation5 + $0x800] sm:$0xff]
    %v254 = vld [vmem:[#allocation5 + $0x808] sm:$0xff]
    %v255 = vld [vmem:[#allocation5 + $0x810] sm:$0xff]
    %v256 = vld [vmem:[#allocation5 + $0x818] sm:$0xff]
    %v257 = vld [vmem:[#allocation5 + $0x820] sm:$0xff]
    %v258 = vld [vmem:[#allocation5 + $0x828] sm:$0xff]
    %v259 = vld [vmem:[#allocation5 + $0x830] sm:$0xff]
    %v260 = vld [vmem:[#allocation5 + $0x838] sm:$0xff]
    %v261 = vld [vmem:[#allocation5 + $0x880] sm:$0xff]
    %v262 = vld [vmem:[#allocation5 + $0x888] sm:$0xff]
    %v263 = vld [vmem:[#allocation5 + $0x890] sm:$0xff]
    %v264 = vld [vmem:[#allocation5 + $0x898] sm:$0xff]
    %v265 = vld [vmem:[#allocation5 + $0x8a0] sm:$0xff]
    %v266 = vld [vmem:[#allocation5 + $0x8a8] sm:$0xff]
    %v267 = vld [vmem:[#allocation5 + $0x8b0] sm:$0xff]
    %v268 = vld [vmem:[#allocation5 + $0x8b8] sm:$0xff]
    %v269 = vld [vmem:[#allocation5 + $0x900] sm:$0xff]
    %v270 = vld [vmem:[#allocation5 + $0x908] sm:$0xff]
    %v271 = vld [vmem:[#allocation5 + $0x910] sm:$0xff]
    %v272 = vld [vmem:[#allocation5 + $0x918] sm:$0xff]
    %v273 = vld [vmem:[#allocation5 + $0x920] sm:$0xff]
    %v274 = vld [vmem:[#allocation5 + $0x928] sm:$0xff]
    %v275 = vld [vmem:[#allocation5 + $0x930] sm:$0xff]
    %v276 = vld [vmem:[#allocation5 + $0x938] sm:$0xff]
    %v277 = vld [vmem:[#allocation5 + $0x980] sm:$0xff]
    %v278 = vld [vmem:[#allocation5 + $0x988] sm:$0xff]
    %v279 = vld [vmem:[#allocation5 + $0x990] sm:$0xff]
    %v280 = vld [vmem:[#allocation5 + $0x998] sm:$0xff]
    %v281 = vld [vmem:[#allocation5 + $0x9a0] sm:$0xff]
    %v282 = vld [vmem:[#allocation5 + $0x9a8] sm:$0xff]
    %v283 = vld [vmem:[#allocation5 + $0x9b0] sm:$0xff]
    %v284 = vld [vmem:[#allocation5 + $0x9b8] sm:$0xff]
    %v285 = vld [vmem:[#allocation5 + $0xa00] sm:$0xff]
    %v286 = vld [vmem:[#allocation5 + $0xa08] sm:$0xff]
    %v287 = vld [vmem:[#allocation5 + $0xa10] sm:$0xff]
    %v288 = vld [vmem:[#allocation5 + $0xa18] sm:$0xff]
    %v289 = vld [vmem:[#allocation5 + $0xa20] sm:$0xff]
    %v290 = vld [vmem:[#allocation5 + $0xa28] sm:$0xff]
    %v291 = vld [vmem:[#allocation5 + $0xa30] sm:$0xff]
    %v292 = vld [vmem:[#allocation5 + $0xa38] sm:$0xff]
    %v293 = vld [vmem:[#allocation5 + $0xa80] sm:$0xff]
    %v294 = vld [vmem:[#allocation5 + $0xa88] sm:$0xff]
    %v295 = vld [vmem:[#allocation5 + $0xa90] sm:$0xff]
    %v296 = vld [vmem:[#allocation5 + $0xa98] sm:$0xff]
    %v297 = vld [vmem:[#allocation5 + $0xaa0] sm:$0xff]
    %v298 = vld [vmem:[#allocation5 + $0xaa8] sm:$0xff]
    %v299 = vld [vmem:[#allocation5 + $0xab0] sm:$0xff]
    %v300 = vld [vmem:[#allocation5 + $0xab8] sm:$0xff]
    %v301 = vld [vmem:[#allocation5 + $0xb00] sm:$0xff]
    %v302 = vld [vmem:[#allocation5 + $0xb08] sm:$0xff]
    %v303 = vld [vmem:[#allocation5 + $0xb10] sm:$0xff]
    %v304 = vld [vmem:[#allocation5 + $0xb18] sm:$0xff]
    %v305 = vld [vmem:[#allocation5 + $0xb20] sm:$0xff]
    %v306 = vld [vmem:[#allocation5 + $0xb28] sm:$0xff]
    %v307 = vld [vmem:[#allocation5 + $0xb30] sm:$0xff]
    %v308 = vld [vmem:[#allocation5 + $0xb38] sm:$0xff]
    %v309 = vld [vmem:[#allocation5 + $0xb80] sm:$0xff]
    %v310 = vld [vmem:[#allocation5 + $0xb88] sm:$0xff]
    %v311 = vld [vmem:[#allocation5 + $0xb90] sm:$0xff]
    %v312 = vld [vmem:[#allocation5 + $0xb98] sm:$0xff]
    %v313 = vld [vmem:[#allocation5 + $0xba0] sm:$0xff]
    %v314 = vld [vmem:[#allocation5 + $0xba8] sm:$0xff]
    %v315 = vld [vmem:[#allocation5 + $0xbb0] sm:$0xff]
    %v316 = vld [vmem:[#allocation5 + $0xbb8] sm:$0xff]
    %v317 = vld [vmem:[#allocation5 + $0xc00] sm:$0xff]
    %v318 = vld [vmem:[#allocation5 + $0xc08] sm:$0xff]
    %v319 = vld [vmem:[#allocation5 + $0xc10] sm:$0xff]
    %v320 = vld [vmem:[#allocation5 + $0xc18] sm:$0xff]
    %v321 = vld [vmem:[#allocation5 + $0xc20] sm:$0xff]
    %v322 = vld [vmem:[#allocation5 + $0xc28] sm:$0xff]
    %v323 = vld [vmem:[#allocation5 + $0xc30] sm:$0xff]
    %v324 = vld [vmem:[#allocation5 + $0xc38] sm:$0xff]
    %v325 = vld [vmem:[#allocation5 + $0xc80] sm:$0xff]
    %v326 = vld [vmem:[#allocation5 + $0xc88] sm:$0xff]
    %v327 = vld [vmem:[#allocation5 + $0xc90] sm:$0xff]
    %v328 = vld [vmem:[#allocation5 + $0xc98] sm:$0xff]
    %v329 = vld [vmem:[#allocation5 + $0xca0] sm:$0xff]
    %v330 = vld [vmem:[#allocation5 + $0xca8] sm:$0xff]
    %v331 = vld [vmem:[#allocation5 + $0xcb0] sm:$0xff]
    %v332 = vld [vmem:[#allocation5 + $0xcb8] sm:$0xff]
    %v333 = vld [vmem:[#allocation5 + $0xd00] sm:$0xff]
    %v334 = vld [vmem:[#allocation5 + $0xd08] sm:$0xff]
    %v335 = vld [vmem:[#allocation5 + $0xd10] sm:$0xff]
    %v336 = vld [vmem:[#allocation5 + $0xd18] sm:$0xff]
    %v337 = vld [vmem:[#allocation5 + $0xd20] sm:$0xff]
    %v338 = vld [vmem:[#allocation5 + $0xd28] sm:$0xff]
    %v339 = vld [vmem:[#allocation5 + $0xd30] sm:$0xff]
    %v340 = vld [vmem:[#allocation5 + $0xd38] sm:$0xff]
    %v341 = vld [vmem:[#allocation5 + $0xd80] sm:$0xff]
    %v342 = vld [vmem:[#allocation5 + $0xd88] sm:$0xff]
    %v343 = vld [vmem:[#allocation5 + $0xd90] sm:$0xff]
    %v344 = vld [vmem:[#allocation5 + $0xd98] sm:$0xff]
    %v345 = vld [vmem:[#allocation5 + $0xda0] sm:$0xff]
    %v346 = vld [vmem:[#allocation5 + $0xda8] sm:$0xff]
    %v347 = vld [vmem:[#allocation5 + $0xdb0] sm:$0xff]
    %v348 = vld [vmem:[#allocation5 + $0xdb8] sm:$0xff]
    %v349 = vld [vmem:[#allocation5 + $0xe00] sm:$0xff]
    %v350 = vld [vmem:[#allocation5 + $0xe08] sm:$0xff]
    %v351 = vld [vmem:[#allocation5 + $0xe10] sm:$0xff]
    %v352 = vld [vmem:[#allocation5 + $0xe18] sm:$0xff]
    %v353 = vld [vmem:[#allocation5 + $0xe20] sm:$0xff]
    %v354 = vld [vmem:[#allocation5 + $0xe28] sm:$0xff]
    %v355 = vld [vmem:[#allocation5 + $0xe30] sm:$0xff]
    %v356 = vld [vmem:[#allocation5 + $0xe38] sm:$0xff]
    %v357 = vld [vmem:[#allocation5 + $0xe80] sm:$0xff]
    %v358 = vld [vmem:[#allocation5 + $0xe88] sm:$0xff]
    %v359 = vld [vmem:[#allocation5 + $0xe90] sm:$0xff]
    %v360 = vld [vmem:[#allocation5 + $0xe98] sm:$0xff]
    %v361 = vld [vmem:[#allocation5 + $0xea0] sm:$0xff]
    %v362 = vld [vmem:[#allocation5 + $0xea8] sm:$0xff]
    %v363 = vld [vmem:[#allocation5 + $0xeb0] sm:$0xff]
    %v364 = vld [vmem:[#allocation5 + $0xeb8] sm:$0xff]
    %v365 = vld [vmem:[#allocation5 + $0xf00] sm:$0xff]
    %v366 = vld [vmem:[#allocation5 + $0xf08] sm:$0xff]
    %v367 = vld [vmem:[#allocation5 + $0xf10] sm:$0xff]
    %v368 = vld [vmem:[#allocation5 + $0xf18] sm:$0xff]
    %v369 = vld [vmem:[#allocation5 + $0xf20] sm:$0xff]
    %v370 = vld [vmem:[#allocation5 + $0xf28] sm:$0xff]
    %v371 = vld [vmem:[#allocation5 + $0xf30] sm:$0xff]
    %v372 = vld [vmem:[#allocation5 + $0xf38] sm:$0xff]
    %v373 = vld [vmem:[#allocation5 + $0xf80] sm:$0xff]
    %v374 = vld [vmem:[#allocation5 + $0xf88] sm:$0xff]
    %v375 = vld [vmem:[#allocation5 + $0xf90] sm:$0xff]
    %v376 = vld [vmem:[#allocation5 + $0xf98] sm:$0xff]
    %v377 = vld [vmem:[#allocation5 + $0xfa0] sm:$0xff]
    %v378 = vld [vmem:[#allocation5 + $0xfa8] sm:$0xff]
    %v379 = vld [vmem:[#allocation5 + $0xfb0] sm:$0xff]
    %v380 = vld [vmem:[#allocation5 + $0xfb8] sm:$0xff]
    %v381 = vld [vmem:[#allocation5 + $0x1000] sm:$0xff]
    %v382 = vld [vmem:[#allocation5 + $0x1008] sm:$0xff]
    %v383 = vld [vmem:[#allocation5 + $0x1010] sm:$0xff]
    %v384 = vld [vmem:[#allocation5 + $0x1018] sm:$0xff]
    %v385 = vld [vmem:[#allocation5 + $0x1020] sm:$0xff]
    %v386 = vld [vmem:[#allocation5 + $0x1028] sm:$0xff]
    %v387 = vld [vmem:[#allocation5 + $0x1030] sm:$0xff]
    %v388 = vld [vmem:[#allocation5 + $0x1038] sm:$0xff]
    %v389 = vld [vmem:[#allocation5 + $0x1080] sm:$0xff]
    %v390 = vld [vmem:[#allocation5 + $0x1088] sm:$0xff]
    %v391 = vld [vmem:[#allocation5 + $0x1090] sm:$0xff]
    %v392 = vld [vmem:[#allocation5 + $0x1098] sm:$0xff]
    %v393 = vld [vmem:[#allocation5 + $0x10a0] sm:$0xff]
    %v394 = vld [vmem:[#allocation5 + $0x10a8] sm:$0xff]
    %v395 = vld [vmem:[#allocation5 + $0x10b0] sm:$0xff]
    %v396 = vld [vmem:[#allocation5 + $0x10b8] sm:$0xff]
    %v397 = vld [vmem:[#allocation5 + $0x1100] sm:$0xff]
    %v398 = vld [vmem:[#allocation5 + $0x1108] sm:$0xff]
    %v399 = vld [vmem:[#allocation5 + $0x1110] sm:$0xff]
    %v400 = vld [vmem:[#allocation5 + $0x1118] sm:$0xff]
    %v401 = vld [vmem:[#allocation5 + $0x1120] sm:$0xff]
    %v402 = vld [vmem:[#allocation5 + $0x1128] sm:$0xff]
    %v403 = vld [vmem:[#allocation5 + $0x1130] sm:$0xff]
    %v404 = vld [vmem:[#allocation5 + $0x1138] sm:$0xff]
    %v405 = vld [vmem:[#allocation5 + $0x1180] sm:$0xff]
    %v406 = vld [vmem:[#allocation5 + $0x1188] sm:$0xff]
    %v407 = vld [vmem:[#allocation5 + $0x1190] sm:$0xff]
    %v408 = vld [vmem:[#allocation5 + $0x1198] sm:$0xff]
    %v409 = vld [vmem:[#allocation5 + $0x11a0] sm:$0xff]
    %v410 = vld [vmem:[#allocation5 + $0x11a8] sm:$0xff]
    %v411 = vld [vmem:[#allocation5 + $0x11b0] sm:$0xff]
    %v412 = vld [vmem:[#allocation5 + $0x11b8] sm:$0xff]
    %v413 = vld [vmem:[#allocation5 + $0x1200] sm:$0xff]
    %v414 = vld [vmem:[#allocation5 + $0x1208] sm:$0xff]
    %v415 = vld [vmem:[#allocation5 + $0x1210] sm:$0xff]
    %v416 = vld [vmem:[#allocation5 + $0x1218] sm:$0xff]
    %v417 = vld [vmem:[#allocation5 + $0x1220] sm:$0xff]
    %v418 = vld [vmem:[#allocation5 + $0x1228] sm:$0xff]
    %v419 = vld [vmem:[#allocation5 + $0x1230] sm:$0xff]
    %v420 = vld [vmem:[#allocation5 + $0x1238] sm:$0xff]
    %v421 = vld [vmem:[#allocation5 + $0x1280] sm:$0xff]
    %v422 = vld [vmem:[#allocation5 + $0x1288] sm:$0xff]
    %v423 = vld [vmem:[#allocation5 + $0x1290] sm:$0xff]
    %v424 = vld [vmem:[#allocation5 + $0x1298] sm:$0xff]
    %v425 = vld [vmem:[#allocation5 + $0x12a0] sm:$0xff]
    %v426 = vld [vmem:[#allocation5 + $0x12a8] sm:$0xff]
    %v427 = vld [vmem:[#allocation5 + $0x12b0] sm:$0xff]
    %v428 = vld [vmem:[#allocation5 + $0x12b8] sm:$0xff]
    %v429 = vld [vmem:[#allocation5 + $0x1300] sm:$0xff]
    %v430 = vld [vmem:[#allocation5 + $0x1308] sm:$0xff]
    %v431 = vld [vmem:[#allocation5 + $0x1310] sm:$0xff]
    %v432 = vld [vmem:[#allocation5 + $0x1318] sm:$0xff]
    %v433 = vld [vmem:[#allocation5 + $0x1320] sm:$0xff]
    %v434 = vld [vmem:[#allocation5 + $0x1328] sm:$0xff]
    %v435 = vld [vmem:[#allocation5 + $0x1330] sm:$0xff]
    %v436 = vld [vmem:[#allocation5 + $0x1338] sm:$0xff]
    %v437 = vld [vmem:[#allocation5 + $0x1380] sm:$0xff]
    %v438 = vld [vmem:[#allocation5 + $0x1388] sm:$0xff]
    %v439 = vld [vmem:[#allocation5 + $0x1390] sm:$0xff]
    %v440 = vld [vmem:[#allocation5 + $0x1398] sm:$0xff]
    %v441 = vld [vmem:[#allocation5 + $0x13a0] sm:$0xff]
    %v442 = vld [vmem:[#allocation5 + $0x13a8] sm:$0xff]
    %v443 = vld [vmem:[#allocation5 + $0x13b0] sm:$0xff]
    %v444 = vld [vmem:[#allocation5 + $0x13b8] sm:$0xff]
    %v445 = vld [vmem:[#allocation5 + $0x1400] sm:$0xff]
    %v446 = vld [vmem:[#allocation5 + $0x1408] sm:$0xff]
    %v447 = vld [vmem:[#allocation5 + $0x1410] sm:$0xff]
    %v448 = vld [vmem:[#allocation5 + $0x1418] sm:$0xff]
    %v449 = vld [vmem:[#allocation5 + $0x1420] sm:$0xff]
    %v450 = vld [vmem:[#allocation5 + $0x1428] sm:$0xff]
    %v451 = vld [vmem:[#allocation5 + $0x1430] sm:$0xff]
    %v452 = vld [vmem:[#allocation5 + $0x1438] sm:$0xff]
    %v453 = vld [vmem:[#allocation5 + $0x1480] sm:$0xff]
    %v454 = vld [vmem:[#allocation5 + $0x1488] sm:$0xff]
    %v455 = vld [vmem:[#allocation5 + $0x1490] sm:$0xff]
    %v456 = vld [vmem:[#allocation5 + $0x1498] sm:$0xff]
    %v457 = vld [vmem:[#allocation5 + $0x14a0] sm:$0xff]
    %v458 = vld [vmem:[#allocation5 + $0x14a8] sm:$0xff]
    %v459 = vld [vmem:[#allocation5 + $0x14b0] sm:$0xff]
    %v460 = vld [vmem:[#allocation5 + $0x14b8] sm:$0xff]
    %v461 = vld [vmem:[#allocation5 + $0x1500] sm:$0xff]
    %v462 = vld [vmem:[#allocation5 + $0x1508] sm:$0xff]
    %v463 = vld [vmem:[#allocation5 + $0x1510] sm:$0xff]
    %v464 = vld [vmem:[#allocation5 + $0x1518] sm:$0xff]
    %v465 = vld [vmem:[#allocation5 + $0x1520] sm:$0xff]
    %v466 = vld [vmem:[#allocation5 + $0x1528] sm:$0xff]
    %v467 = vld [vmem:[#allocation5 + $0x1530] sm:$0xff]
    %v468 = vld [vmem:[#allocation5 + $0x1538] sm:$0xff]
    %v469 = vld [vmem:[#allocation5 + $0x1580] sm:$0xff]
    %v470 = vld [vmem:[#allocation5 + $0x1588] sm:$0xff]
    %v471 = vld [vmem:[#allocation5 + $0x1590] sm:$0xff]
    %v472 = vld [vmem:[#allocation5 + $0x1598] sm:$0xff]
    %v473 = vld [vmem:[#allocation5 + $0x15a0] sm:$0xff]
    %v474 = vld [vmem:[#allocation5 + $0x15a8] sm:$0xff]
    %v475 = vld [vmem:[#allocation5 + $0x15b0] sm:$0xff]
    %v476 = vld [vmem:[#allocation5 + $0x15b8] sm:$0xff]
    %v477 = vld [vmem:[#allocation5 + $0x1600] sm:$0xff]
    %v478 = vld [vmem:[#allocation5 + $0x1608] sm:$0xff]
    %v479 = vld [vmem:[#allocation5 + $0x1610] sm:$0xff]
    %v480 = vld [vmem:[#allocation5 + $0x1618] sm:$0xff]
    %v481 = vld [vmem:[#allocation5 + $0x1620] sm:$0xff]
    %v482 = vld [vmem:[#allocation5 + $0x1628] sm:$0xff]
    %v483 = vld [vmem:[#allocation5 + $0x1630] sm:$0xff]
    %v484 = vld [vmem:[#allocation5 + $0x1638] sm:$0xff]
    %v485 = vld [vmem:[#allocation5 + $0x1680] sm:$0xff]
    %v486 = vld [vmem:[#allocation5 + $0x1688] sm:$0xff]
    %v487 = vld [vmem:[#allocation5 + $0x1690] sm:$0xff]
    %v488 = vld [vmem:[#allocation5 + $0x1698] sm:$0xff]
    %v489 = vld [vmem:[#allocation5 + $0x16a0] sm:$0xff]
    %v490 = vld [vmem:[#allocation5 + $0x16a8] sm:$0xff]
    %v491 = vld [vmem:[#allocation5 + $0x16b0] sm:$0xff]
    %v492 = vld [vmem:[#allocation5 + $0x16b8] sm:$0xff]
    %v493 = vld [vmem:[#allocation5 + $0x1700] sm:$0xff]
    %v494 = vld [vmem:[#allocation5 + $0x1708] sm:$0xff]
    %v495 = vld [vmem:[#allocation5 + $0x1710] sm:$0xff]
    %v496 = vld [vmem:[#allocation5 + $0x1718] sm:$0xff]
    %v497 = vld [vmem:[#allocation5 + $0x1720] sm:$0xff]
    %v498 = vld [vmem:[#allocation5 + $0x1728] sm:$0xff]
    %v499 = vld [vmem:[#allocation5 + $0x1730] sm:$0xff]
    %v500 = vld [vmem:[#allocation5 + $0x1738] sm:$0xff]
    %v501 = vld [vmem:[#allocation5 + $0x1780] sm:$0xff]
    %v502 = vld [vmem:[#allocation5 + $0x1788] sm:$0xff]
    %v503 = vld [vmem:[#allocation5 + $0x1790] sm:$0xff]
    %v504 = vld [vmem:[#allocation5 + $0x1798] sm:$0xff]
    %v505 = vld [vmem:[#allocation5 + $0x17a0] sm:$0xff]
    %v506 = vld [vmem:[#allocation5 + $0x17a8] sm:$0xff]
    %v507 = vld [vmem:[#allocation5 + $0x17b0] sm:$0xff]
    %v508 = vld [vmem:[#allocation5 + $0x17b8] sm:$0xff]
    %v509 = vld [vmem:[#allocation5 + $0x1800] sm:$0xff]
    %v510 = vld [vmem:[#allocation5 + $0x1808] sm:$0xff]
    %v511 = vld [vmem:[#allocation5 + $0x1810] sm:$0xff]
    %v512 = vld [vmem:[#allocation5 + $0x1818] sm:$0xff]
    %v513 = vld [vmem:[#allocation5 + $0x1820] sm:$0xff]
    %v514 = vld [vmem:[#allocation5 + $0x1828] sm:$0xff]
    %v515 = vld [vmem:[#allocation5 + $0x1830] sm:$0xff]
    %v516 = vld [vmem:[#allocation5 + $0x1838] sm:$0xff]
    %v517 = vld [vmem:[#allocation5 + $0x1880] sm:$0xff]
    %v518 = vld [vmem:[#allocation5 + $0x1888] sm:$0xff]
    %v519 = vld [vmem:[#allocation5 + $0x1890] sm:$0xff]
    %v520 = vld [vmem:[#allocation5 + $0x1898] sm:$0xff]
    %v521 = vld [vmem:[#allocation5 + $0x18a0] sm:$0xff]
    %v522 = vld [vmem:[#allocation5 + $0x18a8] sm:$0xff]
    %v523 = vld [vmem:[#allocation5 + $0x18b0] sm:$0xff]
    %v524 = vld [vmem:[#allocation5 + $0x18b8] sm:$0xff]
    %v525 = vld [vmem:[#allocation5 + $0x1900] sm:$0xff]
    %v526 = vld [vmem:[#allocation5 + $0x1908] sm:$0xff]
    %v527 = vld [vmem:[#allocation5 + $0x1910] sm:$0xff]
    %v528 = vld [vmem:[#allocation5 + $0x1918] sm:$0xff]
    %v529 = vld [vmem:[#allocation5 + $0x1920] sm:$0xff]
    %v530 = vld [vmem:[#allocation5 + $0x1928] sm:$0xff]
    %v531 = vld [vmem:[#allocation5 + $0x1930] sm:$0xff]
    %v532 = vld [vmem:[#allocation5 + $0x1938] sm:$0xff]
    %v533 = vld [vmem:[#allocation5 + $0x1980] sm:$0xff]
    %v534 = vld [vmem:[#allocation5 + $0x1988] sm:$0xff]
    %v535 = vld [vmem:[#allocation5 + $0x1990] sm:$0xff]
    %v536 = vld [vmem:[#allocation5 + $0x1998] sm:$0xff]
    %v537 = vld [vmem:[#allocation5 + $0x19a0] sm:$0xff]
    %v538 = vld [vmem:[#allocation5 + $0x19a8] sm:$0xff]
    %v539 = vld [vmem:[#allocation5 + $0x19b0] sm:$0xff]
    %v540 = vld [vmem:[#allocation5 + $0x19b8] sm:$0xff]
    %v541 = vld [vmem:[#allocation5 + $0x1a00] sm:$0xff]
    %v542 = vld [vmem:[#allocation5 + $0x1a08] sm:$0xff]
    %v543 = vld [vmem:[#allocation5 + $0x1a10] sm:$0xff]
    %v544 = vld [vmem:[#allocation5 + $0x1a18] sm:$0xff]
    %v545 = vld [vmem:[#allocation5 + $0x1a20] sm:$0xff]
    %v546 = vld [vmem:[#allocation5 + $0x1a28] sm:$0xff]
    %v547 = vld [vmem:[#allocation5 + $0x1a30] sm:$0xff]
    %v548 = vld [vmem:[#allocation5 + $0x1a38] sm:$0xff]
    %v549 = vld [vmem:[#allocation5 + $0x1a80] sm:$0xff]
    %v550 = vld [vmem:[#allocation5 + $0x1a88] sm:$0xff]
    %v551 = vld [vmem:[#allocation5 + $0x1a90] sm:$0xff]
    %v552 = vld [vmem:[#allocation5 + $0x1a98] sm:$0xff]
    %v553 = vld [vmem:[#allocation5 + $0x1aa0] sm:$0xff]
    %v554 = vld [vmem:[#allocation5 + $0x1aa8] sm:$0xff]
    %v555 = vld [vmem:[#allocation5 + $0x1ab0] sm:$0xff]
    %v556 = vld [vmem:[#allocation5 + $0x1ab8] sm:$0xff]
    %v557 = vld [vmem:[#allocation5 + $0x1b00] sm:$0xff]
    %v558 = vld [vmem:[#allocation5 + $0x1b08] sm:$0xff]
    %v559 = vld [vmem:[#allocation5 + $0x1b10] sm:$0xff]
    %v560 = vld [vmem:[#allocation5 + $0x1b18] sm:$0xff]
    %v561 = vld [vmem:[#allocation5 + $0x1b20] sm:$0xff]
    %v562 = vld [vmem:[#allocation5 + $0x1b28] sm:$0xff]
    %v563 = vld [vmem:[#allocation5 + $0x1b30] sm:$0xff]
    %v564 = vld [vmem:[#allocation5 + $0x1b38] sm:$0xff]
    %v565 = vld [vmem:[#allocation5 + $0x1b80] sm:$0xff]
    %v566 = vld [vmem:[#allocation5 + $0x1b88] sm:$0xff]
    %v567 = vld [vmem:[#allocation5 + $0x1b90] sm:$0xff]
    %v568 = vld [vmem:[#allocation5 + $0x1b98] sm:$0xff]
    %v569 = vld [vmem:[#allocation5 + $0x1ba0] sm:$0xff]
    %v570 = vld [vmem:[#allocation5 + $0x1ba8] sm:$0xff]
    %v571 = vld [vmem:[#allocation5 + $0x1bb0] sm:$0xff]
    %v572 = vld [vmem:[#allocation5 + $0x1bb8] sm:$0xff]
    %v573 = vld [vmem:[#allocation5 + $0x1c00] sm:$0xff]
    %v574 = vld [vmem:[#allocation5 + $0x1c08] sm:$0xff]
    %v575 = vld [vmem:[#allocation5 + $0x1c10] sm:$0xff]
    %v576 = vld [vmem:[#allocation5 + $0x1c18] sm:$0xff]
    %v577 = vld [vmem:[#allocation5 + $0x1c20] sm:$0xff]
    %v578 = vld [vmem:[#allocation5 + $0x1c28] sm:$0xff]
    %v579 = vld [vmem:[#allocation5 + $0x1c30] sm:$0xff]
    %v580 = vld [vmem:[#allocation5 + $0x1c38] sm:$0xff]
    %v581 = vld [vmem:[#allocation5 + $0x1c80] sm:$0xff]
    %v582 = vld [vmem:[#allocation5 + $0x1c88] sm:$0xff]
    %v583 = vld [vmem:[#allocation5 + $0x1c90] sm:$0xff]
    %v584 = vld [vmem:[#allocation5 + $0x1c98] sm:$0xff]
    %v585 = vld [vmem:[#allocation5 + $0x1ca0] sm:$0xff]
    %v586 = vld [vmem:[#allocation5 + $0x1ca8] sm:$0xff]
    %v587 = vld [vmem:[#allocation5 + $0x1cb0] sm:$0xff]
    %v588 = vld [vmem:[#allocation5 + $0x1cb8] sm:$0xff]
    %v589 = vld [vmem:[#allocation5 + $0x1d00] sm:$0xff]
    %v590 = vld [vmem:[#allocation5 + $0x1d08] sm:$0xff]
    %v591 = vld [vmem:[#allocation5 + $0x1d10] sm:$0xff]
    %v592 = vld [vmem:[#allocation5 + $0x1d18] sm:$0xff]
    %v593 = vld [vmem:[#allocation5 + $0x1d20] sm:$0xff]
    %v594 = vld [vmem:[#allocation5 + $0x1d28] sm:$0xff]
    %v595 = vld [vmem:[#allocation5 + $0x1d30] sm:$0xff]
    %v596 = vld [vmem:[#allocation5 + $0x1d38] sm:$0xff]
    %v597 = vld [vmem:[#allocation5 + $0x1d80] sm:$0xff]
    %v598 = vld [vmem:[#allocation5 + $0x1d88] sm:$0xff]
    %v599 = vld [vmem:[#allocation5 + $0x1d90] sm:$0xff]
    %v600 = vld [vmem:[#allocation5 + $0x1d98] sm:$0xff]
    %v601 = vld [vmem:[#allocation5 + $0x1da0] sm:$0xff]
    %v602 = vld [vmem:[#allocation5 + $0x1da8] sm:$0xff]
    %v603 = vld [vmem:[#allocation5 + $0x1db0] sm:$0xff]
    %v604 = vld [vmem:[#allocation5 + $0x1db8] sm:$0xff]
    %v605 = vld [vmem:[#allocation5 + $0x1e00] sm:$0xff]
    %v606 = vld [vmem:[#allocation5 + $0x1e08] sm:$0xff]
    %v607 = vld [vmem:[#allocation5 + $0x1e10] sm:$0xff]
    %v608 = vld [vmem:[#allocation5 + $0x1e18] sm:$0xff]
    %v609 = vld [vmem:[#allocation5 + $0x1e20] sm:$0xff]
    %v610 = vld [vmem:[#allocation5 + $0x1e28] sm:$0xff]
    %v611 = vld [vmem:[#allocation5 + $0x1e30] sm:$0xff]
    %v612 = vld [vmem:[#allocation5 + $0x1e38] sm:$0xff]
    %v613 = vld [vmem:[#allocation5 + $0x1e80] sm:$0xff]
    %v614 = vld [vmem:[#allocation5 + $0x1e88] sm:$0xff]
    %v615 = vld [vmem:[#allocation5 + $0x1e90] sm:$0xff]
    %v616 = vld [vmem:[#allocation5 + $0x1e98] sm:$0xff]
    %v617 = vld [vmem:[#allocation5 + $0x1ea0] sm:$0xff]
    %v618 = vld [vmem:[#allocation5 + $0x1ea8] sm:$0xff]
    %v619 = vld [vmem:[#allocation5 + $0x1eb0] sm:$0xff]
    %v620 = vld [vmem:[#allocation5 + $0x1eb8] sm:$0xff]
    %v621 = vld [vmem:[#allocation5 + $0x1f00] sm:$0xff]
    %v622 = vld [vmem:[#allocation5 + $0x1f08] sm:$0xff]
    %v623 = vld [vmem:[#allocation5 + $0x1f10] sm:$0xff]
    %v624 = vld [vmem:[#allocation5 + $0x1f18] sm:$0xff]
    %v625 = vld [vmem:[#allocation5 + $0x1f20] sm:$0xff]
    %v626 = vld [vmem:[#allocation5 + $0x1f28] sm:$0xff]
    %v627 = vld [vmem:[#allocation5 + $0x1f30] sm:$0xff]
    %v628 = vld [vmem:[#allocation5 + $0x1f38] sm:$0xff]
    %v629 = vld [vmem:[#allocation5 + $0x1f80] sm:$0xff]
    %v630 = vld [vmem:[#allocation5 + $0x1f88] sm:$0xff]
    %v631 = vld [vmem:[#allocation5 + $0x1f90] sm:$0xff]
    %v632 = vld [vmem:[#allocation5 + $0x1f98] sm:$0xff]
    %v633 = vld [vmem:[#allocation5 + $0x1fa0] sm:$0xff]
    %v634 = vld [vmem:[#allocation5 + $0x1fa8] sm:$0xff]
    %v635 = vld [vmem:[#allocation5 + $0x1fb0] sm:$0xff]
    %v636 = vld [vmem:[#allocation5 + $0x1fb8] sm:$0xff]
    %v637 = vld [vmem:[#allocation7] sm:$0xff]
    %v639 = vlaneseq
    %v640 = vshrl.u32 %v639, 7
    %v641 = vsub.s32 0, %v640
    %v642 = vrot.slane %v637, %v641
    %v643 = vlaneseq
    %v644 = vshrl.u32 %v643, 7
    %v645 = vsub.s32 1, %v644
    %v646 = vrot.slane %v637, %v645
    %v647 = vlaneseq
    %v648 = vshrl.u32 %v647, 7
    %v649 = vsub.s32 2, %v648
    %v650 = vrot.slane %v637, %v649
    %v651 = vlaneseq
    %v652 = vshrl.u32 %v651, 7
    %v653 = vsub.s32 3, %v652
    %v654 = vrot.slane %v637, %v653
    %v655 = vlaneseq
    %v656 = vshrl.u32 %v655, 7
    %v657 = vsub.s32 4, %v656
    %v658 = vrot.slane %v637, %v657
    %v659 = vlaneseq
    %v660 = vshrl.u32 %v659, 7
    %v661 = vsub.s32 5, %v660
    %v662 = vrot.slane %v637, %v661
    %v663 = vlaneseq
    %v664 = vshrl.u32 %v663, 7
    %v665 = vsub.s32 6, %v664
    %v666 = vrot.slane %v637, %v665
    %v667 = vlaneseq
    %v668 = vshrl.u32 %v667, 7
    %v669 = vsub.s32 7, %v668
    %v670 = vrot.slane %v637, %v669
    %679 = vmatprep.subr.mxu0 %v126
    %680 = vmatpush1.msra.mxu0 %v125
    %681 = vmatprep.subr.mxu0 %v134
    %682 = vmatpush1.msra.mxu0 %v133
    %683 = vmatprep.subr.mxu0 %v142
    %684 = vmatpush1.msra.mxu0 %v141
    %685 = vmatprep.subr.mxu0 %v150
    %686 = vmatpush1.msra.mxu0 %v149
    %687 = vmatprep.subr.mxu0 %v158
    %688 = vmatpush1.msra.mxu0 %v157
    %689 = vmatprep.subr.mxu0 %v166
    %690 = vmatpush1.msra.mxu0 %v165
    %691 = vmatprep.subr.mxu0 %v174
    %692 = vmatpush1.msra.mxu0 %v173
    %693 = vmatprep.subr.mxu0 %v182
    %694 = vmatpush1.msra.mxu0 %v181
    %695 = vmatprep.subr.mxu0 %v190
    %696 = vmatpush1.msra.mxu0 %v189
    %697 = vmatprep.subr.mxu0 %v198
    %698 = vmatpush1.msra.mxu0 %v197
    %699 = vmatprep.subr.mxu0 %v206
    %700 = vmatpush1.msra.mxu0 %v205
    %701 = vmatprep.subr.mxu0 %v214
    %702 = vmatpush1.msra.mxu0 %v213
    %703 = vmatprep.subr.mxu0 %v222
    %704 = vmatpush1.msra.mxu0 %v221
    %705 = vmatprep.subr.mxu0 %v230
    %706 = vmatpush1.msra.mxu0 %v229
    %707 = vmatprep.subr.mxu0 %v238
    %708 = vmatpush1.msra.mxu0 %v237
    %709 = vmatprep.subr.mxu0 %v246
    %710 = vmatpush1.msra.mxu0 %v245
    %711 = vmatprep.subr.mxu0 %v254
    %712 = vmatpush1.msra.mxu0 %v253
    %713 = vmatprep.subr.mxu0 %v262
    %714 = vmatpush1.msra.mxu0 %v261
    %715 = vmatprep.subr.mxu0 %v270
    %716 = vmatpush1.msra.mxu0 %v269
    %717 = vmatprep.subr.mxu0 %v278
    %718 = vmatpush1.msra.mxu0 %v277
    %719 = vmatprep.subr.mxu0 %v286
    %720 = vmatpush1.msra.mxu0 %v285
    %721 = vmatprep.subr.mxu0 %v294
    %722 = vmatpush1.msra.mxu0 %v293
    %723 = vmatprep.subr.mxu0 %v302
    %724 = vmatpush1.msra.mxu0 %v301
    %725 = vmatprep.subr.mxu0 %v310
    %726 = vmatpush1.msra.mxu0 %v309
    %727 = vmatprep.subr.mxu0 %v318
    %728 = vmatpush1.msra.mxu0 %v317
    %729 = vmatprep.subr.mxu0 %v326
    %730 = vmatpush1.msra.mxu0 %v325
    %731 = vmatprep.subr.mxu0 %v334
    %732 = vmatpush1.msra.mxu0 %v333
    %733 = vmatprep.subr.mxu0 %v342
    %734 = vmatpush1.msra.mxu0 %v341
    %735 = vmatprep.subr.mxu0 %v350
    %736 = vmatpush1.msra.mxu0 %v349
    %737 = vmatprep.subr.mxu0 %v358
    %738 = vmatpush1.msra.mxu0 %v357
    %739 = vmatprep.subr.mxu0 %v366
    %740 = vmatpush1.msra.mxu0 %v365
    %741 = vmatprep.subr.mxu0 %v374
    %742 = vmatpush1.msra.mxu0 %v373
    %743 = vmatprep.mubr.f32.mxu0 %v115
    %744 = vmatmul.mubr.f32.gmra.mrb[0].mxu0 %v114
    %v745 = vpop.f32.mrb[0].mxu0
    %v746 = vadd.f32 %v642, %v745
    %v747 = vpop.f32.mrb[0].mxu0
    %v748 = vadd.f32 %v646, %v747
    %749 = vmatprep.mubr.f32.mxu0 %v119
    %750 = vmatmul.mubr.f32.gmra.mrb[0].mxu0 %v118
    %v751 = vpop.f32.mrb[0].mxu0
    %v752 = vadd.f32 %v642, %v751
    %v753 = vpop.f32.mrb[0].mxu0
    %v754 = vadd.f32 %v646, %v753
    %755 = vdwg.mxu0
    %756 = vmatprep.subr.mxu0 %v382
    %757 = vmatpush1.msra.mxu0 %v381
    %758 = vmatprep.subr.mxu0 %v390
    %759 = vmatpush1.msra.mxu0 %v389
    %760 = vmatprep.subr.mxu0 %v398
    %761 = vmatpush1.msra.mxu0 %v397
    %762 = vmatprep.subr.mxu0 %v406
    %763 = vmatpush1.msra.mxu0 %v405
    %764 = vmatprep.subr.mxu0 %v414
    %765 = vmatpush1.msra.mxu0 %v413
    %766 = vmatprep.subr.mxu0 %v422
    %767 = vmatpush1.msra.mxu0 %v421
    %768 = vmatprep.subr.mxu0 %v430
    %769 = vmatpush1.msra.mxu0 %v429
    %770 = vmatprep.subr.mxu0 %v438
    %771 = vmatpush1.msra.mxu0 %v437
    %772 = vmatprep.subr.mxu0 %v446
    %773 = vmatpush1.msra.mxu0 %v445
    %774 = vmatprep.subr.mxu0 %v454
    %775 = vmatpush1.msra.mxu0 %v453
    %776 = vmatprep.subr.mxu0 %v462
    %777 = vmatpush1.msra.mxu0 %v461
    %778 = vmatprep.subr.mxu0 %v470
    %779 = vmatpush1.msra.mxu0 %v469
    %780 = vmatprep.subr.mxu0 %v478
    %781 = vmatpush1.msra.mxu0 %v477
    %782 = vmatprep.subr.mxu0 %v486
    %783 = vmatpush1.msra.mxu0 %v485
    %784 = vmatprep.subr.mxu0 %v494
    %785 = vmatpush1.msra.mxu0 %v493
    %786 = vmatprep.subr.mxu0 %v502
    %787 = vmatpush1.msra.mxu0 %v501
    %788 = vmatprep.subr.mxu0 %v510
    %789 = vmatpush1.msra.mxu0 %v509
    %790 = vmatprep.subr.mxu0 %v518
    %791 = vmatpush1.msra.mxu0 %v517
    %792 = vmatprep.subr.mxu0 %v526
    %793 = vmatpush1.msra.mxu0 %v525
    %794 = vmatprep.subr.mxu0 %v534
    %795 = vmatpush1.msra.mxu0 %v533
    %796 = vmatprep.subr.mxu0 %v542
    %797 = vmatpush1.msra.mxu0 %v541
    %798 = vmatprep.subr.mxu0 %v550
    %799 = vmatpush1.msra.mxu0 %v549
    %800 = vmatprep.subr.mxu0 %v558
    %801 = vmatpush1.msra.mxu0 %v557
    %802 = vmatprep.subr.mxu0 %v566
    %803 = vmatpush1.msra.mxu0 %v565
    %804 = vmatprep.subr.mxu0 %v574
    %805 = vmatpush1.msra.mxu0 %v573
    %806 = vmatprep.subr.mxu0 %v582
    %807 = vmatpush1.msra.mxu0 %v581
    %808 = vmatprep.subr.mxu0 %v590
    %809 = vmatpush1.msra.mxu0 %v589
    %810 = vmatprep.subr.mxu0 %v598
    %811 = vmatpush1.msra.mxu0 %v597
    %812 = vmatprep.subr.mxu0 %v606
    %813 = vmatpush1.msra.mxu0 %v605
    %814 = vmatprep.subr.mxu0 %v614
    %815 = vmatpush1.msra.mxu0 %v613
    %816 = vmatprep.subr.mxu0 %v622
    %817 = vmatpush1.msra.mxu0 %v621
    %818 = vmatprep.subr.mxu0 %v630
    %819 = vmatpush1.msra.mxu0 %v629
    %820 = vmatprep.mubr.f32.mxu0 %v117
    %821 = vmatmul.mubr.f32.gmra.mrb[0].mxu0 %v116
    %v822 = vpop.f32.mrb[0].mxu0
    %v823 = vadd.f32 %v746, %v822
    %v824 = vpop.f32.mrb[0].mxu0
    %v825 = vadd.f32 %v748, %v824
    %826 = vmatprep.mubr.f32.mxu0 %v121
    %827 = vmatmul.mubr.f32.gmra.mrb[0].mxu0 %v120
    %v828 = vpop.f32.mrb[0].mxu0
    %v829 = vadd.f32 %v752, %v828
    %v830 = vpop.f32.mrb[0].mxu0
    %v831 = vadd.f32 %v754, %v830
    %832 = vdwg.mxu0
    %833 = vmatprep.subr.mxu0 %v128
    %834 = vmatpush1.msra.mxu0 %v127
    %835 = vmatprep.subr.mxu0 %v136
    %836 = vmatpush1.msra.mxu0 %v135
    %837 = vmatprep.subr.mxu0 %v144
    %838 = vmatpush1.msra.mxu0 %v143
    %839 = vmatprep.subr.mxu0 %v152
    %840 = vmatpush1.msra.mxu0 %v151
    %841 = vmatprep.subr.mxu0 %v160
    %842 = vmatpush1.msra.mxu0 %v159
    %843 = vmatprep.subr.mxu0 %v168
    %844 = vmatpush1.msra.mxu0 %v167
    %845 = vmatprep.subr.mxu0 %v176
    %846 = vmatpush1.msra.mxu0 %v175
    %847 = vmatprep.subr.mxu0 %v184
    %848 = vmatpush1.msra.mxu0 %v183
    %849 = vmatprep.subr.mxu0 %v192
    %850 = vmatpush1.msra.mxu0 %v191
    %851 = vmatprep.subr.mxu0 %v200
    %852 = vmatpush1.msra.mxu0 %v199
    %853 = vmatprep.subr.mxu0 %v208
    %854 = vmatpush1.msra.mxu0 %v207
    %855 = vmatprep.subr.mxu0 %v216
    %856 = vmatpush1.msra.mxu0 %v215
    %857 = vmatprep.subr.mxu0 %v224
    %858 = vmatpush1.msra.mxu0 %v223
    %859 = vmatprep.subr.mxu0 %v232
    %860 = vmatpush1.msra.mxu0 %v231
    %861 = vmatprep.subr.mxu0 %v240
    %862 = vmatpush1.msra.mxu0 %v239
    %863 = vmatprep.subr.mxu0 %v248
    %864 = vmatpush1.msra.mxu0 %v247
    %865 = vmatprep.subr.mxu0 %v256
    %866 = vmatpush1.msra.mxu0 %v255
    %867 = vmatprep.subr.mxu0 %v264
    %868 = vmatpush1.msra.mxu0 %v263
    %869 = vmatprep.subr.mxu0 %v272
    %870 = vmatpush1.msra.mxu0 %v271
    %871 = vmatprep.subr.mxu0 %v280
    %872 = vmatpush1.msra.mxu0 %v279
    %873 = vmatprep.subr.mxu0 %v288
    %874 = vmatpush1.msra.mxu0 %v287
    %875 = vmatprep.subr.mxu0 %v296
    %876 = vmatpush1.msra.mxu0 %v295
    %877 = vmatprep.subr.mxu0 %v304
    %878 = vmatpush1.msra.mxu0 %v303
    %879 = vmatprep.subr.mxu0 %v312
    %880 = vmatpush1.msra.mxu0 %v311
    %881 = vmatprep.subr.mxu0 %v320
    %882 = vmatpush1.msra.mxu0 %v319
    %883 = vmatprep.subr.mxu0 %v328
    %884 = vmatpush1.msra.mxu0 %v327
    %885 = vmatprep.subr.mxu0 %v336
    %886 = vmatpush1.msra.mxu0 %v335
    %887 = vmatprep.subr.mxu0 %v344
    %888 = vmatpush1.msra.mxu0 %v343
    %889 = vmatprep.subr.mxu0 %v352
    %890 = vmatpush1.msra.mxu0 %v351
    %891 = vmatprep.subr.mxu0 %v360
    %892 = vmatpush1.msra.mxu0 %v359
    %893 = vmatprep.subr.mxu0 %v368
    %894 = vmatpush1.msra.mxu0 %v367
    %895 = vmatprep.subr.mxu0 %v376
    %896 = vmatpush1.msra.mxu0 %v375
    %897 = vmatprep.mubr.f32.mxu0 %v115
    %898 = vmatmul.mubr.f32.gmra.mrb[0].mxu0 %v114
    %v899 = vpop.f32.mrb[0].mxu0
    %v900 = vadd.f32 %v650, %v899
    %v901 = vpop.f32.mrb[0].mxu0
    %v902 = vadd.f32 %v654, %v901
    %903 = vmatprep.mubr.f32.mxu0 %v119
    %904 = vmatmul.mubr.f32.gmra.mrb[0].mxu0 %v118
    %v905 = vpop.f32.mrb[0].mxu0
    %v906 = vadd.f32 %v650, %v905
    %v907 = vpop.f32.mrb[0].mxu0
    %v908 = vadd.f32 %v654, %v907
    %909 = vdwg.mxu0
    %910 = vmatprep.subr.mxu0 %v384
    %911 = vmatpush1.msra.mxu0 %v383
    %912 = vmatprep.subr.mxu0 %v392
    %913 = vmatpush1.msra.mxu0 %v391
    %914 = vmatprep.subr.mxu0 %v400
    %915 = vmatpush1.msra.mxu0 %v399
    %916 = vmatprep.subr.mxu0 %v408
    %917 = vmatpush1.msra.mxu0 %v407
    %918 = vmatprep.subr.mxu0 %v416
    %919 = vmatpush1.msra.mxu0 %v415
    %920 = vmatprep.subr.mxu0 %v424
    %921 = vmatpush1.msra.mxu0 %v423
    %922 = vmatprep.subr.mxu0 %v432
    %923 = vmatpush1.msra.mxu0 %v431
    %924 = vmatprep.subr.mxu0 %v440
    %925 = vmatpush1.msra.mxu0 %v439
    %926 = vmatprep.subr.mxu0 %v448
    %927 = vmatpush1.msra.mxu0 %v447
    %928 = vmatprep.subr.mxu0 %v456
    %929 = vmatpush1.msra.mxu0 %v455
    %930 = vmatprep.subr.mxu0 %v464
    %931 = vmatpush1.msra.mxu0 %v463
    %932 = vmatprep.subr.mxu0 %v472
    %933 = vmatpush1.msra.mxu0 %v471
    %934 = vmatprep.subr.mxu0 %v480
    %935 = vmatpush1.msra.mxu0 %v479
    %936 = vmatprep.subr.mxu0 %v488
    %937 = vmatpush1.msra.mxu0 %v487
    %938 = vmatprep.subr.mxu0 %v496
    %939 = vmatpush1.msra.mxu0 %v495
    %940 = vmatprep.subr.mxu0 %v504
    %941 = vmatpush1.msra.mxu0 %v503
    %942 = vmatprep.subr.mxu0 %v512
    %943 = vmatpush1.msra.mxu0 %v511
    %944 = vmatprep.subr.mxu0 %v520
    %945 = vmatpush1.msra.mxu0 %v519
    %946 = vmatprep.subr.mxu0 %v528
    %947 = vmatpush1.msra.mxu0 %v527
    %948 = vmatprep.subr.mxu0 %v536
    %949 = vmatpush1.msra.mxu0 %v535
    %950 = vmatprep.subr.mxu0 %v544
    %951 = vmatpush1.msra.mxu0 %v543
    %952 = vmatprep.subr.mxu0 %v552
    %953 = vmatpush1.msra.mxu0 %v551
    %954 = vmatprep.subr.mxu0 %v560
    %955 = vmatpush1.msra.mxu0 %v559
    %956 = vmatprep.subr.mxu0 %v568
    %957 = vmatpush1.msra.mxu0 %v567
    %958 = vmatprep.subr.mxu0 %v576
    %959 = vmatpush1.msra.mxu0 %v575
    %960 = vmatprep.subr.mxu0 %v584
    %961 = vmatpush1.msra.mxu0 %v583
    %962 = vmatprep.subr.mxu0 %v592
    %963 = vmatpush1.msra.mxu0 %v591
    %964 = vmatprep.subr.mxu0 %v600
    %965 = vmatpush1.msra.mxu0 %v599
    %966 = vmatprep.subr.mxu0 %v608
    %967 = vmatpush1.msra.mxu0 %v607
    %968 = vmatprep.subr.mxu0 %v616
    %969 = vmatpush1.msra.mxu0 %v615
    %970 = vmatprep.subr.mxu0 %v624
    %971 = vmatpush1.msra.mxu0 %v623
    %972 = vmatprep.subr.mxu0 %v632
    %973 = vmatpush1.msra.mxu0 %v631
    %974 = vmatprep.mubr.f32.mxu0 %v117
    %975 = vmatmul.mubr.f32.gmra.mrb[0].mxu0 %v116
    %v976 = vpop.f32.mrb[0].mxu0
    %v977 = vadd.f32 %v900, %v976
    %v978 = vpop.f32.mrb[0].mxu0
    %v979 = vadd.f32 %v902, %v978
    %980 = vmatprep.mubr.f32.mxu0 %v121
    %981 = vmatmul.mubr.f32.gmra.mrb[0].mxu0 %v120
    %v982 = vpop.f32.mrb[0].mxu0
    %v983 = vadd.f32 %v906, %v982
    %v984 = vpop.f32.mrb[0].mxu0
    %v985 = vadd.f32 %v908, %v984
    %986 = vdwg.mxu0
    %987 = vmatprep.subr.mxu0 %v130
    %988 = vmatpush1.msra.mxu0 %v129
    %989 = vmatprep.subr.mxu0 %v138
    %990 = vmatpush1.msra.mxu0 %v137
    %991 = vmatprep.subr.mxu0 %v146
    %992 = vmatpush1.msra.mxu0 %v145
    %993 = vmatprep.subr.mxu0 %v154
    %994 = vmatpush1.msra.mxu0 %v153
    %995 = vmatprep.subr.mxu0 %v162
    %996 = vmatpush1.msra.mxu0 %v161
    %997 = vmatprep.subr.mxu0 %v170
    %998 = vmatpush1.msra.mxu0 %v169
    %999 = vmatprep.subr.mxu0 %v178
    %1000 = vmatpush1.msra.mxu0 %v177
    %1001 = vmatprep.subr.mxu0 %v186
    %1002 = vmatpush1.msra.mxu0 %v185
    %1003 = vmatprep.subr.mxu0 %v194
    %1004 = vmatpush1.msra.mxu0 %v193
    %1005 = vmatprep.subr.mxu0 %v202
    %1006 = vmatpush1.msra.mxu0 %v201
    %1007 = vmatprep.subr.mxu0 %v210
    %1008 = vmatpush1.msra.mxu0 %v209
    %1009 = vmatprep.subr.mxu0 %v218
    %1010 = vmatpush1.msra.mxu0 %v217
    %1011 = vmatprep.subr.mxu0 %v226
    %1012 = vmatpush1.msra.mxu0 %v225
    %1013 = vmatprep.subr.mxu0 %v234
    %1014 = vmatpush1.msra.mxu0 %v233
    %1015 = vmatprep.subr.mxu0 %v242
    %1016 = vmatpush1.msra.mxu0 %v241
    %1017 = vmatprep.subr.mxu0 %v250
    %1018 = vmatpush1.msra.mxu0 %v249
    %1019 = vmatprep.subr.mxu0 %v258
    %1020 = vmatpush1.msra.mxu0 %v257
    %1021 = vmatprep.subr.mxu0 %v266
    %1022 = vmatpush1.msra.mxu0 %v265
    %1023 = vmatprep.subr.mxu0 %v274
    %1024 = vmatpush1.msra.mxu0 %v273
    %1025 = vmatprep.subr.mxu0 %v282
    %1026 = vmatpush1.msra.mxu0 %v281
    %1027 = vmatprep.subr.mxu0 %v290
    %1028 = vmatpush1.msra.mxu0 %v289
    %1029 = vmatprep.subr.mxu0 %v298
    %1030 = vmatpush1.msra.mxu0 %v297
    %1031 = vmatprep.subr.mxu0 %v306
    %1032 = vmatpush1.msra.mxu0 %v305
    %1033 = vmatprep.subr.mxu0 %v314
    %1034 = vmatpush1.msra.mxu0 %v313
    %1035 = vmatprep.subr.mxu0 %v322
    %1036 = vmatpush1.msra.mxu0 %v321
    %1037 = vmatprep.subr.mxu0 %v330
    %1038 = vmatpush1.msra.mxu0 %v329
    %1039 = vmatprep.subr.mxu0 %v338
    %1040 = vmatpush1.msra.mxu0 %v337
    %1041 = vmatprep.subr.mxu0 %v346
    %1042 = vmatpush1.msra.mxu0 %v345
    %1043 = vmatprep.subr.mxu0 %v354
    %1044 = vmatpush1.msra.mxu0 %v353
    %1045 = vmatprep.subr.mxu0 %v362
    %1046 = vmatpush1.msra.mxu0 %v361
    %1047 = vmatprep.subr.mxu0 %v370
    %1048 = vmatpush1.msra.mxu0 %v369
    %1049 = vmatprep.subr.mxu0 %v378
    %1050 = vmatpush1.msra.mxu0 %v377
    %1051 = vmatprep.mubr.f32.mxu0 %v115
    %1052 = vmatmul.mubr.f32.gmra.mrb[0].mxu0 %v114
    %v1053 = vpop.f32.mrb[0].mxu0
    %v1054 = vadd.f32 %v658, %v1053
    %v1055 = vpop.f32.mrb[0].mxu0
    %v1056 = vadd.f32 %v662, %v1055
    %1057 = vmatprep.mubr.f32.mxu0 %v119
    %1058 = vmatmul.mubr.f32.gmra.mrb[0].mxu0 %v118
    %v1059 = vpop.f32.mrb[0].mxu0
    %v1060 = vadd.f32 %v658, %v1059
    %v1061 = vpop.f32.mrb[0].mxu0
    %v1062 = vadd.f32 %v662, %v1061
    %1063 = vdwg.mxu0
    %1064 = vmatprep.subr.mxu0 %v386
    %1065 = vmatpush1.msra.mxu0 %v385
    %1066 = vmatprep.subr.mxu0 %v394
    %1067 = vmatpush1.msra.mxu0 %v393
    %1068 = vmatprep.subr.mxu0 %v402
    %1069 = vmatpush1.msra.mxu0 %v401
    %1070 = vmatprep.subr.mxu0 %v410
    %1071 = vmatpush1.msra.mxu0 %v409
    %1072 = vmatprep.subr.mxu0 %v418
    %1073 = vmatpush1.msra.mxu0 %v417
    %1074 = vmatprep.subr.mxu0 %v426
    %1075 = vmatpush1.msra.mxu0 %v425
    %1076 = vmatprep.subr.mxu0 %v434
    %1077 = vmatpush1.msra.mxu0 %v433
    %1078 = vmatprep.subr.mxu0 %v442
    %1079 = vmatpush1.msra.mxu0 %v441
    %1080 = vmatprep.subr.mxu0 %v450
    %1081 = vmatpush1.msra.mxu0 %v449
    %1082 = vmatprep.subr.mxu0 %v458
    %1083 = vmatpush1.msra.mxu0 %v457
    %1084 = vmatprep.subr.mxu0 %v466
    %1085 = vmatpush1.msra.mxu0 %v465
    %1086 = vmatprep.subr.mxu0 %v474
    %1087 = vmatpush1.msra.mxu0 %v473
    %1088 = vmatprep.subr.mxu0 %v482
    %1089 = vmatpush1.msra.mxu0 %v481
    %1090 = vmatprep.subr.mxu0 %v490
    %1091 = vmatpush1.msra.mxu0 %v489
    %1092 = vmatprep.subr.mxu0 %v498
    %1093 = vmatpush1.msra.mxu0 %v497
    %1094 = vmatprep.subr.mxu0 %v506
    %1095 = vmatpush1.msra.mxu0 %v505
    %1096 = vmatprep.subr.mxu0 %v514
    %1097 = vmatpush1.msra.mxu0 %v513
    %1098 = vmatprep.subr.mxu0 %v522
    %1099 = vmatpush1.msra.mxu0 %v521
    %1100 = vmatprep.subr.mxu0 %v530
    %1101 = vmatpush1.msra.mxu0 %v529
    %1102 = vmatprep.subr.mxu0 %v538
    %1103 = vmatpush1.msra.mxu0 %v537
    %1104 = vmatprep.subr.mxu0 %v546
    %1105 = vmatpush1.msra.mxu0 %v545
    %1106 = vmatprep.subr.mxu0 %v554
    %1107 = vmatpush1.msra.mxu0 %v553
    %1108 = vmatprep.subr.mxu0 %v562
    %1109 = vmatpush1.msra.mxu0 %v561
    %1110 = vmatprep.subr.mxu0 %v570
    %1111 = vmatpush1.msra.mxu0 %v569
    %1112 = vmatprep.subr.mxu0 %v578
    %1113 = vmatpush1.msra.mxu0 %v577
    %1114 = vmatprep.subr.mxu0 %v586
    %1115 = vmatpush1.msra.mxu0 %v585
    %1116 = vmatprep.subr.mxu0 %v594
    %1117 = vmatpush1.msra.mxu0 %v593
    %1118 = vmatprep.subr.mxu0 %v602
    %1119 = vmatpush1.msra.mxu0 %v601
    %1120 = vmatprep.subr.mxu0 %v610
    %1121 = vmatpush1.msra.mxu0 %v609
    %1122 = vmatprep.subr.mxu0 %v618
    %1123 = vmatpush1.msra.mxu0 %v617
    %1124 = vmatprep.subr.mxu0 %v626
    %1125 = vmatpush1.msra.mxu0 %v625
    %1126 = vmatprep.subr.mxu0 %v634
    %1127 = vmatpush1.msra.mxu0 %v633
    %1128 = vmatprep.mubr.f32.mxu0 %v117
    %1129 = vmatmul.mubr.f32.gmra.mrb[0].mxu0 %v116
    %v1130 = vpop.f32.mrb[0].mxu0
    %v1131 = vadd.f32 %v1054, %v1130
    %v1132 = vpop.f32.mrb[0].mxu0
    %v1133 = vadd.f32 %v1056, %v1132
    %1134 = vmatprep.mubr.f32.mxu0 %v121
    %1135 = vmatmul.mubr.f32.gmra.mrb[0].mxu0 %v120
    %v1136 = vpop.f32.mrb[0].mxu0
    %v1137 = vadd.f32 %v1060, %v1136
    %v1138 = vpop.f32.mrb[0].mxu0
    %v1139 = vadd.f32 %v1062, %v1138
    %1140 = vdwg.mxu0
    %1141 = vmatprep.subr.mxu0 %v132
    %1142 = vmatpush1.msra.mxu0 %v131
    %1143 = vmatprep.subr.mxu0 %v140
    %1144 = vmatpush1.msra.mxu0 %v139
    %1145 = vmatprep.subr.mxu0 %v148
    %1146 = vmatpush1.msra.mxu0 %v147
    %1147 = vmatprep.subr.mxu0 %v156
    %1148 = vmatpush1.msra.mxu0 %v155
    %1149 = vmatprep.subr.mxu0 %v164
    %1150 = vmatpush1.msra.mxu0 %v163
    %1151 = vmatprep.subr.mxu0 %v172
    %1152 = vmatpush1.msra.mxu0 %v171
    %1153 = vmatprep.subr.mxu0 %v180
    %1154 = vmatpush1.msra.mxu0 %v179
    %1155 = vmatprep.subr.mxu0 %v188
    %1156 = vmatpush1.msra.mxu0 %v187
    %1157 = vmatprep.subr.mxu0 %v196
    %1158 = vmatpush1.msra.mxu0 %v195
    %1159 = vmatprep.subr.mxu0 %v204
    %1160 = vmatpush1.msra.mxu0 %v203
    %1161 = vmatprep.subr.mxu0 %v212
    %1162 = vmatpush1.msra.mxu0 %v211
    %1163 = vmatprep.subr.mxu0 %v220
    %1164 = vmatpush1.msra.mxu0 %v219
    %1165 = vmatprep.subr.mxu0 %v228
    %1166 = vmatpush1.msra.mxu0 %v227
    %1167 = vmatprep.subr.mxu0 %v236
    %1168 = vmatpush1.msra.mxu0 %v235
    %1169 = vmatprep.subr.mxu0 %v244
    %1170 = vmatpush1.msra.mxu0 %v243
    %1171 = vmatprep.subr.mxu0 %v252
    %1172 = vmatpush1.msra.mxu0 %v251
    %1173 = vmatprep.subr.mxu0 %v260
    %1174 = vmatpush1.msra.mxu0 %v259
    %1175 = vmatprep.subr.mxu0 %v268
    %1176 = vmatpush1.msra.mxu0 %v267
    %1177 = vmatprep.subr.mxu0 %v276
    %1178 = vmatpush1.msra.mxu0 %v275
    %1179 = vmatprep.subr.mxu0 %v284
    %1180 = vmatpush1.msra.mxu0 %v283
    %1181 = vmatprep.subr.mxu0 %v292
    %1182 = vmatpush1.msra.mxu0 %v291
    %1183 = vmatprep.subr.mxu0 %v300
    %1184 = vmatpush1.msra.mxu0 %v299
    %1185 = vmatprep.subr.mxu0 %v308
    %1186 = vmatpush1.msra.mxu0 %v307
    %1187 = vmatprep.subr.mxu0 %v316
    %1188 = vmatpush1.msra.mxu0 %v315
    %1189 = vmatprep.subr.mxu0 %v324
    %1190 = vmatpush1.msra.mxu0 %v323
    %1191 = vmatprep.subr.mxu0 %v332
    %1192 = vmatpush1.msra.mxu0 %v331
    %1193 = vmatprep.subr.mxu0 %v340
    %1194 = vmatpush1.msra.mxu0 %v339
    %1195 = vmatprep.subr.mxu0 %v348
    %1196 = vmatpush1.msra.mxu0 %v347
    %1197 = vmatprep.subr.mxu0 %v356
    %1198 = vmatpush1.msra.mxu0 %v355
    %1199 = vmatprep.subr.mxu0 %v364
    %1200 = vmatpush1.msra.mxu0 %v363
    %1201 = vmatprep.subr.mxu0 %v372
    %1202 = vmatpush1.msra.mxu0 %v371
    %1203 = vmatprep.subr.mxu0 %v380
    %1204 = vmatpush1.msra.mxu0 %v379
    %1205 = vmatprep.mubr.f32.mxu0 %v115
    %1206 = vmatmul.mubr.f32.gmra.mrb[0].mxu0 %v114
    %v1207 = vpop.f32.mrb[0].mxu0
    %v1208 = vadd.f32 %v666, %v1207
    %v1209 = vpop.f32.mrb[0].mxu0
    %v1210 = vadd.f32 %v670, %v1209
    %1211 = vmatprep.mubr.f32.mxu0 %v119
    %1212 = vmatmul.mubr.f32.gmra.mrb[0].mxu0 %v118
    %v1213 = vpop.f32.mrb[0].mxu0
    %v1214 = vadd.f32 %v666, %v1213
    %v1215 = vpop.f32.mrb[0].mxu0
    %v1216 = vadd.f32 %v670, %v1215
    %1217 = vdwg.mxu0
    %1218 = vmatprep.subr.mxu0 %v388
    %1219 = vmatpush1.msra.mxu0 %v387
    %1220 = vmatprep.subr.mxu0 %v396
    %1221 = vmatpush1.msra.mxu0 %v395
    %1222 = vmatprep.subr.mxu0 %v404
    %1223 = vmatpush1.msra.mxu0 %v403
    %1224 = vmatprep.subr.mxu0 %v412
    %1225 = vmatpush1.msra.mxu0 %v411
    %1226 = vmatprep.subr.mxu0 %v420
    %1227 = vmatpush1.msra.mxu0 %v419
    %1228 = vmatprep.subr.mxu0 %v428
    %1229 = vmatpush1.msra.mxu0 %v427
    %1230 = vmatprep.subr.mxu0 %v436
    %1231 = vmatpush1.msra.mxu0 %v435
    %1232 = vmatprep.subr.mxu0 %v444
    %1233 = vmatpush1.msra.mxu0 %v443
    %1234 = vmatprep.subr.mxu0 %v452
    %1235 = vmatpush1.msra.mxu0 %v451
    %1236 = vmatprep.subr.mxu0 %v460
    %1237 = vmatpush1.msra.mxu0 %v459
    %1238 = vmatprep.subr.mxu0 %v468
    %1239 = vmatpush1.msra.mxu0 %v467
    %1240 = vmatprep.subr.mxu0 %v476
    %1241 = vmatpush1.msra.mxu0 %v475
    %1242 = vmatprep.subr.mxu0 %v484
    %1243 = vmatpush1.msra.mxu0 %v483
    %1244 = vmatprep.subr.mxu0 %v492
    %1245 = vmatpush1.msra.mxu0 %v491
    %1246 = vmatprep.subr.mxu0 %v500
    %1247 = vmatpush1.msra.mxu0 %v499
    %1248 = vmatprep.subr.mxu0 %v508
    %1249 = vmatpush1.msra.mxu0 %v507
    %1250 = vmatprep.subr.mxu0 %v516
    %1251 = vmatpush1.msra.mxu0 %v515
    %1252 = vmatprep.subr.mxu0 %v524
    %1253 = vmatpush1.msra.mxu0 %v523
    %1254 = vmatprep.subr.mxu0 %v532
    %1255 = vmatpush1.msra.mxu0 %v531
    %1256 = vmatprep.subr.mxu0 %v540
    %1257 = vmatpush1.msra.mxu0 %v539
    %1258 = vmatprep.subr.mxu0 %v548
    %1259 = vmatpush1.msra.mxu0 %v547
    %1260 = vmatprep.subr.mxu0 %v556
    %1261 = vmatpush1.msra.mxu0 %v555
    %1262 = vmatprep.subr.mxu0 %v564
    %1263 = vmatpush1.msra.mxu0 %v563
    %1264 = vmatprep.subr.mxu0 %v572
    %1265 = vmatpush1.msra.mxu0 %v571
    %1266 = vmatprep.subr.mxu0 %v580
    %1267 = vmatpush1.msra.mxu0 %v579
    %1268 = vmatprep.subr.mxu0 %v588
    %1269 = vmatpush1.msra.mxu0 %v587
    %1270 = vmatprep.subr.mxu0 %v596
    %1271 = vmatpush1.msra.mxu0 %v595
    %1272 = vmatprep.subr.mxu0 %v604
    %1273 = vmatpush1.msra.mxu0 %v603
    %1274 = vmatprep.subr.mxu0 %v612
    %1275 = vmatpush1.msra.mxu0 %v611
    %1276 = vmatprep.subr.mxu0 %v620
    %1277 = vmatpush1.msra.mxu0 %v619
    %1278 = vmatprep.subr.mxu0 %v628
    %1279 = vmatpush1.msra.mxu0 %v627
    %1280 = vmatprep.subr.mxu0 %v636
    %1281 = vmatpush1.msra.mxu0 %v635
    %1282 = vmatprep.mubr.f32.mxu0 %v117
    %1283 = vmatmul.mubr.f32.gmra.mrb[0].mxu0 %v116
    %v1284 = vpop.f32.mrb[0].mxu0
    %v1285 = vadd.f32 %v1208, %v1284
    %v1286 = vpop.f32.mrb[0].mxu0
    %v1287 = vadd.f32 %v1210, %v1286
    %1288 = vmatprep.mubr.f32.mxu0 %v121
    %1289 = vmatmul.mubr.f32.gmra.mrb[0].mxu0 %v120
    %v1290 = vpop.f32.mrb[0].mxu0
    %v1291 = vadd.f32 %v1214, %v1290
    %v1292 = vpop.f32.mrb[0].mxu0
    %v1293 = vadd.f32 %v1216, %v1292
    %1294 = vdwg.mxu0
    %v1295 = vmax.f32 %v823, 0.0
    %v1296 = vmax.f32 %v825, 0.0
    %v1297 = vmax.f32 %v977, 0.0
    %v1298 = vmax.f32 %v979, 0.0
    %v1299 = vmax.f32 %v1131, 0.0
    %v1300 = vmax.f32 %v1133, 0.0
    %v1301 = vmax.f32 %v1285, 0.0
    %v1302 = vmax.f32 %v1287, 0.0
    %v1303 = vmax.f32 %v829, 0.0
    %v1304 = vmax.f32 %v831, 0.0
    %v1305 = vmax.f32 %v983, 0.0
    %v1306 = vmax.f32 %v985, 0.0
    %v1307 = vmax.f32 %v1137, 0.0
    %v1308 = vmax.f32 %v1139, 0.0
    %v1309 = vmax.f32 %v1291, 0.0
    %v1310 = vmax.f32 %v1293, 0.0
    %v1311 = vld [vmem:[#allocation8] sm:$0xff]
    %v1312 = vld [vmem:[#allocation8 + $0x8] sm:$0xff]
    %v1313 = vld [vmem:[#allocation8 + $0x10] sm:$0xff]
    %v1314 = vld [vmem:[#allocation8 + $0x18] sm:$0xff]
    %v1315 = vld [vmem:[#allocation8 + $0x20] sm:$0xff]
    %v1316 = vld [vmem:[#allocation8 + $0x28] sm:$0xff]
    %v1317 = vld [vmem:[#allocation8 + $0x30] sm:$0xff]
    %v1318 = vld [vmem:[#allocation8 + $0x38] sm:$0xff]
    %v1319 = vld [vmem:[#allocation8 + $0x40] sm:$0xff]
    %v1320 = vld [vmem:[#allocation8 + $0x48] sm:$0xff]
    %v1321 = vld [vmem:[#allocation8 + $0x50] sm:$0xff]
    %v1322 = vld [vmem:[#allocation8 + $0x58] sm:$0xff]
    %v1323 = vld [vmem:[#allocation8 + $0x60] sm:$0xff]
    %v1324 = vld [vmem:[#allocation8 + $0x68] sm:$0xff]
    %v1325 = vld [vmem:[#allocation8 + $0x70] sm:$0xff]
    %v1326 = vld [vmem:[#allocation8 + $0x78] sm:$0xff]
    %v1327 = vld [vmem:[#allocation8 + $0x80] sm:$0xff]
    %v1328 = vld [vmem:[#allocation8 + $0x88] sm:$0xff]
    %v1329 = vld [vmem:[#allocation8 + $0x90] sm:$0xff]
    %v1330 = vld [vmem:[#allocation8 + $0x98] sm:$0xff]
    %v1331 = vld [vmem:[#allocation8 + $0xa0] sm:$0xff]
    %v1332 = vld [vmem:[#allocation8 + $0xa8] sm:$0xff]
    %v1333 = vld [vmem:[#allocation8 + $0xb0] sm:$0xff]
    %v1334 = vld [vmem:[#allocation8 + $0xb8] sm:$0xff]
    %v1335 = vld [vmem:[#allocation8 + $0xc0] sm:$0xff]
    %v1336 = vld [vmem:[#allocation8 + $0xc8] sm:$0xff]
    %v1337 = vld [vmem:[#allocation8 + $0xd0] sm:$0xff]
    %v1338 = vld [vmem:[#allocation8 + $0xd8] sm:$0xff]
    %v1339 = vld [vmem:[#allocation8 + $0xe0] sm:$0xff]
    %v1340 = vld [vmem:[#allocation8 + $0xe8] sm:$0xff]
    %v1341 = vld [vmem:[#allocation8 + $0xf0] sm:$0xff]
    %v1342 = vld [vmem:[#allocation8 + $0xf8] sm:$0xff]
    %v1343 = vld [vmem:[#allocation8 + $0x100] sm:$0xff]
    %v1344 = vld [vmem:[#allocation8 + $0x108] sm:$0xff]
    %v1345 = vld [vmem:[#allocation8 + $0x110] sm:$0xff]
    %v1346 = vld [vmem:[#allocation8 + $0x118] sm:$0xff]
    %v1347 = vld [vmem:[#allocation8 + $0x120] sm:$0xff]
    %v1348 = vld [vmem:[#allocation8 + $0x128] sm:$0xff]
    %v1349 = vld [vmem:[#allocation8 + $0x130] sm:$0xff]
    %v1350 = vld [vmem:[#allocation8 + $0x138] sm:$0xff]
    %v1351 = vld [vmem:[#allocation8 + $0x140] sm:$0xff]
    %v1352 = vld [vmem:[#allocation8 + $0x148] sm:$0xff]
    %v1353 = vld [vmem:[#allocation8 + $0x150] sm:$0xff]
    %v1354 = vld [vmem:[#allocation8 + $0x158] sm:$0xff]
    %v1355 = vld [vmem:[#allocation8 + $0x160] sm:$0xff]
    %v1356 = vld [vmem:[#allocation8 + $0x168] sm:$0xff]
    %v1357 = vld [vmem:[#allocation8 + $0x170] sm:$0xff]
    %v1358 = vld [vmem:[#allocation8 + $0x178] sm:$0xff]
    %v1359 = vld [vmem:[#allocation8 + $0x180] sm:$0xff]
    %v1360 = vld [vmem:[#allocation8 + $0x188] sm:$0xff]
    %v1361 = vld [vmem:[#allocation8 + $0x190] sm:$0xff]
    %v1362 = vld [vmem:[#allocation8 + $0x198] sm:$0xff]
    %v1363 = vld [vmem:[#allocation8 + $0x1a0] sm:$0xff]
    %v1364 = vld [vmem:[#allocation8 + $0x1a8] sm:$0xff]
    %v1365 = vld [vmem:[#allocation8 + $0x1b0] sm:$0xff]
    %v1366 = vld [vmem:[#allocation8 + $0x1b8] sm:$0xff]
    %v1367 = vld [vmem:[#allocation8 + $0x1c0] sm:$0xff]
    %v1368 = vld [vmem:[#allocation8 + $0x1c8] sm:$0xff]
    %v1369 = vld [vmem:[#allocation8 + $0x1d0] sm:$0xff]
    %v1370 = vld [vmem:[#allocation8 + $0x1d8] sm:$0xff]
    %v1371 = vld [vmem:[#allocation8 + $0x1e0] sm:$0xff]
    %v1372 = vld [vmem:[#allocation8 + $0x1e8] sm:$0xff]
    %v1373 = vld [vmem:[#allocation8 + $0x1f0] sm:$0xff]
    %v1374 = vld [vmem:[#allocation8 + $0x1f8] sm:$0xff]
    %v1375 = vld [vmem:[#allocation8 + $0x200] sm:$0xff]
    %v1376 = vld [vmem:[#allocation8 + $0x208] sm:$0xff]
    %v1377 = vld [vmem:[#allocation8 + $0x210] sm:$0xff]
    %v1378 = vld [vmem:[#allocation8 + $0x218] sm:$0xff]
    %v1379 = vld [vmem:[#allocation8 + $0x220] sm:$0xff]
    %v1380 = vld [vmem:[#allocation8 + $0x228] sm:$0xff]
    %v1381 = vld [vmem:[#allocation8 + $0x230] sm:$0xff]
    %v1382 = vld [vmem:[#allocation8 + $0x238] sm:$0xff]
    %v1383 = vld [vmem:[#allocation8 + $0x240] sm:$0xff]
    %v1384 = vld [vmem:[#allocation8 + $0x248] sm:$0xff]
    %v1385 = vld [vmem:[#allocation8 + $0x250] sm:$0xff]
    %v1386 = vld [vmem:[#allocation8 + $0x258] sm:$0xff]
    %v1387 = vld [vmem:[#allocation8 + $0x260] sm:$0xff]
    %v1388 = vld [vmem:[#allocation8 + $0x268] sm:$0xff]
    %v1389 = vld [vmem:[#allocation8 + $0x270] sm:$0xff]
    %v1390 = vld [vmem:[#allocation8 + $0x278] sm:$0xff]
    %v1391 = vld [vmem:[#allocation8 + $0x280] sm:$0xff]
    %v1392 = vld [vmem:[#allocation8 + $0x288] sm:$0xff]
    %v1393 = vld [vmem:[#allocation8 + $0x290] sm:$0xff]
    %v1394 = vld [vmem:[#allocation8 + $0x298] sm:$0xff]
    %v1395 = vld [vmem:[#allocation8 + $0x2a0] sm:$0xff]
    %v1396 = vld [vmem:[#allocation8 + $0x2a8] sm:$0xff]
    %v1397 = vld [vmem:[#allocation8 + $0x2b0] sm:$0xff]
    %v1398 = vld [vmem:[#allocation8 + $0x2b8] sm:$0xff]
    %v1399 = vld [vmem:[#allocation8 + $0x2c0] sm:$0xff]
    %v1400 = vld [vmem:[#allocation8 + $0x2c8] sm:$0xff]
    %v1401 = vld [vmem:[#allocation8 + $0x2d0] sm:$0xff]
    %v1402 = vld [vmem:[#allocation8 + $0x2d8] sm:$0xff]
    %v1403 = vld [vmem:[#allocation8 + $0x2e0] sm:$0xff]
    %v1404 = vld [vmem:[#allocation8 + $0x2e8] sm:$0xff]
    %v1405 = vld [vmem:[#allocation8 + $0x2f0] sm:$0xff]
    %v1406 = vld [vmem:[#allocation8 + $0x2f8] sm:$0xff]
    %v1407 = vld [vmem:[#allocation8 + $0x300] sm:$0xff]
    %v1408 = vld [vmem:[#allocation8 + $0x308] sm:$0xff]
    %v1409 = vld [vmem:[#allocation8 + $0x310] sm:$0xff]
    %v1410 = vld [vmem:[#allocation8 + $0x318] sm:$0xff]
    %v1411 = vld [vmem:[#allocation8 + $0x320] sm:$0xff]
    %v1412 = vld [vmem:[#allocation8 + $0x328] sm:$0xff]
    %v1413 = vld [vmem:[#allocation8 + $0x330] sm:$0xff]
    %v1414 = vld [vmem:[#allocation8 + $0x338] sm:$0xff]
    %v1415 = vld [vmem:[#allocation8 + $0x340] sm:$0xff]
    %v1416 = vld [vmem:[#allocation8 + $0x348] sm:$0xff]
    %v1417 = vld [vmem:[#allocation8 + $0x350] sm:$0xff]
    %v1418 = vld [vmem:[#allocation8 + $0x358] sm:$0xff]
    %v1419 = vld [vmem:[#allocation8 + $0x360] sm:$0xff]
    %v1420 = vld [vmem:[#allocation8 + $0x368] sm:$0xff]
    %v1421 = vld [vmem:[#allocation8 + $0x370] sm:$0xff]
    %v1422 = vld [vmem:[#allocation8 + $0x378] sm:$0xff]
    %v1423 = vld [vmem:[#allocation8 + $0x380] sm:$0xff]
    %v1424 = vld [vmem:[#allocation8 + $0x388] sm:$0xff]
    %v1425 = vld [vmem:[#allocation8 + $0x390] sm:$0xff]
    %v1426 = vld [vmem:[#allocation8 + $0x398] sm:$0xff]
    %v1427 = vld [vmem:[#allocation8 + $0x3a0] sm:$0xff]
    %v1428 = vld [vmem:[#allocation8 + $0x3a8] sm:$0xff]
    %v1429 = vld [vmem:[#allocation8 + $0x3b0] sm:$0xff]
    %v1430 = vld [vmem:[#allocation8 + $0x3b8] sm:$0xff]
    %v1431 = vld [vmem:[#allocation8 + $0x3c0] sm:$0xff]
    %v1432 = vld [vmem:[#allocation8 + $0x3c8] sm:$0xff]
    %v1433 = vld [vmem:[#allocation8 + $0x3d0] sm:$0xff]
    %v1434 = vld [vmem:[#allocation8 + $0x3d8] sm:$0xff]
    %v1435 = vld [vmem:[#allocation8 + $0x3e0] sm:$0xff]
    %v1436 = vld [vmem:[#allocation8 + $0x3e8] sm:$0xff]
    %v1437 = vld [vmem:[#allocation8 + $0x3f0] sm:$0xff]
    %v1438 = vld [vmem:[#allocation8 + $0x3f8] sm:$0xff]
    %v1439 = vld [vmem:[#allocation8 + $0x400] sm:$0xff]
    %v1440 = vld [vmem:[#allocation8 + $0x408] sm:$0xff]
    %v1441 = vld [vmem:[#allocation8 + $0x410] sm:$0xff]
    %v1442 = vld [vmem:[#allocation8 + $0x418] sm:$0xff]
    %v1443 = vld [vmem:[#allocation8 + $0x420] sm:$0xff]
    %v1444 = vld [vmem:[#allocation8 + $0x428] sm:$0xff]
    %v1445 = vld [vmem:[#allocation8 + $0x430] sm:$0xff]
    %v1446 = vld [vmem:[#allocation8 + $0x438] sm:$0xff]
    %v1447 = vld [vmem:[#allocation8 + $0x440] sm:$0xff]
    %v1448 = vld [vmem:[#allocation8 + $0x448] sm:$0xff]
    %v1449 = vld [vmem:[#allocation8 + $0x450] sm:$0xff]
    %v1450 = vld [vmem:[#allocation8 + $0x458] sm:$0xff]
    %v1451 = vld [vmem:[#allocation8 + $0x460] sm:$0xff]
    %v1452 = vld [vmem:[#allocation8 + $0x468] sm:$0xff]
    %v1453 = vld [vmem:[#allocation8 + $0x470] sm:$0xff]
    %v1454 = vld [vmem:[#allocation8 + $0x478] sm:$0xff]
    %v1455 = vld [vmem:[#allocation8 + $0x480] sm:$0xff]
    %v1456 = vld [vmem:[#allocation8 + $0x488] sm:$0xff]
    %v1457 = vld [vmem:[#allocation8 + $0x490] sm:$0xff]
    %v1458 = vld [vmem:[#allocation8 + $0x498] sm:$0xff]
    %v1459 = vld [vmem:[#allocation8 + $0x4a0] sm:$0xff]
    %v1460 = vld [vmem:[#allocation8 + $0x4a8] sm:$0xff]
    %v1461 = vld [vmem:[#allocation8 + $0x4b0] sm:$0xff]
    %v1462 = vld [vmem:[#allocation8 + $0x4b8] sm:$0xff]
    %v1463 = vld [vmem:[#allocation8 + $0x4c0] sm:$0xff]
    %v1464 = vld [vmem:[#allocation8 + $0x4c8] sm:$0xff]
    %v1465 = vld [vmem:[#allocation8 + $0x4d0] sm:$0xff]
    %v1466 = vld [vmem:[#allocation8 + $0x4d8] sm:$0xff]
    %v1467 = vld [vmem:[#allocation8 + $0x4e0] sm:$0xff]
    %v1468 = vld [vmem:[#allocation8 + $0x4e8] sm:$0xff]
    %v1469 = vld [vmem:[#allocation8 + $0x4f0] sm:$0xff]
    %v1470 = vld [vmem:[#allocation8 + $0x4f8] sm:$0xff]
    %v1471 = vld [vmem:[#allocation8 + $0x500] sm:$0xff]
    %v1472 = vld [vmem:[#allocation8 + $0x508] sm:$0xff]
    %v1473 = vld [vmem:[#allocation8 + $0x510] sm:$0xff]
    %v1474 = vld [vmem:[#allocation8 + $0x518] sm:$0xff]
    %v1475 = vld [vmem:[#allocation8 + $0x520] sm:$0xff]
    %v1476 = vld [vmem:[#allocation8 + $0x528] sm:$0xff]
    %v1477 = vld [vmem:[#allocation8 + $0x530] sm:$0xff]
    %v1478 = vld [vmem:[#allocation8 + $0x538] sm:$0xff]
    %v1479 = vld [vmem:[#allocation8 + $0x540] sm:$0xff]
    %v1480 = vld [vmem:[#allocation8 + $0x548] sm:$0xff]
    %v1481 = vld [vmem:[#allocation8 + $0x550] sm:$0xff]
    %v1482 = vld [vmem:[#allocation8 + $0x558] sm:$0xff]
    %v1483 = vld [vmem:[#allocation8 + $0x560] sm:$0xff]
    %v1484 = vld [vmem:[#allocation8 + $0x568] sm:$0xff]
    %v1485 = vld [vmem:[#allocation8 + $0x570] sm:$0xff]
    %v1486 = vld [vmem:[#allocation8 + $0x578] sm:$0xff]
    %v1487 = vld [vmem:[#allocation8 + $0x580] sm:$0xff]
    %v1488 = vld [vmem:[#allocation8 + $0x588] sm:$0xff]
    %v1489 = vld [vmem:[#allocation8 + $0x590] sm:$0xff]
    %v1490 = vld [vmem:[#allocation8 + $0x598] sm:$0xff]
    %v1491 = vld [vmem:[#allocation8 + $0x5a0] sm:$0xff]
    %v1492 = vld [vmem:[#allocation8 + $0x5a8] sm:$0xff]
    %v1493 = vld [vmem:[#allocation8 + $0x5b0] sm:$0xff]
    %v1494 = vld [vmem:[#allocation8 + $0x5b8] sm:$0xff]
    %v1495 = vld [vmem:[#allocation8 + $0x5c0] sm:$0xff]
    %v1496 = vld [vmem:[#allocation8 + $0x5c8] sm:$0xff]
    %v1497 = vld [vmem:[#allocation8 + $0x5d0] sm:$0xff]
    %v1498 = vld [vmem:[#allocation8 + $0x5d8] sm:$0xff]
    %v1499 = vld [vmem:[#allocation8 + $0x5e0] sm:$0xff]
    %v1500 = vld [vmem:[#allocation8 + $0x5e8] sm:$0xff]
    %v1501 = vld [vmem:[#allocation8 + $0x5f0] sm:$0xff]
    %v1502 = vld [vmem:[#allocation8 + $0x5f8] sm:$0xff]
    %v1503 = vld [vmem:[#allocation8 + $0x600] sm:$0xff]
    %v1504 = vld [vmem:[#allocation8 + $0x608] sm:$0xff]
    %v1505 = vld [vmem:[#allocation8 + $0x610] sm:$0xff]
    %v1506 = vld [vmem:[#allocation8 + $0x618] sm:$0xff]
    %v1507 = vld [vmem:[#allocation8 + $0x620] sm:$0xff]
    %v1508 = vld [vmem:[#allocation8 + $0x628] sm:$0xff]
    %v1509 = vld [vmem:[#allocation8 + $0x630] sm:$0xff]
    %v1510 = vld [vmem:[#allocation8 + $0x638] sm:$0xff]
    %v1511 = vld [vmem:[#allocation8 + $0x640] sm:$0xff]
    %v1512 = vld [vmem:[#allocation8 + $0x648] sm:$0xff]
    %v1513 = vld [vmem:[#allocation8 + $0x650] sm:$0xff]
    %v1514 = vld [vmem:[#allocation8 + $0x658] sm:$0xff]
    %v1515 = vld [vmem:[#allocation8 + $0x660] sm:$0xff]
    %v1516 = vld [vmem:[#allocation8 + $0x668] sm:$0xff]
    %v1517 = vld [vmem:[#allocation8 + $0x670] sm:$0xff]
    %v1518 = vld [vmem:[#allocation8 + $0x678] sm:$0xff]
    %v1519 = vld [vmem:[#allocation8 + $0x680] sm:$0xff]
    %v1520 = vld [vmem:[#allocation8 + $0x688] sm:$0xff]
    %v1521 = vld [vmem:[#allocation8 + $0x690] sm:$0xff]
    %v1522 = vld [vmem:[#allocation8 + $0x698] sm:$0xff]
    %v1523 = vld [vmem:[#allocation8 + $0x6a0] sm:$0xff]
    %v1524 = vld [vmem:[#allocation8 + $0x6a8] sm:$0xff]
    %v1525 = vld [vmem:[#allocation8 + $0x6b0] sm:$0xff]
    %v1526 = vld [vmem:[#allocation8 + $0x6b8] sm:$0xff]
    %v1527 = vld [vmem:[#allocation8 + $0x6c0] sm:$0xff]
    %v1528 = vld [vmem:[#allocation8 + $0x6c8] sm:$0xff]
    %v1529 = vld [vmem:[#allocation8 + $0x6d0] sm:$0xff]
    %v1530 = vld [vmem:[#allocation8 + $0x6d8] sm:$0xff]
    %v1531 = vld [vmem:[#allocation8 + $0x6e0] sm:$0xff]
    %v1532 = vld [vmem:[#allocation8 + $0x6e8] sm:$0xff]
    %v1533 = vld [vmem:[#allocation8 + $0x6f0] sm:$0xff]
    %v1534 = vld [vmem:[#allocation8 + $0x6f8] sm:$0xff]
    %v1535 = vld [vmem:[#allocation8 + $0x700] sm:$0xff]
    %v1536 = vld [vmem:[#allocation8 + $0x708] sm:$0xff]
    %v1537 = vld [vmem:[#allocation8 + $0x710] sm:$0xff]
    %v1538 = vld [vmem:[#allocation8 + $0x718] sm:$0xff]
    %v1539 = vld [vmem:[#allocation8 + $0x720] sm:$0xff]
    %v1540 = vld [vmem:[#allocation8 + $0x728] sm:$0xff]
    %v1541 = vld [vmem:[#allocation8 + $0x730] sm:$0xff]
    %v1542 = vld [vmem:[#allocation8 + $0x738] sm:$0xff]
    %v1543 = vld [vmem:[#allocation8 + $0x740] sm:$0xff]
    %v1544 = vld [vmem:[#allocation8 + $0x748] sm:$0xff]
    %v1545 = vld [vmem:[#allocation8 + $0x750] sm:$0xff]
    %v1546 = vld [vmem:[#allocation8 + $0x758] sm:$0xff]
    %v1547 = vld [vmem:[#allocation8 + $0x760] sm:$0xff]
    %v1548 = vld [vmem:[#allocation8 + $0x768] sm:$0xff]
    %v1549 = vld [vmem:[#allocation8 + $0x770] sm:$0xff]
    %v1550 = vld [vmem:[#allocation8 + $0x778] sm:$0xff]
    %v1551 = vld [vmem:[#allocation8 + $0x780] sm:$0xff]
    %v1552 = vld [vmem:[#allocation8 + $0x788] sm:$0xff]
    %v1553 = vld [vmem:[#allocation8 + $0x790] sm:$0xff]
    %v1554 = vld [vmem:[#allocation8 + $0x798] sm:$0xff]
    %v1555 = vld [vmem:[#allocation8 + $0x7a0] sm:$0xff]
    %v1556 = vld [vmem:[#allocation8 + $0x7a8] sm:$0xff]
    %v1557 = vld [vmem:[#allocation8 + $0x7b0] sm:$0xff]
    %v1558 = vld [vmem:[#allocation8 + $0x7b8] sm:$0xff]
    %v1559 = vld [vmem:[#allocation8 + $0x7c0] sm:$0xff]
    %v1560 = vld [vmem:[#allocation8 + $0x7c8] sm:$0xff]
    %v1561 = vld [vmem:[#allocation8 + $0x7d0] sm:$0xff]
    %v1562 = vld [vmem:[#allocation8 + $0x7d8] sm:$0xff]
    %v1563 = vld [vmem:[#allocation8 + $0x7e0] sm:$0xff]
    %v1564 = vld [vmem:[#allocation8 + $0x7e8] sm:$0xff]
    %v1565 = vld [vmem:[#allocation8 + $0x7f0] sm:$0xff]
    %v1566 = vld [vmem:[#allocation8 + $0x7f8] sm:$0xff]
    %v1567 = vld [vmem:[#allocation8 + $0x800] sm:$0xff]
    %v1568 = vld [vmem:[#allocation8 + $0x808] sm:$0xff]
    %v1569 = vld [vmem:[#allocation8 + $0x810] sm:$0xff]
    %v1570 = vld [vmem:[#allocation8 + $0x818] sm:$0xff]
    %v1571 = vld [vmem:[#allocation8 + $0x820] sm:$0xff]
    %v1572 = vld [vmem:[#allocation8 + $0x828] sm:$0xff]
    %v1573 = vld [vmem:[#allocation8 + $0x830] sm:$0xff]
    %v1574 = vld [vmem:[#allocation8 + $0x838] sm:$0xff]
    %v1575 = vld [vmem:[#allocation8 + $0x840] sm:$0xff]
    %v1576 = vld [vmem:[#allocation8 + $0x848] sm:$0xff]
    %v1577 = vld [vmem:[#allocation8 + $0x850] sm:$0xff]
    %v1578 = vld [vmem:[#allocation8 + $0x858] sm:$0xff]
    %v1579 = vld [vmem:[#allocation8 + $0x860] sm:$0xff]
    %v1580 = vld [vmem:[#allocation8 + $0x868] sm:$0xff]
    %v1581 = vld [vmem:[#allocation8 + $0x870] sm:$0xff]
    %v1582 = vld [vmem:[#allocation8 + $0x878] sm:$0xff]
    %v1583 = vld [vmem:[#allocation8 + $0x880] sm:$0xff]
    %v1584 = vld [vmem:[#allocation8 + $0x888] sm:$0xff]
    %v1585 = vld [vmem:[#allocation8 + $0x890] sm:$0xff]
    %v1586 = vld [vmem:[#allocation8 + $0x898] sm:$0xff]
    %v1587 = vld [vmem:[#allocation8 + $0x8a0] sm:$0xff]
    %v1588 = vld [vmem:[#allocation8 + $0x8a8] sm:$0xff]
    %v1589 = vld [vmem:[#allocation8 + $0x8b0] sm:$0xff]
    %v1590 = vld [vmem:[#allocation8 + $0x8b8] sm:$0xff]
    %v1591 = vld [vmem:[#allocation8 + $0x8c0] sm:$0xff]
    %v1592 = vld [vmem:[#allocation8 + $0x8c8] sm:$0xff]
    %v1593 = vld [vmem:[#allocation8 + $0x8d0] sm:$0xff]
    %v1594 = vld [vmem:[#allocation8 + $0x8d8] sm:$0xff]
    %v1595 = vld [vmem:[#allocation8 + $0x8e0] sm:$0xff]
    %v1596 = vld [vmem:[#allocation8 + $0x8e8] sm:$0xff]
    %v1597 = vld [vmem:[#allocation8 + $0x8f0] sm:$0xff]
    %v1598 = vld [vmem:[#allocation8 + $0x8f8] sm:$0xff]
    %v1599 = vld [vmem:[#allocation8 + $0x900] sm:$0xff]
    %v1600 = vld [vmem:[#allocation8 + $0x908] sm:$0xff]
    %v1601 = vld [vmem:[#allocation8 + $0x910] sm:$0xff]
    %v1602 = vld [vmem:[#allocation8 + $0x918] sm:$0xff]
    %v1603 = vld [vmem:[#allocation8 + $0x920] sm:$0xff]
    %v1604 = vld [vmem:[#allocation8 + $0x928] sm:$0xff]
    %v1605 = vld [vmem:[#allocation8 + $0x930] sm:$0xff]
    %v1606 = vld [vmem:[#allocation8 + $0x938] sm:$0xff]
    %v1607 = vld [vmem:[#allocation8 + $0x940] sm:$0xff]
    %v1608 = vld [vmem:[#allocation8 + $0x948] sm:$0xff]
    %v1609 = vld [vmem:[#allocation8 + $0x950] sm:$0xff]
    %v1610 = vld [vmem:[#allocation8 + $0x958] sm:$0xff]
    %v1611 = vld [vmem:[#allocation8 + $0x960] sm:$0xff]
    %v1612 = vld [vmem:[#allocation8 + $0x968] sm:$0xff]
    %v1613 = vld [vmem:[#allocation8 + $0x970] sm:$0xff]
    %v1614 = vld [vmem:[#allocation8 + $0x978] sm:$0xff]
    %v1615 = vld [vmem:[#allocation8 + $0x980] sm:$0xff]
    %v1616 = vld [vmem:[#allocation8 + $0x988] sm:$0xff]
    %v1617 = vld [vmem:[#allocation8 + $0x990] sm:$0xff]
    %v1618 = vld [vmem:[#allocation8 + $0x998] sm:$0xff]
    %v1619 = vld [vmem:[#allocation8 + $0x9a0] sm:$0xff]
    %v1620 = vld [vmem:[#allocation8 + $0x9a8] sm:$0xff]
    %v1621 = vld [vmem:[#allocation8 + $0x9b0] sm:$0xff]
    %v1622 = vld [vmem:[#allocation8 + $0x9b8] sm:$0xff]
    %v1623 = vld [vmem:[#allocation8 + $0x9c0] sm:$0xff]
    %v1624 = vld [vmem:[#allocation8 + $0x9c8] sm:$0xff]
    %v1625 = vld [vmem:[#allocation8 + $0x9d0] sm:$0xff]
    %v1626 = vld [vmem:[#allocation8 + $0x9d8] sm:$0xff]
    %v1627 = vld [vmem:[#allocation8 + $0x9e0] sm:$0xff]
    %v1628 = vld [vmem:[#allocation8 + $0x9e8] sm:$0xff]
    %v1629 = vld [vmem:[#allocation8 + $0x9f0] sm:$0xff]
    %v1630 = vld [vmem:[#allocation8 + $0x9f8] sm:$0xff]
    %v1631 = vld [vmem:[#allocation8 + $0xa00] sm:$0xff]
    %v1632 = vld [vmem:[#allocation8 + $0xa08] sm:$0xff]
    %v1633 = vld [vmem:[#allocation8 + $0xa10] sm:$0xff]
    %v1634 = vld [vmem:[#allocation8 + $0xa18] sm:$0xff]
    %v1635 = vld [vmem:[#allocation8 + $0xa20] sm:$0xff]
    %v1636 = vld [vmem:[#allocation8 + $0xa28] sm:$0xff]
    %v1637 = vld [vmem:[#allocation8 + $0xa30] sm:$0xff]
    %v1638 = vld [vmem:[#allocation8 + $0xa38] sm:$0xff]
    %v1639 = vld [vmem:[#allocation8 + $0xa40] sm:$0xff]
    %v1640 = vld [vmem:[#allocation8 + $0xa48] sm:$0xff]
    %v1641 = vld [vmem:[#allocation8 + $0xa50] sm:$0xff]
    %v1642 = vld [vmem:[#allocation8 + $0xa58] sm:$0xff]
    %v1643 = vld [vmem:[#allocation8 + $0xa60] sm:$0xff]
    %v1644 = vld [vmem:[#allocation8 + $0xa68] sm:$0xff]
    %v1645 = vld [vmem:[#allocation8 + $0xa70] sm:$0xff]
    %v1646 = vld [vmem:[#allocation8 + $0xa78] sm:$0xff]
    %v1647 = vld [vmem:[#allocation8 + $0xa80] sm:$0xff]
    %v1648 = vld [vmem:[#allocation8 + $0xa88] sm:$0xff]
    %v1649 = vld [vmem:[#allocation8 + $0xa90] sm:$0xff]
    %v1650 = vld [vmem:[#allocation8 + $0xa98] sm:$0xff]
    %v1651 = vld [vmem:[#allocation8 + $0xaa0] sm:$0xff]
    %v1652 = vld [vmem:[#allocation8 + $0xaa8] sm:$0xff]
    %v1653 = vld [vmem:[#allocation8 + $0xab0] sm:$0xff]
    %v1654 = vld [vmem:[#allocation8 + $0xab8] sm:$0xff]
    %v1655 = vld [vmem:[#allocation8 + $0xac0] sm:$0xff]
    %v1656 = vld [vmem:[#allocation8 + $0xac8] sm:$0xff]
    %v1657 = vld [vmem:[#allocation8 + $0xad0] sm:$0xff]
    %v1658 = vld [vmem:[#allocation8 + $0xad8] sm:$0xff]
    %v1659 = vld [vmem:[#allocation8 + $0xae0] sm:$0xff]
    %v1660 = vld [vmem:[#allocation8 + $0xae8] sm:$0xff]
    %v1661 = vld [vmem:[#allocation8 + $0xaf0] sm:$0xff]
    %v1662 = vld [vmem:[#allocation8 + $0xaf8] sm:$0xff]
    %v1663 = vld [vmem:[#allocation8 + $0xb00] sm:$0xff]
    %v1664 = vld [vmem:[#allocation8 + $0xb08] sm:$0xff]
    %v1665 = vld [vmem:[#allocation8 + $0xb10] sm:$0xff]
    %v1666 = vld [vmem:[#allocation8 + $0xb18] sm:$0xff]
    %v1667 = vld [vmem:[#allocation8 + $0xb20] sm:$0xff]
    %v1668 = vld [vmem:[#allocation8 + $0xb28] sm:$0xff]
    %v1669 = vld [vmem:[#allocation8 + $0xb30] sm:$0xff]
    %v1670 = vld [vmem:[#allocation8 + $0xb38] sm:$0xff]
    %v1671 = vld [vmem:[#allocation8 + $0xb40] sm:$0xff]
    %v1672 = vld [vmem:[#allocation8 + $0xb48] sm:$0xff]
    %v1673 = vld [vmem:[#allocation8 + $0xb50] sm:$0xff]
    %v1674 = vld [vmem:[#allocation8 + $0xb58] sm:$0xff]
    %v1675 = vld [vmem:[#allocation8 + $0xb60] sm:$0xff]
    %v1676 = vld [vmem:[#allocation8 + $0xb68] sm:$0xff]
    %v1677 = vld [vmem:[#allocation8 + $0xb70] sm:$0xff]
    %v1678 = vld [vmem:[#allocation8 + $0xb78] sm:$0xff]
    %v1679 = vld [vmem:[#allocation8 + $0xb80] sm:$0xff]
    %v1680 = vld [vmem:[#allocation8 + $0xb88] sm:$0xff]
    %v1681 = vld [vmem:[#allocation8 + $0xb90] sm:$0xff]
    %v1682 = vld [vmem:[#allocation8 + $0xb98] sm:$0xff]
    %v1683 = vld [vmem:[#allocation8 + $0xba0] sm:$0xff]
    %v1684 = vld [vmem:[#allocation8 + $0xba8] sm:$0xff]
    %v1685 = vld [vmem:[#allocation8 + $0xbb0] sm:$0xff]
    %v1686 = vld [vmem:[#allocation8 + $0xbb8] sm:$0xff]
    %v1687 = vld [vmem:[#allocation8 + $0xbc0] sm:$0xff]
    %v1688 = vld [vmem:[#allocation8 + $0xbc8] sm:$0xff]
    %v1689 = vld [vmem:[#allocation8 + $0xbd0] sm:$0xff]
    %v1690 = vld [vmem:[#allocation8 + $0xbd8] sm:$0xff]
    %v1691 = vld [vmem:[#allocation8 + $0xbe0] sm:$0xff]
    %v1692 = vld [vmem:[#allocation8 + $0xbe8] sm:$0xff]
    %v1693 = vld [vmem:[#allocation8 + $0xbf0] sm:$0xff]
    %v1694 = vld [vmem:[#allocation8 + $0xbf8] sm:$0xff]
    %v1695 = vld [vmem:[#allocation8 + $0xc00] sm:$0xff]
    %v1696 = vld [vmem:[#allocation8 + $0xc08] sm:$0xff]
    %v1697 = vld [vmem:[#allocation8 + $0xc10] sm:$0xff]
    %v1698 = vld [vmem:[#allocation8 + $0xc18] sm:$0xff]
    %v1699 = vld [vmem:[#allocation8 + $0xc20] sm:$0xff]
    %v1700 = vld [vmem:[#allocation8 + $0xc28] sm:$0xff]
    %v1701 = vld [vmem:[#allocation8 + $0xc30] sm:$0xff]
    %v1702 = vld [vmem:[#allocation8 + $0xc38] sm:$0xff]
    %v1703 = vld [vmem:[#allocation8 + $0xc40] sm:$0xff]
    %v1704 = vld [vmem:[#allocation8 + $0xc48] sm:$0xff]
    %v1705 = vld [vmem:[#allocation8 + $0xc50] sm:$0xff]
    %v1706 = vld [vmem:[#allocation8 + $0xc58] sm:$0xff]
    %v1707 = vld [vmem:[#allocation8 + $0xc60] sm:$0xff]
    %v1708 = vld [vmem:[#allocation8 + $0xc68] sm:$0xff]
    %v1709 = vld [vmem:[#allocation8 + $0xc70] sm:$0xff]
    %v1710 = vld [vmem:[#allocation8 + $0xc78] sm:$0xff]
    %v1711 = vld [vmem:[#allocation8 + $0xc80] sm:$0xff]
    %v1712 = vld [vmem:[#allocation8 + $0xc88] sm:$0xff]
    %v1713 = vld [vmem:[#allocation8 + $0xc90] sm:$0xff]
    %v1714 = vld [vmem:[#allocation8 + $0xc98] sm:$0xff]
    %v1715 = vld [vmem:[#allocation8 + $0xca0] sm:$0xff]
    %v1716 = vld [vmem:[#allocation8 + $0xca8] sm:$0xff]
    %v1717 = vld [vmem:[#allocation8 + $0xcb0] sm:$0xff]
    %v1718 = vld [vmem:[#allocation8 + $0xcb8] sm:$0xff]
    %v1719 = vld [vmem:[#allocation8 + $0xcc0] sm:$0xff]
    %v1720 = vld [vmem:[#allocation8 + $0xcc8] sm:$0xff]
    %v1721 = vld [vmem:[#allocation8 + $0xcd0] sm:$0xff]
    %v1722 = vld [vmem:[#allocation8 + $0xcd8] sm:$0xff]
    %v1723 = vld [vmem:[#allocation8 + $0xce0] sm:$0xff]
    %v1724 = vld [vmem:[#allocation8 + $0xce8] sm:$0xff]
    %v1725 = vld [vmem:[#allocation8 + $0xcf0] sm:$0xff]
    %v1726 = vld [vmem:[#allocation8 + $0xcf8] sm:$0xff]
    %v1727 = vld [vmem:[#allocation8 + $0xd00] sm:$0xff]
    %v1728 = vld [vmem:[#allocation8 + $0xd08] sm:$0xff]
    %v1729 = vld [vmem:[#allocation8 + $0xd10] sm:$0xff]
    %v1730 = vld [vmem:[#allocation8 + $0xd18] sm:$0xff]
    %v1731 = vld [vmem:[#allocation8 + $0xd20] sm:$0xff]
    %v1732 = vld [vmem:[#allocation8 + $0xd28] sm:$0xff]
    %v1733 = vld [vmem:[#allocation8 + $0xd30] sm:$0xff]
    %v1734 = vld [vmem:[#allocation8 + $0xd38] sm:$0xff]
    %v1735 = vld [vmem:[#allocation8 + $0xd40] sm:$0xff]
    %v1736 = vld [vmem:[#allocation8 + $0xd48] sm:$0xff]
    %v1737 = vld [vmem:[#allocation8 + $0xd50] sm:$0xff]
    %v1738 = vld [vmem:[#allocation8 + $0xd58] sm:$0xff]
    %v1739 = vld [vmem:[#allocation8 + $0xd60] sm:$0xff]
    %v1740 = vld [vmem:[#allocation8 + $0xd68] sm:$0xff]
    %v1741 = vld [vmem:[#allocation8 + $0xd70] sm:$0xff]
    %v1742 = vld [vmem:[#allocation8 + $0xd78] sm:$0xff]
    %v1743 = vld [vmem:[#allocation8 + $0xd80] sm:$0xff]
    %v1744 = vld [vmem:[#allocation8 + $0xd88] sm:$0xff]
    %v1745 = vld [vmem:[#allocation8 + $0xd90] sm:$0xff]
    %v1746 = vld [vmem:[#allocation8 + $0xd98] sm:$0xff]
    %v1747 = vld [vmem:[#allocation8 + $0xda0] sm:$0xff]
    %v1748 = vld [vmem:[#allocation8 + $0xda8] sm:$0xff]
    %v1749 = vld [vmem:[#allocation8 + $0xdb0] sm:$0xff]
    %v1750 = vld [vmem:[#allocation8 + $0xdb8] sm:$0xff]
    %v1751 = vld [vmem:[#allocation8 + $0xdc0] sm:$0xff]
    %v1752 = vld [vmem:[#allocation8 + $0xdc8] sm:$0xff]
    %v1753 = vld [vmem:[#allocation8 + $0xdd0] sm:$0xff]
    %v1754 = vld [vmem:[#allocation8 + $0xdd8] sm:$0xff]
    %v1755 = vld [vmem:[#allocation8 + $0xde0] sm:$0xff]
    %v1756 = vld [vmem:[#allocation8 + $0xde8] sm:$0xff]
    %v1757 = vld [vmem:[#allocation8 + $0xdf0] sm:$0xff]
    %v1758 = vld [vmem:[#allocation8 + $0xdf8] sm:$0xff]
    %v1759 = vld [vmem:[#allocation8 + $0xe00] sm:$0xff]
    %v1760 = vld [vmem:[#allocation8 + $0xe08] sm:$0xff]
    %v1761 = vld [vmem:[#allocation8 + $0xe10] sm:$0xff]
    %v1762 = vld [vmem:[#allocation8 + $0xe18] sm:$0xff]
    %v1763 = vld [vmem:[#allocation8 + $0xe20] sm:$0xff]
    %v1764 = vld [vmem:[#allocation8 + $0xe28] sm:$0xff]
    %v1765 = vld [vmem:[#allocation8 + $0xe30] sm:$0xff]
    %v1766 = vld [vmem:[#allocation8 + $0xe38] sm:$0xff]
    %v1767 = vld [vmem:[#allocation8 + $0xe40] sm:$0xff]
    %v1768 = vld [vmem:[#allocation8 + $0xe48] sm:$0xff]
    %v1769 = vld [vmem:[#allocation8 + $0xe50] sm:$0xff]
    %v1770 = vld [vmem:[#allocation8 + $0xe58] sm:$0xff]
    %v1771 = vld [vmem:[#allocation8 + $0xe60] sm:$0xff]
    %v1772 = vld [vmem:[#allocation8 + $0xe68] sm:$0xff]
    %v1773 = vld [vmem:[#allocation8 + $0xe70] sm:$0xff]
    %v1774 = vld [vmem:[#allocation8 + $0xe78] sm:$0xff]
    %v1775 = vld [vmem:[#allocation8 + $0xe80] sm:$0xff]
    %v1776 = vld [vmem:[#allocation8 + $0xe88] sm:$0xff]
    %v1777 = vld [vmem:[#allocation8 + $0xe90] sm:$0xff]
    %v1778 = vld [vmem:[#allocation8 + $0xe98] sm:$0xff]
    %v1779 = vld [vmem:[#allocation8 + $0xea0] sm:$0xff]
    %v1780 = vld [vmem:[#allocation8 + $0xea8] sm:$0xff]
    %v1781 = vld [vmem:[#allocation8 + $0xeb0] sm:$0xff]
    %v1782 = vld [vmem:[#allocation8 + $0xeb8] sm:$0xff]
    %v1783 = vld [vmem:[#allocation8 + $0xec0] sm:$0xff]
    %v1784 = vld [vmem:[#allocation8 + $0xec8] sm:$0xff]
    %v1785 = vld [vmem:[#allocation8 + $0xed0] sm:$0xff]
    %v1786 = vld [vmem:[#allocation8 + $0xed8] sm:$0xff]
    %v1787 = vld [vmem:[#allocation8 + $0xee0] sm:$0xff]
    %v1788 = vld [vmem:[#allocation8 + $0xee8] sm:$0xff]
    %v1789 = vld [vmem:[#allocation8 + $0xef0] sm:$0xff]
    %v1790 = vld [vmem:[#allocation8 + $0xef8] sm:$0xff]
    %v1791 = vld [vmem:[#allocation8 + $0xf00] sm:$0xff]
    %v1792 = vld [vmem:[#allocation8 + $0xf08] sm:$0xff]
    %v1793 = vld [vmem:[#allocation8 + $0xf10] sm:$0xff]
    %v1794 = vld [vmem:[#allocation8 + $0xf18] sm:$0xff]
    %v1795 = vld [vmem:[#allocation8 + $0xf20] sm:$0xff]
    %v1796 = vld [vmem:[#allocation8 + $0xf28] sm:$0xff]
    %v1797 = vld [vmem:[#allocation8 + $0xf30] sm:$0xff]
    %v1798 = vld [vmem:[#allocation8 + $0xf38] sm:$0xff]
    %v1799 = vld [vmem:[#allocation8 + $0xf40] sm:$0xff]
    %v1800 = vld [vmem:[#allocation8 + $0xf48] sm:$0xff]
    %v1801 = vld [vmem:[#allocation8 + $0xf50] sm:$0xff]
    %v1802 = vld [vmem:[#allocation8 + $0xf58] sm:$0xff]
    %v1803 = vld [vmem:[#allocation8 + $0xf60] sm:$0xff]
    %v1804 = vld [vmem:[#allocation8 + $0xf68] sm:$0xff]
    %v1805 = vld [vmem:[#allocation8 + $0xf70] sm:$0xff]
    %v1806 = vld [vmem:[#allocation8 + $0xf78] sm:$0xff]
    %v1807 = vld [vmem:[#allocation8 + $0xf80] sm:$0xff]
    %v1808 = vld [vmem:[#allocation8 + $0xf88] sm:$0xff]
    %v1809 = vld [vmem:[#allocation8 + $0xf90] sm:$0xff]
    %v1810 = vld [vmem:[#allocation8 + $0xf98] sm:$0xff]
    %v1811 = vld [vmem:[#allocation8 + $0xfa0] sm:$0xff]
    %v1812 = vld [vmem:[#allocation8 + $0xfa8] sm:$0xff]
    %v1813 = vld [vmem:[#allocation8 + $0xfb0] sm:$0xff]
    %v1814 = vld [vmem:[#allocation8 + $0xfb8] sm:$0xff]
    %v1815 = vld [vmem:[#allocation8 + $0xfc0] sm:$0xff]
    %v1816 = vld [vmem:[#allocation8 + $0xfc8] sm:$0xff]
    %v1817 = vld [vmem:[#allocation8 + $0xfd0] sm:$0xff]
    %v1818 = vld [vmem:[#allocation8 + $0xfd8] sm:$0xff]
    %v1819 = vld [vmem:[#allocation8 + $0xfe0] sm:$0xff]
    %v1820 = vld [vmem:[#allocation8 + $0xfe8] sm:$0xff]
    %v1821 = vld [vmem:[#allocation8 + $0xff0] sm:$0xff]
    %v1822 = vld [vmem:[#allocation8 + $0xff8] sm:$0xff]
    %v1823 = vld [vmem:[#allocation5 + $0x40] sm:$0xff]
    %v1824 = vld [vmem:[#allocation5 + $0x48] sm:$0xff]
    %v1825 = vld [vmem:[#allocation5 + $0x50] sm:$0xff]
    %v1826 = vld [vmem:[#allocation5 + $0x58] sm:$0xff]
    %v1827 = vld [vmem:[#allocation5 + $0x60] sm:$0xff]
    %v1828 = vld [vmem:[#allocation5 + $0x68] sm:$0xff]
    %v1829 = vld [vmem:[#allocation5 + $0x70] sm:$0xff]
    %v1830 = vld [vmem:[#allocation5 + $0x78] sm:$0xff]
    %v1831 = vld [vmem:[#allocation5 + $0xc0] sm:$0xff]
    %v1832 = vld [vmem:[#allocation5 + $0xc8] sm:$0xff]
    %v1833 = vld [vmem:[#allocation5 + $0xd0] sm:$0xff]
    %v1834 = vld [vmem:[#allocation5 + $0xd8] sm:$0xff]
    %v1835 = vld [vmem:[#allocation5 + $0xe0] sm:$0xff]
    %v1836 = vld [vmem:[#allocation5 + $0xe8] sm:$0xff]
    %v1837 = vld [vmem:[#allocation5 + $0xf0] sm:$0xff]
    %v1838 = vld [vmem:[#allocation5 + $0xf8] sm:$0xff]
    %v1839 = vld [vmem:[#allocation5 + $0x140] sm:$0xff]
    %v1840 = vld [vmem:[#allocation5 + $0x148] sm:$0xff]
    %v1841 = vld [vmem:[#allocation5 + $0x150] sm:$0xff]
    %v1842 = vld [vmem:[#allocation5 + $0x158] sm:$0xff]
    %v1843 = vld [vmem:[#allocation5 + $0x160] sm:$0xff]
    %v1844 = vld [vmem:[#allocation5 + $0x168] sm:$0xff]
    %v1845 = vld [vmem:[#allocation5 + $0x170] sm:$0xff]
    %v1846 = vld [vmem:[#allocation5 + $0x178] sm:$0xff]
    %v1847 = vld [vmem:[#allocation5 + $0x1c0] sm:$0xff]
    %v1848 = vld [vmem:[#allocation5 + $0x1c8] sm:$0xff]
    %v1849 = vld [vmem:[#allocation5 + $0x1d0] sm:$0xff]
    %v1850 = vld [vmem:[#allocation5 + $0x1d8] sm:$0xff]
    %v1851 = vld [vmem:[#allocation5 + $0x1e0] sm:$0xff]
    %v1852 = vld [vmem:[#allocation5 + $0x1e8] sm:$0xff]
    %v1853 = vld [vmem:[#allocation5 + $0x1f0] sm:$0xff]
    %v1854 = vld [vmem:[#allocation5 + $0x1f8] sm:$0xff]
    %v1855 = vld [vmem:[#allocation5 + $0x240] sm:$0xff]
    %v1856 = vld [vmem:[#allocation5 + $0x248] sm:$0xff]
    %v1857 = vld [vmem:[#allocation5 + $0x250] sm:$0xff]
    %v1858 = vld [vmem:[#allocation5 + $0x258] sm:$0xff]
    %v1859 = vld [vmem:[#allocation5 + $0x260] sm:$0xff]
    %v1860 = vld [vmem:[#allocation5 + $0x268] sm:$0xff]
    %v1861 = vld [vmem:[#allocation5 + $0x270] sm:$0xff]
    %v1862 = vld [vmem:[#allocation5 + $0x278] sm:$0xff]
    %v1863 = vld [vmem:[#allocation5 + $0x2c0] sm:$0xff]
    %v1864 = vld [vmem:[#allocation5 + $0x2c8] sm:$0xff]
    %v1865 = vld [vmem:[#allocation5 + $0x2d0] sm:$0xff]
    %v1866 = vld [vmem:[#allocation5 + $0x2d8] sm:$0xff]
    %v1867 = vld [vmem:[#allocation5 + $0x2e0] sm:$0xff]
    %v1868 = vld [vmem:[#allocation5 + $0x2e8] sm:$0xff]
    %v1869 = vld [vmem:[#allocation5 + $0x2f0] sm:$0xff]
    %v1870 = vld [vmem:[#allocation5 + $0x2f8] sm:$0xff]
    %v1871 = vld [vmem:[#allocation5 + $0x340] sm:$0xff]
    %v1872 = vld [vmem:[#allocation5 + $0x348] sm:$0xff]
    %v1873 = vld [vmem:[#allocation5 + $0x350] sm:$0xff]
    %v1874 = vld [vmem:[#allocation5 + $0x358] sm:$0xff]
    %v1875 = vld [vmem:[#allocation5 + $0x360] sm:$0xff]
    %v1876 = vld [vmem:[#allocation5 + $0x368] sm:$0xff]
    %v1877 = vld [vmem:[#allocation5 + $0x370] sm:$0xff]
    %v1878 = vld [vmem:[#allocation5 + $0x378] sm:$0xff]
    %v1879 = vld [vmem:[#allocation5 + $0x3c0] sm:$0xff]
    %v1880 = vld [vmem:[#allocation5 + $0x3c8] sm:$0xff]
    %v1881 = vld [vmem:[#allocation5 + $0x3d0] sm:$0xff]
    %v1882 = vld [vmem:[#allocation5 + $0x3d8] sm:$0xff]
    %v1883 = vld [vmem:[#allocation5 + $0x3e0] sm:$0xff]
    %v1884 = vld [vmem:[#allocation5 + $0x3e8] sm:$0xff]
    %v1885 = vld [vmem:[#allocation5 + $0x3f0] sm:$0xff]
    %v1886 = vld [vmem:[#allocation5 + $0x3f8] sm:$0xff]
    %v1887 = vld [vmem:[#allocation5 + $0x440] sm:$0xff]
    %v1888 = vld [vmem:[#allocation5 + $0x448] sm:$0xff]
    %v1889 = vld [vmem:[#allocation5 + $0x450] sm:$0xff]
    %v1890 = vld [vmem:[#allocation5 + $0x458] sm:$0xff]
    %v1891 = vld [vmem:[#allocation5 + $0x460] sm:$0xff]
    %v1892 = vld [vmem:[#allocation5 + $0x468] sm:$0xff]
    %v1893 = vld [vmem:[#allocation5 + $0x470] sm:$0xff]
    %v1894 = vld [vmem:[#allocation5 + $0x478] sm:$0xff]
    %v1895 = vld [vmem:[#allocation5 + $0x4c0] sm:$0xff]
    %v1896 = vld [vmem:[#allocation5 + $0x4c8] sm:$0xff]
    %v1897 = vld [vmem:[#allocation5 + $0x4d0] sm:$0xff]
    %v1898 = vld [vmem:[#allocation5 + $0x4d8] sm:$0xff]
    %v1899 = vld [vmem:[#allocation5 + $0x4e0] sm:$0xff]
    %v1900 = vld [vmem:[#allocation5 + $0x4e8] sm:$0xff]
    %v1901 = vld [vmem:[#allocation5 + $0x4f0] sm:$0xff]
    %v1902 = vld [vmem:[#allocation5 + $0x4f8] sm:$0xff]
    %v1903 = vld [vmem:[#allocation5 + $0x540] sm:$0xff]
    %v1904 = vld [vmem:[#allocation5 + $0x548] sm:$0xff]
    %v1905 = vld [vmem:[#allocation5 + $0x550] sm:$0xff]
    %v1906 = vld [vmem:[#allocation5 + $0x558] sm:$0xff]
    %v1907 = vld [vmem:[#allocation5 + $0x560] sm:$0xff]
    %v1908 = vld [vmem:[#allocation5 + $0x568] sm:$0xff]
    %v1909 = vld [vmem:[#allocation5 + $0x570] sm:$0xff]
    %v1910 = vld [vmem:[#allocation5 + $0x578] sm:$0xff]
    %v1911 = vld [vmem:[#allocation5 + $0x5c0] sm:$0xff]
    %v1912 = vld [vmem:[#allocation5 + $0x5c8] sm:$0xff]
    %v1913 = vld [vmem:[#allocation5 + $0x5d0] sm:$0xff]
    %v1914 = vld [vmem:[#allocation5 + $0x5d8] sm:$0xff]
    %v1915 = vld [vmem:[#allocation5 + $0x5e0] sm:$0xff]
    %v1916 = vld [vmem:[#allocation5 + $0x5e8] sm:$0xff]
    %v1917 = vld [vmem:[#allocation5 + $0x5f0] sm:$0xff]
    %v1918 = vld [vmem:[#allocation5 + $0x5f8] sm:$0xff]
    %v1919 = vld [vmem:[#allocation5 + $0x640] sm:$0xff]
    %v1920 = vld [vmem:[#allocation5 + $0x648] sm:$0xff]
    %v1921 = vld [vmem:[#allocation5 + $0x650] sm:$0xff]
    %v1922 = vld [vmem:[#allocation5 + $0x658] sm:$0xff]
    %v1923 = vld [vmem:[#allocation5 + $0x660] sm:$0xff]
    %v1924 = vld [vmem:[#allocation5 + $0x668] sm:$0xff]
    %v1925 = vld [vmem:[#allocation5 + $0x670] sm:$0xff]
    %v1926 = vld [vmem:[#allocation5 + $0x678] sm:$0xff]
    %v1927 = vld [vmem:[#allocation5 + $0x6c0] sm:$0xff]
    %v1928 = vld [vmem:[#allocation5 + $0x6c8] sm:$0xff]
    %v1929 = vld [vmem:[#allocation5 + $0x6d0] sm:$0xff]
    %v1930 = vld [vmem:[#allocation5 + $0x6d8] sm:$0xff]
    %v1931 = vld [vmem:[#allocation5 + $0x6e0] sm:$0xff]
    %v1932 = vld [vmem:[#allocation5 + $0x6e8] sm:$0xff]
    %v1933 = vld [vmem:[#allocation5 + $0x6f0] sm:$0xff]
    %v1934 = vld [vmem:[#allocation5 + $0x6f8] sm:$0xff]
    %v1935 = vld [vmem:[#allocation5 + $0x740] sm:$0xff]
    %v1936 = vld [vmem:[#allocation5 + $0x748] sm:$0xff]
    %v1937 = vld [vmem:[#allocation5 + $0x750] sm:$0xff]
    %v1938 = vld [vmem:[#allocation5 + $0x758] sm:$0xff]
    %v1939 = vld [vmem:[#allocation5 + $0x760] sm:$0xff]
    %v1940 = vld [vmem:[#allocation5 + $0x768] sm:$0xff]
    %v1941 = vld [vmem:[#allocation5 + $0x770] sm:$0xff]
    %v1942 = vld [vmem:[#allocation5 + $0x778] sm:$0xff]
    %v1943 = vld [vmem:[#allocation5 + $0x7c0] sm:$0xff]
    %v1944 = vld [vmem:[#allocation5 + $0x7c8] sm:$0xff]
    %v1945 = vld [vmem:[#allocation5 + $0x7d0] sm:$0xff]
    %v1946 = vld [vmem:[#allocation5 + $0x7d8] sm:$0xff]
    %v1947 = vld [vmem:[#allocation5 + $0x7e0] sm:$0xff]
    %v1948 = vld [vmem:[#allocation5 + $0x7e8] sm:$0xff]
    %v1949 = vld [vmem:[#allocation5 + $0x7f0] sm:$0xff]
    %v1950 = vld [vmem:[#allocation5 + $0x7f8] sm:$0xff]
    %v1951 = vld [vmem:[#allocation5 + $0x840] sm:$0xff]
    %v1952 = vld [vmem:[#allocation5 + $0x848] sm:$0xff]
    %v1953 = vld [vmem:[#allocation5 + $0x850] sm:$0xff]
    %v1954 = vld [vmem:[#allocation5 + $0x858] sm:$0xff]
    %v1955 = vld [vmem:[#allocation5 + $0x860] sm:$0xff]
    %v1956 = vld [vmem:[#allocation5 + $0x868] sm:$0xff]
    %v1957 = vld [vmem:[#allocation5 + $0x870] sm:$0xff]
    %v1958 = vld [vmem:[#allocation5 + $0x878] sm:$0xff]
    %v1959 = vld [vmem:[#allocation5 + $0x8c0] sm:$0xff]
    %v1960 = vld [vmem:[#allocation5 + $0x8c8] sm:$0xff]
    %v1961 = vld [vmem:[#allocation5 + $0x8d0] sm:$0xff]
    %v1962 = vld [vmem:[#allocation5 + $0x8d8] sm:$0xff]
    %v1963 = vld [vmem:[#allocation5 + $0x8e0] sm:$0xff]
    %v1964 = vld [vmem:[#allocation5 + $0x8e8] sm:$0xff]
    %v1965 = vld [vmem:[#allocation5 + $0x8f0] sm:$0xff]
    %v1966 = vld [vmem:[#allocation5 + $0x8f8] sm:$0xff]
    %v1967 = vld [vmem:[#allocation5 + $0x940] sm:$0xff]
    %v1968 = vld [vmem:[#allocation5 + $0x948] sm:$0xff]
    %v1969 = vld [vmem:[#allocation5 + $0x950] sm:$0xff]
    %v1970 = vld [vmem:[#allocation5 + $0x958] sm:$0xff]
    %v1971 = vld [vmem:[#allocation5 + $0x960] sm:$0xff]
    %v1972 = vld [vmem:[#allocation5 + $0x968] sm:$0xff]
    %v1973 = vld [vmem:[#allocation5 + $0x970] sm:$0xff]
    %v1974 = vld [vmem:[#allocation5 + $0x978] sm:$0xff]
    %v1975 = vld [vmem:[#allocation5 + $0x9c0] sm:$0xff]
    %v1976 = vld [vmem:[#allocation5 + $0x9c8] sm:$0xff]
    %v1977 = vld [vmem:[#allocation5 + $0x9d0] sm:$0xff]
    %v1978 = vld [vmem:[#allocation5 + $0x9d8] sm:$0xff]
    %v1979 = vld [vmem:[#allocation5 + $0x9e0] sm:$0xff]
    %v1980 = vld [vmem:[#allocation5 + $0x9e8] sm:$0xff]
    %v1981 = vld [vmem:[#allocation5 + $0x9f0] sm:$0xff]
    %v1982 = vld [vmem:[#allocation5 + $0x9f8] sm:$0xff]
    %v1983 = vld [vmem:[#allocation5 + $0xa40] sm:$0xff]
    %v1984 = vld [vmem:[#allocation5 + $0xa48] sm:$0xff]
    %v1985 = vld [vmem:[#allocation5 + $0xa50] sm:$0xff]
    %v1986 = vld [vmem:[#allocation5 + $0xa58] sm:$0xff]
    %v1987 = vld [vmem:[#allocation5 + $0xa60] sm:$0xff]
    %v1988 = vld [vmem:[#allocation5 + $0xa68] sm:$0xff]
    %v1989 = vld [vmem:[#allocation5 + $0xa70] sm:$0xff]
    %v1990 = vld [vmem:[#allocation5 + $0xa78] sm:$0xff]
    %v1991 = vld [vmem:[#allocation5 + $0xac0] sm:$0xff]
    %v1992 = vld [vmem:[#allocation5 + $0xac8] sm:$0xff]
    %v1993 = vld [vmem:[#allocation5 + $0xad0] sm:$0xff]
    %v1994 = vld [vmem:[#allocation5 + $0xad8] sm:$0xff]
    %v1995 = vld [vmem:[#allocation5 + $0xae0] sm:$0xff]
    %v1996 = vld [vmem:[#allocation5 + $0xae8] sm:$0xff]
    %v1997 = vld [vmem:[#allocation5 + $0xaf0] sm:$0xff]
    %v1998 = vld [vmem:[#allocation5 + $0xaf8] sm:$0xff]
    %v1999 = vld [vmem:[#allocation5 + $0xb40] sm:$0xff]
    %v2000 = vld [vmem:[#allocation5 + $0xb48] sm:$0xff]
    %v2001 = vld [vmem:[#allocation5 + $0xb50] sm:$0xff]
    %v2002 = vld [vmem:[#allocation5 + $0xb58] sm:$0xff]
    %v2003 = vld [vmem:[#allocation5 + $0xb60] sm:$0xff]
    %v2004 = vld [vmem:[#allocation5 + $0xb68] sm:$0xff]
    %v2005 = vld [vmem:[#allocation5 + $0xb70] sm:$0xff]
    %v2006 = vld [vmem:[#allocation5 + $0xb78] sm:$0xff]
    %v2007 = vld [vmem:[#allocation5 + $0xbc0] sm:$0xff]
    %v2008 = vld [vmem:[#allocation5 + $0xbc8] sm:$0xff]
    %v2009 = vld [vmem:[#allocation5 + $0xbd0] sm:$0xff]
    %v2010 = vld [vmem:[#allocation5 + $0xbd8] sm:$0xff]
    %v2011 = vld [vmem:[#allocation5 + $0xbe0] sm:$0xff]
    %v2012 = vld [vmem:[#allocation5 + $0xbe8] sm:$0xff]
    %v2013 = vld [vmem:[#allocation5 + $0xbf0] sm:$0xff]
    %v2014 = vld [vmem:[#allocation5 + $0xbf8] sm:$0xff]
    %v2015 = vld [vmem:[#allocation5 + $0xc40] sm:$0xff]
    %v2016 = vld [vmem:[#allocation5 + $0xc48] sm:$0xff]
    %v2017 = vld [vmem:[#allocation5 + $0xc50] sm:$0xff]
    %v2018 = vld [vmem:[#allocation5 + $0xc58] sm:$0xff]
    %v2019 = vld [vmem:[#allocation5 + $0xc60] sm:$0xff]
    %v2020 = vld [vmem:[#allocation5 + $0xc68] sm:$0xff]
    %v2021 = vld [vmem:[#allocation5 + $0xc70] sm:$0xff]
    %v2022 = vld [vmem:[#allocation5 + $0xc78] sm:$0xff]
    %v2023 = vld [vmem:[#allocation5 + $0xcc0] sm:$0xff]
    %v2024 = vld [vmem:[#allocation5 + $0xcc8] sm:$0xff]
    %v2025 = vld [vmem:[#allocation5 + $0xcd0] sm:$0xff]
    %v2026 = vld [vmem:[#allocation5 + $0xcd8] sm:$0xff]
    %v2027 = vld [vmem:[#allocation5 + $0xce0] sm:$0xff]
    %v2028 = vld [vmem:[#allocation5 + $0xce8] sm:$0xff]
    %v2029 = vld [vmem:[#allocation5 + $0xcf0] sm:$0xff]
    %v2030 = vld [vmem:[#allocation5 + $0xcf8] sm:$0xff]
    %v2031 = vld [vmem:[#allocation5 + $0xd40] sm:$0xff]
    %v2032 = vld [vmem:[#allocation5 + $0xd48] sm:$0xff]
    %v2033 = vld [vmem:[#allocation5 + $0xd50] sm:$0xff]
    %v2034 = vld [vmem:[#allocation5 + $0xd58] sm:$0xff]
    %v2035 = vld [vmem:[#allocation5 + $0xd60] sm:$0xff]
    %v2036 = vld [vmem:[#allocation5 + $0xd68] sm:$0xff]
    %v2037 = vld [vmem:[#allocation5 + $0xd70] sm:$0xff]
    %v2038 = vld [vmem:[#allocation5 + $0xd78] sm:$0xff]
    %v2039 = vld [vmem:[#allocation5 + $0xdc0] sm:$0xff]
    %v2040 = vld [vmem:[#allocation5 + $0xdc8] sm:$0xff]
    %v2041 = vld [vmem:[#allocation5 + $0xdd0] sm:$0xff]
    %v2042 = vld [vmem:[#allocation5 + $0xdd8] sm:$0xff]
    %v2043 = vld [vmem:[#allocation5 + $0xde0] sm:$0xff]
    %v2044 = vld [vmem:[#allocation5 + $0xde8] sm:$0xff]
    %v2045 = vld [vmem:[#allocation5 + $0xdf0] sm:$0xff]
    %v2046 = vld [vmem:[#allocation5 + $0xdf8] sm:$0xff]
    %v2047 = vld [vmem:[#allocation5 + $0xe40] sm:$0xff]
    %v2048 = vld [vmem:[#allocation5 + $0xe48] sm:$0xff]
    %v2049 = vld [vmem:[#allocation5 + $0xe50] sm:$0xff]
    %v2050 = vld [vmem:[#allocation5 + $0xe58] sm:$0xff]
    %v2051 = vld [vmem:[#allocation5 + $0xe60] sm:$0xff]
    %v2052 = vld [vmem:[#allocation5 + $0xe68] sm:$0xff]
    %v2053 = vld [vmem:[#allocation5 + $0xe70] sm:$0xff]
    %v2054 = vld [vmem:[#allocation5 + $0xe78] sm:$0xff]
    %v2055 = vld [vmem:[#allocation5 + $0xec0] sm:$0xff]
    %v2056 = vld [vmem:[#allocation5 + $0xec8] sm:$0xff]
    %v2057 = vld [vmem:[#allocation5 + $0xed0] sm:$0xff]
    %v2058 = vld [vmem:[#allocation5 + $0xed8] sm:$0xff]
    %v2059 = vld [vmem:[#allocation5 + $0xee0] sm:$0xff]
    %v2060 = vld [vmem:[#allocation5 + $0xee8] sm:$0xff]
    %v2061 = vld [vmem:[#allocation5 + $0xef0] sm:$0xff]
    %v2062 = vld [vmem:[#allocation5 + $0xef8] sm:$0xff]
    %v2063 = vld [vmem:[#allocation5 + $0xf40] sm:$0xff]
    %v2064 = vld [vmem:[#allocation5 + $0xf48] sm:$0xff]
    %v2065 = vld [vmem:[#allocation5 + $0xf50] sm:$0xff]
    %v2066 = vld [vmem:[#allocation5 + $0xf58] sm:$0xff]
    %v2067 = vld [vmem:[#allocation5 + $0xf60] sm:$0xff]
    %v2068 = vld [vmem:[#allocation5 + $0xf68] sm:$0xff]
    %v2069 = vld [vmem:[#allocation5 + $0xf70] sm:$0xff]
    %v2070 = vld [vmem:[#allocation5 + $0xf78] sm:$0xff]
    %v2071 = vld [vmem:[#allocation5 + $0xfc0] sm:$0xff]
    %v2072 = vld [vmem:[#allocation5 + $0xfc8] sm:$0xff]
    %v2073 = vld [vmem:[#allocation5 + $0xfd0] sm:$0xff]
    %v2074 = vld [vmem:[#allocation5 + $0xfd8] sm:$0xff]
    %v2075 = vld [vmem:[#allocation5 + $0xfe0] sm:$0xff]
    %v2076 = vld [vmem:[#allocation5 + $0xfe8] sm:$0xff]
    %v2077 = vld [vmem:[#allocation5 + $0xff0] sm:$0xff]
    %v2078 = vld [vmem:[#allocation5 + $0xff8] sm:$0xff]
    %v2079 = vld [vmem:[#allocation5 + $0x1040] sm:$0xff]
    %v2080 = vld [vmem:[#allocation5 + $0x1048] sm:$0xff]
    %v2081 = vld [vmem:[#allocation5 + $0x1050] sm:$0xff]
    %v2082 = vld [vmem:[#allocation5 + $0x1058] sm:$0xff]
    %v2083 = vld [vmem:[#allocation5 + $0x1060] sm:$0xff]
    %v2084 = vld [vmem:[#allocation5 + $0x1068] sm:$0xff]
    %v2085 = vld [vmem:[#allocation5 + $0x1070] sm:$0xff]
    %v2086 = vld [vmem:[#allocation5 + $0x1078] sm:$0xff]
    %v2087 = vld [vmem:[#allocation5 + $0x10c0] sm:$0xff]
    %v2088 = vld [vmem:[#allocation5 + $0x10c8] sm:$0xff]
    %v2089 = vld [vmem:[#allocation5 + $0x10d0] sm:$0xff]
    %v2090 = vld [vmem:[#allocation5 + $0x10d8] sm:$0xff]
    %v2091 = vld [vmem:[#allocation5 + $0x10e0] sm:$0xff]
    %v2092 = vld [vmem:[#allocation5 + $0x10e8] sm:$0xff]
    %v2093 = vld [vmem:[#allocation5 + $0x10f0] sm:$0xff]
    %v2094 = vld [vmem:[#allocation5 + $0x10f8] sm:$0xff]
    %v2095 = vld [vmem:[#allocation5 + $0x1140] sm:$0xff]
    %v2096 = vld [vmem:[#allocation5 + $0x1148] sm:$0xff]
    %v2097 = vld [vmem:[#allocation5 + $0x1150] sm:$0xff]
    %v2098 = vld [vmem:[#allocation5 + $0x1158] sm:$0xff]
    %v2099 = vld [vmem:[#allocation5 + $0x1160] sm:$0xff]
    %v2100 = vld [vmem:[#allocation5 + $0x1168] sm:$0xff]
    %v2101 = vld [vmem:[#allocation5 + $0x1170] sm:$0xff]
    %v2102 = vld [vmem:[#allocation5 + $0x1178] sm:$0xff]
    %v2103 = vld [vmem:[#allocation5 + $0x11c0] sm:$0xff]
    %v2104 = vld [vmem:[#allocation5 + $0x11c8] sm:$0xff]
    %v2105 = vld [vmem:[#allocation5 + $0x11d0] sm:$0xff]
    %v2106 = vld [vmem:[#allocation5 + $0x11d8] sm:$0xff]
    %v2107 = vld [vmem:[#allocation5 + $0x11e0] sm:$0xff]
    %v2108 = vld [vmem:[#allocation5 + $0x11e8] sm:$0xff]
    %v2109 = vld [vmem:[#allocation5 + $0x11f0] sm:$0xff]
    %v2110 = vld [vmem:[#allocation5 + $0x11f8] sm:$0xff]
    %v2111 = vld [vmem:[#allocation5 + $0x1240] sm:$0xff]
    %v2112 = vld [vmem:[#allocation5 + $0x1248] sm:$0xff]
    %v2113 = vld [vmem:[#allocation5 + $0x1250] sm:$0xff]
    %v2114 = vld [vmem:[#allocation5 + $0x1258] sm:$0xff]
    %v2115 = vld [vmem:[#allocation5 + $0x1260] sm:$0xff]
    %v2116 = vld [vmem:[#allocation5 + $0x1268] sm:$0xff]
    %v2117 = vld [vmem:[#allocation5 + $0x1270] sm:$0xff]
    %v2118 = vld [vmem:[#allocation5 + $0x1278] sm:$0xff]
    %v2119 = vld [vmem:[#allocation5 + $0x12c0] sm:$0xff]
    %v2120 = vld [vmem:[#allocation5 + $0x12c8] sm:$0xff]
    %v2121 = vld [vmem:[#allocation5 + $0x12d0] sm:$0xff]
    %v2122 = vld [vmem:[#allocation5 + $0x12d8] sm:$0xff]
    %v2123 = vld [vmem:[#allocation5 + $0x12e0] sm:$0xff]
    %v2124 = vld [vmem:[#allocation5 + $0x12e8] sm:$0xff]
    %v2125 = vld [vmem:[#allocation5 + $0x12f0] sm:$0xff]
    %v2126 = vld [vmem:[#allocation5 + $0x12f8] sm:$0xff]
    %v2127 = vld [vmem:[#allocation5 + $0x1340] sm:$0xff]
    %v2128 = vld [vmem:[#allocation5 + $0x1348] sm:$0xff]
    %v2129 = vld [vmem:[#allocation5 + $0x1350] sm:$0xff]
    %v2130 = vld [vmem:[#allocation5 + $0x1358] sm:$0xff]
    %v2131 = vld [vmem:[#allocation5 + $0x1360] sm:$0xff]
    %v2132 = vld [vmem:[#allocation5 + $0x1368] sm:$0xff]
    %v2133 = vld [vmem:[#allocation5 + $0x1370] sm:$0xff]
    %v2134 = vld [vmem:[#allocation5 + $0x1378] sm:$0xff]
    %v2135 = vld [vmem:[#allocation5 + $0x13c0] sm:$0xff]
    %v2136 = vld [vmem:[#allocation5 + $0x13c8] sm:$0xff]
    %v2137 = vld [vmem:[#allocation5 + $0x13d0] sm:$0xff]
    %v2138 = vld [vmem:[#allocation5 + $0x13d8] sm:$0xff]
    %v2139 = vld [vmem:[#allocation5 + $0x13e0] sm:$0xff]
    %v2140 = vld [vmem:[#allocation5 + $0x13e8] sm:$0xff]
    %v2141 = vld [vmem:[#allocation5 + $0x13f0] sm:$0xff]
    %v2142 = vld [vmem:[#allocation5 + $0x13f8] sm:$0xff]
    %v2143 = vld [vmem:[#allocation5 + $0x1440] sm:$0xff]
    %v2144 = vld [vmem:[#allocation5 + $0x1448] sm:$0xff]
    %v2145 = vld [vmem:[#allocation5 + $0x1450] sm:$0xff]
    %v2146 = vld [vmem:[#allocation5 + $0x1458] sm:$0xff]
    %v2147 = vld [vmem:[#allocation5 + $0x1460] sm:$0xff]
    %v2148 = vld [vmem:[#allocation5 + $0x1468] sm:$0xff]
    %v2149 = vld [vmem:[#allocation5 + $0x1470] sm:$0xff]
    %v2150 = vld [vmem:[#allocation5 + $0x1478] sm:$0xff]
    %v2151 = vld [vmem:[#allocation5 + $0x14c0] sm:$0xff]
    %v2152 = vld [vmem:[#allocation5 + $0x14c8] sm:$0xff]
    %v2153 = vld [vmem:[#allocation5 + $0x14d0] sm:$0xff]
    %v2154 = vld [vmem:[#allocation5 + $0x14d8] sm:$0xff]
    %v2155 = vld [vmem:[#allocation5 + $0x14e0] sm:$0xff]
    %v2156 = vld [vmem:[#allocation5 + $0x14e8] sm:$0xff]
    %v2157 = vld [vmem:[#allocation5 + $0x14f0] sm:$0xff]
    %v2158 = vld [vmem:[#allocation5 + $0x14f8] sm:$0xff]
    %v2159 = vld [vmem:[#allocation5 + $0x1540] sm:$0xff]
    %v2160 = vld [vmem:[#allocation5 + $0x1548] sm:$0xff]
    %v2161 = vld [vmem:[#allocation5 + $0x1550] sm:$0xff]
    %v2162 = vld [vmem:[#allocation5 + $0x1558] sm:$0xff]
    %v2163 = vld [vmem:[#allocation5 + $0x1560] sm:$0xff]
    %v2164 = vld [vmem:[#allocation5 + $0x1568] sm:$0xff]
    %v2165 = vld [vmem:[#allocation5 + $0x1570] sm:$0xff]
    %v2166 = vld [vmem:[#allocation5 + $0x1578] sm:$0xff]
    %v2167 = vld [vmem:[#allocation5 + $0x15c0] sm:$0xff]
    %v2168 = vld [vmem:[#allocation5 + $0x15c8] sm:$0xff]
    %v2169 = vld [vmem:[#allocation5 + $0x15d0] sm:$0xff]
    %v2170 = vld [vmem:[#allocation5 + $0x15d8] sm:$0xff]
    %v2171 = vld [vmem:[#allocation5 + $0x15e0] sm:$0xff]
    %v2172 = vld [vmem:[#allocation5 + $0x15e8] sm:$0xff]
    %v2173 = vld [vmem:[#allocation5 + $0x15f0] sm:$0xff]
    %v2174 = vld [vmem:[#allocation5 + $0x15f8] sm:$0xff]
    %v2175 = vld [vmem:[#allocation5 + $0x1640] sm:$0xff]
    %v2176 = vld [vmem:[#allocation5 + $0x1648] sm:$0xff]
    %v2177 = vld [vmem:[#allocation5 + $0x1650] sm:$0xff]
    %v2178 = vld [vmem:[#allocation5 + $0x1658] sm:$0xff]
    %v2179 = vld [vmem:[#allocation5 + $0x1660] sm:$0xff]
    %v2180 = vld [vmem:[#allocation5 + $0x1668] sm:$0xff]
    %v2181 = vld [vmem:[#allocation5 + $0x1670] sm:$0xff]
    %v2182 = vld [vmem:[#allocation5 + $0x1678] sm:$0xff]
    %v2183 = vld [vmem:[#allocation5 + $0x16c0] sm:$0xff]
    %v2184 = vld [vmem:[#allocation5 + $0x16c8] sm:$0xff]
    %v2185 = vld [vmem:[#allocation5 + $0x16d0] sm:$0xff]
    %v2186 = vld [vmem:[#allocation5 + $0x16d8] sm:$0xff]
    %v2187 = vld [vmem:[#allocation5 + $0x16e0] sm:$0xff]
    %v2188 = vld [vmem:[#allocation5 + $0x16e8] sm:$0xff]
    %v2189 = vld [vmem:[#allocation5 + $0x16f0] sm:$0xff]
    %v2190 = vld [vmem:[#allocation5 + $0x16f8] sm:$0xff]
    %v2191 = vld [vmem:[#allocation5 + $0x1740] sm:$0xff]
    %v2192 = vld [vmem:[#allocation5 + $0x1748] sm:$0xff]
    %v2193 = vld [vmem:[#allocation5 + $0x1750] sm:$0xff]
    %v2194 = vld [vmem:[#allocation5 + $0x1758] sm:$0xff]
    %v2195 = vld [vmem:[#allocation5 + $0x1760] sm:$0xff]
    %v2196 = vld [vmem:[#allocation5 + $0x1768] sm:$0xff]
    %v2197 = vld [vmem:[#allocation5 + $0x1770] sm:$0xff]
    %v2198 = vld [vmem:[#allocation5 + $0x1778] sm:$0xff]
    %v2199 = vld [vmem:[#allocation5 + $0x17c0] sm:$0xff]
    %v2200 = vld [vmem:[#allocation5 + $0x17c8] sm:$0xff]
    %v2201 = vld [vmem:[#allocation5 + $0x17d0] sm:$0xff]
    %v2202 = vld [vmem:[#allocation5 + $0x17d8] sm:$0xff]
    %v2203 = vld [vmem:[#allocation5 + $0x17e0] sm:$0xff]
    %v2204 = vld [vmem:[#allocation5 + $0x17e8] sm:$0xff]
    %v2205 = vld [vmem:[#allocation5 + $0x17f0] sm:$0xff]
    %v2206 = vld [vmem:[#allocation5 + $0x17f8] sm:$0xff]
    %v2207 = vld [vmem:[#allocation5 + $0x1840] sm:$0xff]
    %v2208 = vld [vmem:[#allocation5 + $0x1848] sm:$0xff]
    %v2209 = vld [vmem:[#allocation5 + $0x1850] sm:$0xff]
    %v2210 = vld [vmem:[#allocation5 + $0x1858] sm:$0xff]
    %v2211 = vld [vmem:[#allocation5 + $0x1860] sm:$0xff]
    %v2212 = vld [vmem:[#allocation5 + $0x1868] sm:$0xff]
    %v2213 = vld [vmem:[#allocation5 + $0x1870] sm:$0xff]
    %v2214 = vld [vmem:[#allocation5 + $0x1878] sm:$0xff]
    %v2215 = vld [vmem:[#allocation5 + $0x18c0] sm:$0xff]
    %v2216 = vld [vmem:[#allocation5 + $0x18c8] sm:$0xff]
    %v2217 = vld [vmem:[#allocation5 + $0x18d0] sm:$0xff]
    %v2218 = vld [vmem:[#allocation5 + $0x18d8] sm:$0xff]
    %v2219 = vld [vmem:[#allocation5 + $0x18e0] sm:$0xff]
    %v2220 = vld [vmem:[#allocation5 + $0x18e8] sm:$0xff]
    %v2221 = vld [vmem:[#allocation5 + $0x18f0] sm:$0xff]
    %v2222 = vld [vmem:[#allocation5 + $0x18f8] sm:$0xff]
    %v2223 = vld [vmem:[#allocation5 + $0x1940] sm:$0xff]
    %v2224 = vld [vmem:[#allocation5 + $0x1948] sm:$0xff]
    %v2225 = vld [vmem:[#allocation5 + $0x1950] sm:$0xff]
    %v2226 = vld [vmem:[#allocation5 + $0x1958] sm:$0xff]
    %v2227 = vld [vmem:[#allocation5 + $0x1960] sm:$0xff]
    %v2228 = vld [vmem:[#allocation5 + $0x1968] sm:$0xff]
    %v2229 = vld [vmem:[#allocation5 + $0x1970] sm:$0xff]
    %v2230 = vld [vmem:[#allocation5 + $0x1978] sm:$0xff]
    %v2231 = vld [vmem:[#allocation5 + $0x19c0] sm:$0xff]
    %v2232 = vld [vmem:[#allocation5 + $0x19c8] sm:$0xff]
    %v2233 = vld [vmem:[#allocation5 + $0x19d0] sm:$0xff]
    %v2234 = vld [vmem:[#allocation5 + $0x19d8] sm:$0xff]
    %v2235 = vld [vmem:[#allocation5 + $0x19e0] sm:$0xff]
    %v2236 = vld [vmem:[#allocation5 + $0x19e8] sm:$0xff]
    %v2237 = vld [vmem:[#allocation5 + $0x19f0] sm:$0xff]
    %v2238 = vld [vmem:[#allocation5 + $0x19f8] sm:$0xff]
    %v2239 = vld [vmem:[#allocation5 + $0x1a40] sm:$0xff]
    %v2240 = vld [vmem:[#allocation5 + $0x1a48] sm:$0xff]
    %v2241 = vld [vmem:[#allocation5 + $0x1a50] sm:$0xff]
    %v2242 = vld [vmem:[#allocation5 + $0x1a58] sm:$0xff]
    %v2243 = vld [vmem:[#allocation5 + $0x1a60] sm:$0xff]
    %v2244 = vld [vmem:[#allocation5 + $0x1a68] sm:$0xff]
    %v2245 = vld [vmem:[#allocation5 + $0x1a70] sm:$0xff]
    %v2246 = vld [vmem:[#allocation5 + $0x1a78] sm:$0xff]
    %v2247 = vld [vmem:[#allocation5 + $0x1ac0] sm:$0xff]
    %v2248 = vld [vmem:[#allocation5 + $0x1ac8] sm:$0xff]
    %v2249 = vld [vmem:[#allocation5 + $0x1ad0] sm:$0xff]
    %v2250 = vld [vmem:[#allocation5 + $0x1ad8] sm:$0xff]
    %v2251 = vld [vmem:[#allocation5 + $0x1ae0] sm:$0xff]
    %v2252 = vld [vmem:[#allocation5 + $0x1ae8] sm:$0xff]
    %v2253 = vld [vmem:[#allocation5 + $0x1af0] sm:$0xff]
    %v2254 = vld [vmem:[#allocation5 + $0x1af8] sm:$0xff]
    %v2255 = vld [vmem:[#allocation5 + $0x1b40] sm:$0xff]
    %v2256 = vld [vmem:[#allocation5 + $0x1b48] sm:$0xff]
    %v2257 = vld [vmem:[#allocation5 + $0x1b50] sm:$0xff]
    %v2258 = vld [vmem:[#allocation5 + $0x1b58] sm:$0xff]
    %v2259 = vld [vmem:[#allocation5 + $0x1b60] sm:$0xff]
    %v2260 = vld [vmem:[#allocation5 + $0x1b68] sm:$0xff]
    %v2261 = vld [vmem:[#allocation5 + $0x1b70] sm:$0xff]
    %v2262 = vld [vmem:[#allocation5 + $0x1b78] sm:$0xff]
    %v2263 = vld [vmem:[#allocation5 + $0x1bc0] sm:$0xff]
    %v2264 = vld [vmem:[#allocation5 + $0x1bc8] sm:$0xff]
    %v2265 = vld [vmem:[#allocation5 + $0x1bd0] sm:$0xff]
    %v2266 = vld [vmem:[#allocation5 + $0x1bd8] sm:$0xff]
    %v2267 = vld [vmem:[#allocation5 + $0x1be0] sm:$0xff]
    %v2268 = vld [vmem:[#allocation5 + $0x1be8] sm:$0xff]
    %v2269 = vld [vmem:[#allocation5 + $0x1bf0] sm:$0xff]
    %v2270 = vld [vmem:[#allocation5 + $0x1bf8] sm:$0xff]
    %v2271 = vld [vmem:[#allocation5 + $0x1c40] sm:$0xff]
    %v2272 = vld [vmem:[#allocation5 + $0x1c48] sm:$0xff]
    %v2273 = vld [vmem:[#allocation5 + $0x1c50] sm:$0xff]
    %v2274 = vld [vmem:[#allocation5 + $0x1c58] sm:$0xff]
    %v2275 = vld [vmem:[#allocation5 + $0x1c60] sm:$0xff]
    %v2276 = vld [vmem:[#allocation5 + $0x1c68] sm:$0xff]
    %v2277 = vld [vmem:[#allocation5 + $0x1c70] sm:$0xff]
    %v2278 = vld [vmem:[#allocation5 + $0x1c78] sm:$0xff]
    %v2279 = vld [vmem:[#allocation5 + $0x1cc0] sm:$0xff]
    %v2280 = vld [vmem:[#allocation5 + $0x1cc8] sm:$0xff]
    %v2281 = vld [vmem:[#allocation5 + $0x1cd0] sm:$0xff]
    %v2282 = vld [vmem:[#allocation5 + $0x1cd8] sm:$0xff]
    %v2283 = vld [vmem:[#allocation5 + $0x1ce0] sm:$0xff]
    %v2284 = vld [vmem:[#allocation5 + $0x1ce8] sm:$0xff]
    %v2285 = vld [vmem:[#allocation5 + $0x1cf0] sm:$0xff]
    %v2286 = vld [vmem:[#allocation5 + $0x1cf8] sm:$0xff]
    %v2287 = vld [vmem:[#allocation5 + $0x1d40] sm:$0xff]
    %v2288 = vld [vmem:[#allocation5 + $0x1d48] sm:$0xff]
    %v2289 = vld [vmem:[#allocation5 + $0x1d50] sm:$0xff]
    %v2290 = vld [vmem:[#allocation5 + $0x1d58] sm:$0xff]
    %v2291 = vld [vmem:[#allocation5 + $0x1d60] sm:$0xff]
    %v2292 = vld [vmem:[#allocation5 + $0x1d68] sm:$0xff]
    %v2293 = vld [vmem:[#allocation5 + $0x1d70] sm:$0xff]
    %v2294 = vld [vmem:[#allocation5 + $0x1d78] sm:$0xff]
    %v2295 = vld [vmem:[#allocation5 + $0x1dc0] sm:$0xff]
    %v2296 = vld [vmem:[#allocation5 + $0x1dc8] sm:$0xff]
    %v2297 = vld [vmem:[#allocation5 + $0x1dd0] sm:$0xff]
    %v2298 = vld [vmem:[#allocation5 + $0x1dd8] sm:$0xff]
    %v2299 = vld [vmem:[#allocation5 + $0x1de0] sm:$0xff]
    %v2300 = vld [vmem:[#allocation5 + $0x1de8] sm:$0xff]
    %v2301 = vld [vmem:[#allocation5 + $0x1df0] sm:$0xff]
    %v2302 = vld [vmem:[#allocation5 + $0x1df8] sm:$0xff]
    %v2303 = vld [vmem:[#allocation5 + $0x1e40] sm:$0xff]
    %v2304 = vld [vmem:[#allocation5 + $0x1e48] sm:$0xff]
    %v2305 = vld [vmem:[#allocation5 + $0x1e50] sm:$0xff]
    %v2306 = vld [vmem:[#allocation5 + $0x1e58] sm:$0xff]
    %v2307 = vld [vmem:[#allocation5 + $0x1e60] sm:$0xff]
    %v2308 = vld [vmem:[#allocation5 + $0x1e68] sm:$0xff]
    %v2309 = vld [vmem:[#allocation5 + $0x1e70] sm:$0xff]
    %v2310 = vld [vmem:[#allocation5 + $0x1e78] sm:$0xff]
    %v2311 = vld [vmem:[#allocation5 + $0x1ec0] sm:$0xff]
    %v2312 = vld [vmem:[#allocation5 + $0x1ec8] sm:$0xff]
    %v2313 = vld [vmem:[#allocation5 + $0x1ed0] sm:$0xff]
    %v2314 = vld [vmem:[#allocation5 + $0x1ed8] sm:$0xff]
    %v2315 = vld [vmem:[#allocation5 + $0x1ee0] sm:$0xff]
    %v2316 = vld [vmem:[#allocation5 + $0x1ee8] sm:$0xff]
    %v2317 = vld [vmem:[#allocation5 + $0x1ef0] sm:$0xff]
    %v2318 = vld [vmem:[#allocation5 + $0x1ef8] sm:$0xff]
    %v2319 = vld [vmem:[#allocation5 + $0x1f40] sm:$0xff]
    %v2320 = vld [vmem:[#allocation5 + $0x1f48] sm:$0xff]
    %v2321 = vld [vmem:[#allocation5 + $0x1f50] sm:$0xff]
    %v2322 = vld [vmem:[#allocation5 + $0x1f58] sm:$0xff]
    %v2323 = vld [vmem:[#allocation5 + $0x1f60] sm:$0xff]
    %v2324 = vld [vmem:[#allocation5 + $0x1f68] sm:$0xff]
    %v2325 = vld [vmem:[#allocation5 + $0x1f70] sm:$0xff]
    %v2326 = vld [vmem:[#allocation5 + $0x1f78] sm:$0xff]
    %v2327 = vld [vmem:[#allocation5 + $0x1fc0] sm:$0xff]
    %v2328 = vld [vmem:[#allocation5 + $0x1fc8] sm:$0xff]
    %v2329 = vld [vmem:[#allocation5 + $0x1fd0] sm:$0xff]
    %v2330 = vld [vmem:[#allocation5 + $0x1fd8] sm:$0xff]
    %v2331 = vld [vmem:[#allocation5 + $0x1fe0] sm:$0xff]
    %v2332 = vld [vmem:[#allocation5 + $0x1fe8] sm:$0xff]
    %v2333 = vld [vmem:[#allocation5 + $0x1ff0] sm:$0xff]
    %v2334 = vld [vmem:[#allocation5 + $0x1ff8] sm:$0xff]
    %v2335 = vld [vmem:[#allocation7 + $0x8] sm:$0xff]
    %v2337 = vlaneseq
    %v2338 = vshrl.u32 %v2337, 7
    %v2339 = vsub.s32 0, %v2338
    %v2340 = vrot.slane %v2335, %v2339
    %v2341 = vlaneseq
    %v2342 = vshrl.u32 %v2341, 7
    %v2343 = vsub.s32 1, %v2342
    %v2344 = vrot.slane %v2335, %v2343
    %v2345 = vlaneseq
    %v2346 = vshrl.u32 %v2345, 7
    %v2347 = vsub.s32 2, %v2346
    %v2348 = vrot.slane %v2335, %v2347
    %v2349 = vlaneseq
    %v2350 = vshrl.u32 %v2349, 7
    %v2351 = vsub.s32 3, %v2350
    %v2352 = vrot.slane %v2335, %v2351
    %v2353 = vlaneseq
    %v2354 = vshrl.u32 %v2353, 7
    %v2355 = vsub.s32 4, %v2354
    %v2356 = vrot.slane %v2335, %v2355
    %v2357 = vlaneseq
    %v2358 = vshrl.u32 %v2357, 7
    %v2359 = vsub.s32 5, %v2358
    %v2360 = vrot.slane %v2335, %v2359
    %v2361 = vlaneseq
    %v2362 = vshrl.u32 %v2361, 7
    %v2363 = vsub.s32 6, %v2362
    %v2364 = vrot.slane %v2335, %v2363
    %v2365 = vlaneseq
    %v2366 = vshrl.u32 %v2365, 7
    %v2367 = vsub.s32 7, %v2366
    %v2368 = vrot.slane %v2335, %v2367
    %2377 = vmatprep.subr.mxu0 %v1824
    %2378 = vmatpush1.msra.mxu0 %v1823
    %2379 = vmatprep.subr.mxu0 %v1832
    %2380 = vmatpush1.msra.mxu0 %v1831
    %2381 = vmatprep.subr.mxu0 %v1840
    %2382 = vmatpush1.msra.mxu0 %v1839
    %2383 = vmatprep.subr.mxu0 %v1848
    %2384 = vmatpush1.msra.mxu0 %v1847
    %2385 = vmatprep.subr.mxu0 %v1856
    %2386 = vmatpush1.msra.mxu0 %v1855
    %2387 = vmatprep.subr.mxu0 %v1864
    %2388 = vmatpush1.msra.mxu0 %v1863
    %2389 = vmatprep.subr.mxu0 %v1872
    %2390 = vmatpush1.msra.mxu0 %v1871
    %2391 = vmatprep.subr.mxu0 %v1880
    %2392 = vmatpush1.msra.mxu0 %v1879
    %2393 = vmatprep.subr.mxu0 %v1888
    %2394 = vmatpush1.msra.mxu0 %v1887
    %2395 = vmatprep.subr.mxu0 %v1896
    %2396 = vmatpush1.msra.mxu0 %v1895
    %2397 = vmatprep.subr.mxu0 %v1904
    %2398 = vmatpush1.msra.mxu0 %v1903
    %2399 = vmatprep.subr.mxu0 %v1912
    %2400 = vmatpush1.msra.mxu0 %v1911
    %2401 = vmatprep.subr.mxu0 %v1920
    %2402 = vmatpush1.msra.mxu0 %v1919
    %2403 = vmatprep.subr.mxu0 %v1928
    %2404 = vmatpush1.msra.mxu0 %v1927
    %2405 = vmatprep.subr.mxu0 %v1936
    %2406 = vmatpush1.msra.mxu0 %v1935
    %2407 = vmatprep.subr.mxu0 %v1944
    %2408 = vmatpush1.msra.mxu0 %v1943
    %2409 = vmatprep.subr.mxu0 %v1952
    %2410 = vmatpush1.msra.mxu0 %v1951
    %2411 = vmatprep.subr.mxu0 %v1960
    %2412 = vmatpush1.msra.mxu0 %v1959
    %2413 = vmatprep.subr.mxu0 %v1968
    %2414 = vmatpush1.msra.mxu0 %v1967
    %2415 = vmatprep.subr.mxu0 %v1976
    %2416 = vmatpush1.msra.mxu0 %v1975
    %2417 = vmatprep.subr.mxu0 %v1984
    %2418 = vmatpush1.msra.mxu0 %v1983
    %2419 = vmatprep.subr.mxu0 %v1992
    %2420 = vmatpush1.msra.mxu0 %v1991
    %2421 = vmatprep.subr.mxu0 %v2000
    %2422 = vmatpush1.msra.mxu0 %v1999
    %2423 = vmatprep.subr.mxu0 %v2008
    %2424 = vmatpush1.msra.mxu0 %v2007
    %2425 = vmatprep.subr.mxu0 %v2016
    %2426 = vmatpush1.msra.mxu0 %v2015
    %2427 = vmatprep.subr.mxu0 %v2024
    %2428 = vmatpush1.msra.mxu0 %v2023
    %2429 = vmatprep.subr.mxu0 %v2032
    %2430 = vmatpush1.msra.mxu0 %v2031
    %2431 = vmatprep.subr.mxu0 %v2040
    %2432 = vmatpush1.msra.mxu0 %v2039
    %2433 = vmatprep.subr.mxu0 %v2048
    %2434 = vmatpush1.msra.mxu0 %v2047
    %2435 = vmatprep.subr.mxu0 %v2056
    %2436 = vmatpush1.msra.mxu0 %v2055
    %2437 = vmatprep.subr.mxu0 %v2064
    %2438 = vmatpush1.msra.mxu0 %v2063
    %2439 = vmatprep.subr.mxu0 %v2072
    %2440 = vmatpush1.msra.mxu0 %v2071
    %2441 = vmatprep.mubr.f32.mxu0 %v115
    %2442 = vmatmul.mubr.f32.gmra.mrb[0].mxu0 %v114
    %v2443 = vpop.f32.mrb[0].mxu0
    %v2444 = vadd.f32 %v2340, %v2443
    %v2445 = vpop.f32.mrb[0].mxu0
    %v2446 = vadd.f32 %v2344, %v2445
    %2447 = vmatprep.mubr.f32.mxu0 %v119
    %2448 = vmatmul.mubr.f32.gmra.mrb[0].mxu0 %v118
    %v2449 = vpop.f32.mrb[0].mxu0
    %v2450 = vadd.f32 %v2340, %v2449
    %v2451 = vpop.f32.mrb[0].mxu0
    %v2452 = vadd.f32 %v2344, %v2451
    %2453 = vdwg.mxu0
    %2454 = vmatprep.subr.mxu0 %v2080
    %2455 = vmatpush1.msra.mxu0 %v2079
    %2456 = vmatprep.subr.mxu0 %v2088
    %2457 = vmatpush1.msra.mxu0 %v2087
    %2458 = vmatprep.subr.mxu0 %v2096
    %2459 = vmatpush1.msra.mxu0 %v2095
    %2460 = vmatprep.subr.mxu0 %v2104
    %2461 = vmatpush1.msra.mxu0 %v2103
    %2462 = vmatprep.subr.mxu0 %v2112
    %2463 = vmatpush1.msra.mxu0 %v2111
    %2464 = vmatprep.subr.mxu0 %v2120
    %2465 = vmatpush1.msra.mxu0 %v2119
    %2466 = vmatprep.subr.mxu0 %v2128
    %2467 = vmatpush1.msra.mxu0 %v2127
    %2468 = vmatprep.subr.mxu0 %v2136
    %2469 = vmatpush1.msra.mxu0 %v2135
    %2470 = vmatprep.subr.mxu0 %v2144
    %2471 = vmatpush1.msra.mxu0 %v2143
    %2472 = vmatprep.subr.mxu0 %v2152
    %2473 = vmatpush1.msra.mxu0 %v2151
    %2474 = vmatprep.subr.mxu0 %v2160
    %2475 = vmatpush1.msra.mxu0 %v2159
    %2476 = vmatprep.subr.mxu0 %v2168
    %2477 = vmatpush1.msra.mxu0 %v2167
    %2478 = vmatprep.subr.mxu0 %v2176
    %2479 = vmatpush1.msra.mxu0 %v2175
    %2480 = vmatprep.subr.mxu0 %v2184
    %2481 = vmatpush1.msra.mxu0 %v2183
    %2482 = vmatprep.subr.mxu0 %v2192
    %2483 = vmatpush1.msra.mxu0 %v2191
    %2484 = vmatprep.subr.mxu0 %v2200
    %2485 = vmatpush1.msra.mxu0 %v2199
    %2486 = vmatprep.subr.mxu0 %v2208
    %2487 = vmatpush1.msra.mxu0 %v2207
    %2488 = vmatprep.subr.mxu0 %v2216
    %2489 = vmatpush1.msra.mxu0 %v2215
    %2490 = vmatprep.subr.mxu0 %v2224
    %2491 = vmatpush1.msra.mxu0 %v2223
    %2492 = vmatprep.subr.mxu0 %v2232
    %2493 = vmatpush1.msra.mxu0 %v2231
    %2494 = vmatprep.subr.mxu0 %v2240
    %2495 = vmatpush1.msra.mxu0 %v2239
    %2496 = vmatprep.subr.mxu0 %v2248
    %2497 = vmatpush1.msra.mxu0 %v2247
    %2498 = vmatprep.subr.mxu0 %v2256
    %2499 = vmatpush1.msra.mxu0 %v2255
    %2500 = vmatprep.subr.mxu0 %v2264
    %2501 = vmatpush1.msra.mxu0 %v2263
    %2502 = vmatprep.subr.mxu0 %v2272
    %2503 = vmatpush1.msra.mxu0 %v2271
    %2504 = vmatprep.subr.mxu0 %v2280
    %2505 = vmatpush1.msra.mxu0 %v2279
    %2506 = vmatprep.subr.mxu0 %v2288
    %2507 = vmatpush1.msra.mxu0 %v2287
    %2508 = vmatprep.subr.mxu0 %v2296
    %2509 = vmatpush1.msra.mxu0 %v2295
    %2510 = vmatprep.subr.mxu0 %v2304
    %2511 = vmatpush1.msra.mxu0 %v2303
    %2512 = vmatprep.subr.mxu0 %v2312
    %2513 = vmatpush1.msra.mxu0 %v2311
    %2514 = vmatprep.subr.mxu0 %v2320
    %2515 = vmatpush1.msra.mxu0 %v2319
    %2516 = vmatprep.subr.mxu0 %v2328
    %2517 = vmatpush1.msra.mxu0 %v2327
    %2518 = vmatprep.mubr.f32.mxu0 %v117
    %2519 = vmatmul.mubr.f32.gmra.mrb[0].mxu0 %v116
    %v2520 = vpop.f32.mrb[0].mxu0
    %v2521 = vadd.f32 %v2444, %v2520
    %v2522 = vpop.f32.mrb[0].mxu0
    %v2523 = vadd.f32 %v2446, %v2522
    %2524 = vmatprep.mubr.f32.mxu0 %v121
    %2525 = vmatmul.mubr.f32.gmra.mrb[0].mxu0 %v120
    %v2526 = vpop.f32.mrb[0].mxu0
    %v2527 = vadd.f32 %v2450, %v2526
    %v2528 = vpop.f32.mrb[0].mxu0
    %v2529 = vadd.f32 %v2452, %v2528
    %2530 = vdwg.mxu0
    %2531 = vmatprep.subr.mxu0 %v1826
    %2532 = vmatpush1.msra.mxu0 %v1825
    %2533 = vmatprep.subr.mxu0 %v1834
    %2534 = vmatpush1.msra.mxu0 %v1833
    %2535 = vmatprep.subr.mxu0 %v1842
    %2536 = vmatpush1.msra.mxu0 %v1841
    %2537 = vmatprep.subr.mxu0 %v1850
    %2538 = vmatpush1.msra.mxu0 %v1849
    %2539 = vmatprep.subr.mxu0 %v1858
    %2540 = vmatpush1.msra.mxu0 %v1857
    %2541 = vmatprep.subr.mxu0 %v1866
    %2542 = vmatpush1.msra.mxu0 %v1865
    %2543 = vmatprep.subr.mxu0 %v1874
    %2544 = vmatpush1.msra.mxu0 %v1873
    %2545 = vmatprep.subr.mxu0 %v1882
    %2546 = vmatpush1.msra.mxu0 %v1881
    %2547 = vmatprep.subr.mxu0 %v1890
    %2548 = vmatpush1.msra.mxu0 %v1889
    %2549 = vmatprep.subr.mxu0 %v1898
    %2550 = vmatpush1.msra.mxu0 %v1897
    %2551 = vmatprep.subr.mxu0 %v1906
    %2552 = vmatpush1.msra.mxu0 %v1905
    %2553 = vmatprep.subr.mxu0 %v1914
    %2554 = vmatpush1.msra.mxu0 %v1913
    %2555 = vmatprep.subr.mxu0 %v1922
    %2556 = vmatpush1.msra.mxu0 %v1921
    %2557 = vmatprep.subr.mxu0 %v1930
    %2558 = vmatpush1.msra.mxu0 %v1929
    %2559 = vmatprep.subr.mxu0 %v1938
    %2560 = vmatpush1.msra.mxu0 %v1937
    %2561 = vmatprep.subr.mxu0 %v1946
    %2562 = vmatpush1.msra.mxu0 %v1945
    %2563 = vmatprep.subr.mxu0 %v1954
    %2564 = vmatpush1.msra.mxu0 %v1953
    %2565 = vmatprep.subr.mxu0 %v1962
    %2566 = vmatpush1.msra.mxu0 %v1961
    %2567 = vmatprep.subr.mxu0 %v1970
    %2568 = vmatpush1.msra.mxu0 %v1969
    %2569 = vmatprep.subr.mxu0 %v1978
    %2570 = vmatpush1.msra.mxu0 %v1977
    %2571 = vmatprep.subr.mxu0 %v1986
    %2572 = vmatpush1.msra.mxu0 %v1985
    %2573 = vmatprep.subr.mxu0 %v1994
    %2574 = vmatpush1.msra.mxu0 %v1993
    %2575 = vmatprep.subr.mxu0 %v2002
    %2576 = vmatpush1.msra.mxu0 %v2001
    %2577 = vmatprep.subr.mxu0 %v2010
    %2578 = vmatpush1.msra.mxu0 %v2009
    %2579 = vmatprep.subr.mxu0 %v2018
    %2580 = vmatpush1.msra.mxu0 %v2017
    %2581 = vmatprep.subr.mxu0 %v2026
    %2582 = vmatpush1.msra.mxu0 %v2025
    %2583 = vmatprep.subr.mxu0 %v2034
    %2584 = vmatpush1.msra.mxu0 %v2033
    %2585 = vmatprep.subr.mxu0 %v2042
    %2586 = vmatpush1.msra.mxu0 %v2041
    %2587 = vmatprep.subr.mxu0 %v2050
    %2588 = vmatpush1.msra.mxu0 %v2049
    %2589 = vmatprep.subr.mxu0 %v2058
    %2590 = vmatpush1.msra.mxu0 %v2057
    %2591 = vmatprep.subr.mxu0 %v2066
    %2592 = vmatpush1.msra.mxu0 %v2065
    %2593 = vmatprep.subr.mxu0 %v2074
    %2594 = vmatpush1.msra.mxu0 %v2073
    %2595 = vmatprep.mubr.f32.mxu0 %v115
    %2596 = vmatmul.mubr.f32.gmra.mrb[0].mxu0 %v114
    %v2597 = vpop.f32.mrb[0].mxu0
    %v2598 = vadd.f32 %v2348, %v2597
    %v2599 = vpop.f32.mrb[0].mxu0
    %v2600 = vadd.f32 %v2352, %v2599
    %2601 = vmatprep.mubr.f32.mxu0 %v119
    %2602 = vmatmul.mubr.f32.gmra.mrb[0].mxu0 %v118
    %v2603 = vpop.f32.mrb[0].mxu0
    %v2604 = vadd.f32 %v2348, %v2603
    %v2605 = vpop.f32.mrb[0].mxu0
    %v2606 = vadd.f32 %v2352, %v2605
    %2607 = vdwg.mxu0
    %2608 = vmatprep.subr.mxu0 %v2082
    %2609 = vmatpush1.msra.mxu0 %v2081
    %2610 = vmatprep.subr.mxu0 %v2090
    %2611 = vmatpush1.msra.mxu0 %v2089
    %2612 = vmatprep.subr.mxu0 %v2098
    %2613 = vmatpush1.msra.mxu0 %v2097
    %2614 = vmatprep.subr.mxu0 %v2106
    %2615 = vmatpush1.msra.mxu0 %v2105
    %2616 = vmatprep.subr.mxu0 %v2114
    %2617 = vmatpush1.msra.mxu0 %v2113
    %2618 = vmatprep.subr.mxu0 %v2122
    %2619 = vmatpush1.msra.mxu0 %v2121
    %2620 = vmatprep.subr.mxu0 %v2130
    %2621 = vmatpush1.msra.mxu0 %v2129
    %2622 = vmatprep.subr.mxu0 %v2138
    %2623 = vmatpush1.msra.mxu0 %v2137
    %2624 = vmatprep.subr.mxu0 %v2146
    %2625 = vmatpush1.msra.mxu0 %v2145
    %2626 = vmatprep.subr.mxu0 %v2154
    %2627 = vmatpush1.msra.mxu0 %v2153
    %2628 = vmatprep.subr.mxu0 %v2162
    %2629 = vmatpush1.msra.mxu0 %v2161
    %2630 = vmatprep.subr.mxu0 %v2170
    %2631 = vmatpush1.msra.mxu0 %v2169
    %2632 = vmatprep.subr.mxu0 %v2178
    %2633 = vmatpush1.msra.mxu0 %v2177
    %2634 = vmatprep.subr.mxu0 %v2186
    %2635 = vmatpush1.msra.mxu0 %v2185
    %2636 = vmatprep.subr.mxu0 %v2194
    %2637 = vmatpush1.msra.mxu0 %v2193
    %2638 = vmatprep.subr.mxu0 %v2202
    %2639 = vmatpush1.msra.mxu0 %v2201
    %2640 = vmatprep.subr.mxu0 %v2210
    %2641 = vmatpush1.msra.mxu0 %v2209
    %2642 = vmatprep.subr.mxu0 %v2218
    %2643 = vmatpush1.msra.mxu0 %v2217
    %2644 = vmatprep.subr.mxu0 %v2226
    %2645 = vmatpush1.msra.mxu0 %v2225
    %2646 = vmatprep.subr.mxu0 %v2234
    %2647 = vmatpush1.msra.mxu0 %v2233
    %2648 = vmatprep.subr.mxu0 %v2242
    %2649 = vmatpush1.msra.mxu0 %v2241
    %2650 = vmatprep.subr.mxu0 %v2250
    %2651 = vmatpush1.msra.mxu0 %v2249
    %2652 = vmatprep.subr.mxu0 %v2258
    %2653 = vmatpush1.msra.mxu0 %v2257
    %2654 = vmatprep.subr.mxu0 %v2266
    %2655 = vmatpush1.msra.mxu0 %v2265
    %2656 = vmatprep.subr.mxu0 %v2274
    %2657 = vmatpush1.msra.mxu0 %v2273
    %2658 = vmatprep.subr.mxu0 %v2282
    %2659 = vmatpush1.msra.mxu0 %v2281
    %2660 = vmatprep.subr.mxu0 %v2290
    %2661 = vmatpush1.msra.mxu0 %v2289
    %2662 = vmatprep.subr.mxu0 %v2298
    %2663 = vmatpush1.msra.mxu0 %v2297
    %2664 = vmatprep.subr.mxu0 %v2306
    %2665 = vmatpush1.msra.mxu0 %v2305
    %2666 = vmatprep.subr.mxu0 %v2314
    %2667 = vmatpush1.msra.mxu0 %v2313
    %2668 = vmatprep.subr.mxu0 %v2322
    %2669 = vmatpush1.msra.mxu0 %v2321
    %2670 = vmatprep.subr.mxu0 %v2330
    %2671 = vmatpush1.msra.mxu0 %v2329
    %2672 = vmatprep.mubr.f32.mxu0 %v117
    %2673 = vmatmul.mubr.f32.gmra.mrb[0].mxu0 %v116
    %v2674 = vpop.f32.mrb[0].mxu0
    %v2675 = vadd.f32 %v2598, %v2674
    %v2676 = vpop.f32.mrb[0].mxu0
    %v2677 = vadd.f32 %v2600, %v2676
    %2678 = vmatprep.mubr.f32.mxu0 %v121
    %2679 = vmatmul.mubr.f32.gmra.mrb[0].mxu0 %v120
    %v2680 = vpop.f32.mrb[0].mxu0
    %v2681 = vadd.f32 %v2604, %v2680
    %v2682 = vpop.f32.mrb[0].mxu0
    %v2683 = vadd.f32 %v2606, %v2682
    %2684 = vdwg.mxu0
    %2685 = vmatprep.subr.mxu0 %v1828
    %2686 = vmatpush1.msra.mxu0 %v1827
    %2687 = vmatprep.subr.mxu0 %v1836
    %2688 = vmatpush1.msra.mxu0 %v1835
    %2689 = vmatprep.subr.mxu0 %v1844
    %2690 = vmatpush1.msra.mxu0 %v1843
    %2691 = vmatprep.subr.mxu0 %v1852
    %2692 = vmatpush1.msra.mxu0 %v1851
    %2693 = vmatprep.subr.mxu0 %v1860
    %2694 = vmatpush1.msra.mxu0 %v1859
    %2695 = vmatprep.subr.mxu0 %v1868
    %2696 = vmatpush1.msra.mxu0 %v1867
    %2697 = vmatprep.subr.mxu0 %v1876
    %2698 = vmatpush1.msra.mxu0 %v1875
    %2699 = vmatprep.subr.mxu0 %v1884
    %2700 = vmatpush1.msra.mxu0 %v1883
    %2701 = vmatprep.subr.mxu0 %v1892
    %2702 = vmatpush1.msra.mxu0 %v1891
    %2703 = vmatprep.subr.mxu0 %v1900
    %2704 = vmatpush1.msra.mxu0 %v1899
    %2705 = vmatprep.subr.mxu0 %v1908
    %2706 = vmatpush1.msra.mxu0 %v1907
    %2707 = vmatprep.subr.mxu0 %v1916
    %2708 = vmatpush1.msra.mxu0 %v1915
    %2709 = vmatprep.subr.mxu0 %v1924
    %2710 = vmatpush1.msra.mxu0 %v1923
    %2711 = vmatprep.subr.mxu0 %v1932
    %2712 = vmatpush1.msra.mxu0 %v1931
    %2713 = vmatprep.subr.mxu0 %v1940
    %2714 = vmatpush1.msra.mxu0 %v1939
    %2715 = vmatprep.subr.mxu0 %v1948
    %2716 = vmatpush1.msra.mxu0 %v1947
    %2717 = vmatprep.subr.mxu0 %v1956
    %2718 = vmatpush1.msra.mxu0 %v1955
    %2719 = vmatprep.subr.mxu0 %v1964
    %2720 = vmatpush1.msra.mxu0 %v1963
    %2721 = vmatprep.subr.mxu0 %v1972
    %2722 = vmatpush1.msra.mxu0 %v1971
    %2723 = vmatprep.subr.mxu0 %v1980
    %2724 = vmatpush1.msra.mxu0 %v1979
    %2725 = vmatprep.subr.mxu0 %v1988
    %2726 = vmatpush1.msra.mxu0 %v1987
    %2727 = vmatprep.subr.mxu0 %v1996
    %2728 = vmatpush1.msra.mxu0 %v1995
    %2729 = vmatprep.subr.mxu0 %v2004
    %2730 = vmatpush1.msra.mxu0 %v2003
    %2731 = vmatprep.subr.mxu0 %v2012
    %2732 = vmatpush1.msra.mxu0 %v2011
    %2733 = vmatprep.subr.mxu0 %v2020
    %2734 = vmatpush1.msra.mxu0 %v2019
    %2735 = vmatprep.subr.mxu0 %v2028
    %2736 = vmatpush1.msra.mxu0 %v2027
    %2737 = vmatprep.subr.mxu0 %v2036
    %2738 = vmatpush1.msra.mxu0 %v2035
    %2739 = vmatprep.subr.mxu0 %v2044
    %2740 = vmatpush1.msra.mxu0 %v2043
    %2741 = vmatprep.subr.mxu0 %v2052
    %2742 = vmatpush1.msra.mxu0 %v2051
    %2743 = vmatprep.subr.mxu0 %v2060
    %2744 = vmatpush1.msra.mxu0 %v2059
    %2745 = vmatprep.subr.mxu0 %v2068
    %2746 = vmatpush1.msra.mxu0 %v2067
    %2747 = vmatprep.subr.mxu0 %v2076
    %2748 = vmatpush1.msra.mxu0 %v2075
    %2749 = vmatprep.mubr.f32.mxu0 %v115
    %2750 = vmatmul.mubr.f32.gmra.mrb[0].mxu0 %v114
    %v2751 = vpop.f32.mrb[0].mxu0
    %v2752 = vadd.f32 %v2356, %v2751
    %v2753 = vpop.f32.mrb[0].mxu0
    %v2754 = vadd.f32 %v2360, %v2753
    %2755 = vmatprep.mubr.f32.mxu0 %v119
    %2756 = vmatmul.mubr.f32.gmra.mrb[0].mxu0 %v118
    %v2757 = vpop.f32.mrb[0].mxu0
    %v2758 = vadd.f32 %v2356, %v2757
    %v2759 = vpop.f32.mrb[0].mxu0
    %v2760 = vadd.f32 %v2360, %v2759
    %2761 = vdwg.mxu0
    %2762 = vmatprep.subr.mxu0 %v2084
    %2763 = vmatpush1.msra.mxu0 %v2083
    %2764 = vmatprep.subr.mxu0 %v2092
    %2765 = vmatpush1.msra.mxu0 %v2091
    %2766 = vmatprep.subr.mxu0 %v2100
    %2767 = vmatpush1.msra.mxu0 %v2099
    %2768 = vmatprep.subr.mxu0 %v2108
    %2769 = vmatpush1.msra.mxu0 %v2107
    %2770 = vmatprep.subr.mxu0 %v2116
    %2771 = vmatpush1.msra.mxu0 %v2115
    %2772 = vmatprep.subr.mxu0 %v2124
    %2773 = vmatpush1.msra.mxu0 %v2123
    %2774 = vmatprep.subr.mxu0 %v2132
    %2775 = vmatpush1.msra.mxu0 %v2131
    %2776 = vmatprep.subr.mxu0 %v2140
    %2777 = vmatpush1.msra.mxu0 %v2139
    %2778 = vmatprep.subr.mxu0 %v2148
    %2779 = vmatpush1.msra.mxu0 %v2147
    %2780 = vmatprep.subr.mxu0 %v2156
    %2781 = vmatpush1.msra.mxu0 %v2155
    %2782 = vmatprep.subr.mxu0 %v2164
    %2783 = vmatpush1.msra.mxu0 %v2163
    %2784 = vmatprep.subr.mxu0 %v2172
    %2785 = vmatpush1.msra.mxu0 %v2171
    %2786 = vmatprep.subr.mxu0 %v2180
    %2787 = vmatpush1.msra.mxu0 %v2179
    %2788 = vmatprep.subr.mxu0 %v2188
    %2789 = vmatpush1.msra.mxu0 %v2187
    %2790 = vmatprep.subr.mxu0 %v2196
    %2791 = vmatpush1.msra.mxu0 %v2195
    %2792 = vmatprep.subr.mxu0 %v2204
    %2793 = vmatpush1.msra.mxu0 %v2203
    %2794 = vmatprep.subr.mxu0 %v2212
    %2795 = vmatpush1.msra.mxu0 %v2211
    %2796 = vmatprep.subr.mxu0 %v2220
    %2797 = vmatpush1.msra.mxu0 %v2219
    %2798 = vmatprep.subr.mxu0 %v2228
    %2799 = vmatpush1.msra.mxu0 %v2227
    %2800 = vmatprep.subr.mxu0 %v2236
    %2801 = vmatpush1.msra.mxu0 %v2235
    %2802 = vmatprep.subr.mxu0 %v2244
    %2803 = vmatpush1.msra.mxu0 %v2243
    %2804 = vmatprep.subr.mxu0 %v2252
    %2805 = vmatpush1.msra.mxu0 %v2251
    %2806 = vmatprep.subr.mxu0 %v2260
    %2807 = vmatpush1.msra.mxu0 %v2259
    %2808 = vmatprep.subr.mxu0 %v2268
    %2809 = vmatpush1.msra.mxu0 %v2267
    %2810 = vmatprep.subr.mxu0 %v2276
    %2811 = vmatpush1.msra.mxu0 %v2275
    %2812 = vmatprep.subr.mxu0 %v2284
    %2813 = vmatpush1.msra.mxu0 %v2283
    %2814 = vmatprep.subr.mxu0 %v2292
    %2815 = vmatpush1.msra.mxu0 %v2291
    %2816 = vmatprep.subr.mxu0 %v2300
    %2817 = vmatpush1.msra.mxu0 %v2299
    %2818 = vmatprep.subr.mxu0 %v2308
    %2819 = vmatpush1.msra.mxu0 %v2307
    %2820 = vmatprep.subr.mxu0 %v2316
    %2821 = vmatpush1.msra.mxu0 %v2315
    %2822 = vmatprep.subr.mxu0 %v2324
    %2823 = vmatpush1.msra.mxu0 %v2323
    %2824 = vmatprep.subr.mxu0 %v2332
    %2825 = vmatpush1.msra.mxu0 %v2331
    %2826 = vmatprep.mubr.f32.mxu0 %v117
    %2827 = vmatmul.mubr.f32.gmra.mrb[0].mxu0 %v116
    %v2828 = vpop.f32.mrb[0].mxu0
    %v2829 = vadd.f32 %v2752, %v2828
    %v2830 = vpop.f32.mrb[0].mxu0
    %v2831 = vadd.f32 %v2754, %v2830
    %2832 = vmatprep.mubr.f32.mxu0 %v121
    %2833 = vmatmul.mubr.f32.gmra.mrb[0].mxu0 %v120
    %v2834 = vpop.f32.mrb[0].mxu0
    %v2835 = vadd.f32 %v2758, %v2834
    %v2836 = vpop.f32.mrb[0].mxu0
    %v2837 = vadd.f32 %v2760, %v2836
    %2838 = vdwg.mxu0
    %2839 = vmatprep.subr.mxu0 %v1830
    %2840 = vmatpush1.msra.mxu0 %v1829
    %2841 = vmatprep.subr.mxu0 %v1838
    %2842 = vmatpush1.msra.mxu0 %v1837
    %2843 = vmatprep.subr.mxu0 %v1846
    %2844 = vmatpush1.msra.mxu0 %v1845
    %2845 = vmatprep.subr.mxu0 %v1854
    %2846 = vmatpush1.msra.mxu0 %v1853
    %2847 = vmatprep.subr.mxu0 %v1862
    %2848 = vmatpush1.msra.mxu0 %v1861
    %2849 = vmatprep.subr.mxu0 %v1870
    %2850 = vmatpush1.msra.mxu0 %v1869
    %2851 = vmatprep.subr.mxu0 %v1878
    %2852 = vmatpush1.msra.mxu0 %v1877
    %2853 = vmatprep.subr.mxu0 %v1886
    %2854 = vmatpush1.msra.mxu0 %v1885
    %2855 = vmatprep.subr.mxu0 %v1894
    %2856 = vmatpush1.msra.mxu0 %v1893
    %2857 = vmatprep.subr.mxu0 %v1902
    %2858 = vmatpush1.msra.mxu0 %v1901
    %2859 = vmatprep.subr.mxu0 %v1910
    %2860 = vmatpush1.msra.mxu0 %v1909
    %2861 = vmatprep.subr.mxu0 %v1918
    %2862 = vmatpush1.msra.mxu0 %v1917
    %2863 = vmatprep.subr.mxu0 %v1926
    %2864 = vmatpush1.msra.mxu0 %v1925
    %2865 = vmatprep.subr.mxu0 %v1934
    %2866 = vmatpush1.msra.mxu0 %v1933
    %2867 = vmatprep.subr.mxu0 %v1942
    %2868 = vmatpush1.msra.mxu0 %v1941
    %2869 = vmatprep.subr.mxu0 %v1950
    %2870 = vmatpush1.msra.mxu0 %v1949
    %2871 = vmatprep.subr.mxu0 %v1958
    %2872 = vmatpush1.msra.mxu0 %v1957
    %2873 = vmatprep.subr.mxu0 %v1966
    %2874 = vmatpush1.msra.mxu0 %v1965
    %2875 = vmatprep.subr.mxu0 %v1974
    %2876 = vmatpush1.msra.mxu0 %v1973
    %2877 = vmatprep.subr.mxu0 %v1982
    %2878 = vmatpush1.msra.mxu0 %v1981
    %2879 = vmatprep.subr.mxu0 %v1990
    %2880 = vmatpush1.msra.mxu0 %v1989
    %2881 = vmatprep.subr.mxu0 %v1998
    %2882 = vmatpush1.msra.mxu0 %v1997
    %2883 = vmatprep.subr.mxu0 %v2006
    %2884 = vmatpush1.msra.mxu0 %v2005
    %2885 = vmatprep.subr.mxu0 %v2014
    %2886 = vmatpush1.msra.mxu0 %v2013
    %2887 = vmatprep.subr.mxu0 %v2022
    %2888 = vmatpush1.msra.mxu0 %v2021
    %2889 = vmatprep.subr.mxu0 %v2030
    %2890 = vmatpush1.msra.mxu0 %v2029
    %2891 = vmatprep.subr.mxu0 %v2038
    %2892 = vmatpush1.msra.mxu0 %v2037
    %2893 = vmatprep.subr.mxu0 %v2046
    %2894 = vmatpush1.msra.mxu0 %v2045
    %2895 = vmatprep.subr.mxu0 %v2054
    %2896 = vmatpush1.msra.mxu0 %v2053
    %2897 = vmatprep.subr.mxu0 %v2062
    %2898 = vmatpush1.msra.mxu0 %v2061
    %2899 = vmatprep.subr.mxu0 %v2070
    %2900 = vmatpush1.msra.mxu0 %v2069
    %2901 = vmatprep.subr.mxu0 %v2078
    %2902 = vmatpush1.msra.mxu0 %v2077
    %2903 = vmatprep.mubr.f32.mxu0 %v115
    %2904 = vmatmul.mubr.f32.gmra.mrb[0].mxu0 %v114
    %v2905 = vpop.f32.mrb[0].mxu0
    %v2906 = vadd.f32 %v2364, %v2905
    %v2907 = vpop.f32.mrb[0].mxu0
    %v2908 = vadd.f32 %v2368, %v2907
    %2909 = vmatprep.mubr.f32.mxu0 %v119
    %2910 = vmatmul.mubr.f32.gmra.mrb[0].mxu0 %v118
    %v2911 = vpop.f32.mrb[0].mxu0
    %v2912 = vadd.f32 %v2364, %v2911
    %v2913 = vpop.f32.mrb[0].mxu0
    %v2914 = vadd.f32 %v2368, %v2913
    %2915 = vdwg.mxu0
    %2916 = vmatprep.subr.mxu0 %v2086
    %2917 = vmatpush1.msra.mxu0 %v2085
    %2918 = vmatprep.subr.mxu0 %v2094
    %2919 = vmatpush1.msra.mxu0 %v2093
    %2920 = vmatprep.subr.mxu0 %v2102
    %2921 = vmatpush1.msra.mxu0 %v2101
    %2922 = vmatprep.subr.mxu0 %v2110
    %2923 = vmatpush1.msra.mxu0 %v2109
    %2924 = vmatprep.subr.mxu0 %v2118
    %2925 = vmatpush1.msra.mxu0 %v2117
    %2926 = vmatprep.subr.mxu0 %v2126
    %2927 = vmatpush1.msra.mxu0 %v2125
    %2928 = vmatprep.subr.mxu0 %v2134
    %2929 = vmatpush1.msra.mxu0 %v2133
    %2930 = vmatprep.subr.mxu0 %v2142
    %2931 = vmatpush1.msra.mxu0 %v2141
    %2932 = vmatprep.subr.mxu0 %v2150
    %2933 = vmatpush1.msra.mxu0 %v2149
    %2934 = vmatprep.subr.mxu0 %v2158
    %2935 = vmatpush1.msra.mxu0 %v2157
    %2936 = vmatprep.subr.mxu0 %v2166
    %2937 = vmatpush1.msra.mxu0 %v2165
    %2938 = vmatprep.subr.mxu0 %v2174
    %2939 = vmatpush1.msra.mxu0 %v2173
    %2940 = vmatprep.subr.mxu0 %v2182
    %2941 = vmatpush1.msra.mxu0 %v2181
    %2942 = vmatprep.subr.mxu0 %v2190
    %2943 = vmatpush1.msra.mxu0 %v2189
    %2944 = vmatprep.subr.mxu0 %v2198
    %2945 = vmatpush1.msra.mxu0 %v2197
    %2946 = vmatprep.subr.mxu0 %v2206
    %2947 = vmatpush1.msra.mxu0 %v2205
    %2948 = vmatprep.subr.mxu0 %v2214
    %2949 = vmatpush1.msra.mxu0 %v2213
    %2950 = vmatprep.subr.mxu0 %v2222
    %2951 = vmatpush1.msra.mxu0 %v2221
    %2952 = vmatprep.subr.mxu0 %v2230
    %2953 = vmatpush1.msra.mxu0 %v2229
    %2954 = vmatprep.subr.mxu0 %v2238
    %2955 = vmatpush1.msra.mxu0 %v2237
    %2956 = vmatprep.subr.mxu0 %v2246
    %2957 = vmatpush1.msra.mxu0 %v2245
    %2958 = vmatprep.subr.mxu0 %v2254
    %2959 = vmatpush1.msra.mxu0 %v2253
    %2960 = vmatprep.subr.mxu0 %v2262
    %2961 = vmatpush1.msra.mxu0 %v2261
    %2962 = vmatprep.subr.mxu0 %v2270
    %2963 = vmatpush1.msra.mxu0 %v2269
    %2964 = vmatprep.subr.mxu0 %v2278
    %2965 = vmatpush1.msra.mxu0 %v2277
    %2966 = vmatprep.subr.mxu0 %v2286
    %2967 = vmatpush1.msra.mxu0 %v2285
    %2968 = vmatprep.subr.mxu0 %v2294
    %2969 = vmatpush1.msra.mxu0 %v2293
    %2970 = vmatprep.subr.mxu0 %v2302
    %2971 = vmatpush1.msra.mxu0 %v2301
    %2972 = vmatprep.subr.mxu0 %v2310
    %2973 = vmatpush1.msra.mxu0 %v2309
    %2974 = vmatprep.subr.mxu0 %v2318
    %2975 = vmatpush1.msra.mxu0 %v2317
    %2976 = vmatprep.subr.mxu0 %v2326
    %2977 = vmatpush1.msra.mxu0 %v2325
    %2978 = vmatprep.subr.mxu0 %v2334
    %2979 = vmatpush1.msra.mxu0 %v2333
    %2980 = vmatprep.mubr.f32.mxu0 %v117
    %2981 = vmatmul.mubr.f32.gmra.mrb[0].mxu0 %v116
    %v2982 = vpop.f32.mrb[0].mxu0
    %v2983 = vadd.f32 %v2906, %v2982
    %v2984 = vpop.f32.mrb[0].mxu0
    %v2985 = vadd.f32 %v2908, %v2984
    %2986 = vmatprep.mubr.f32.mxu0 %v121
    %2987 = vmatmul.mubr.f32.gmra.mrb[0].mxu0 %v120
    %v2988 = vpop.f32.mrb[0].mxu0
    %v2989 = vadd.f32 %v2912, %v2988
    %v2990 = vpop.f32.mrb[0].mxu0
    %v2991 = vadd.f32 %v2914, %v2990
    %2992 = vdwg.mxu0
    %v2993 = vmax.f32 %v2521, 0.0
    %v2994 = vmax.f32 %v2523, 0.0
    %v2995 = vmax.f32 %v2675, 0.0
    %v2996 = vmax.f32 %v2677, 0.0
    %v2997 = vmax.f32 %v2829, 0.0
    %v2998 = vmax.f32 %v2831, 0.0
    %v2999 = vmax.f32 %v2983, 0.0
    %v3000 = vmax.f32 %v2985, 0.0
    %v3001 = vmax.f32 %v2527, 0.0
    %v3002 = vmax.f32 %v2529, 0.0
    %v3003 = vmax.f32 %v2681, 0.0
    %v3004 = vmax.f32 %v2683, 0.0
    %v3005 = vmax.f32 %v2835, 0.0
    %v3006 = vmax.f32 %v2837, 0.0
    %v3007 = vmax.f32 %v2989, 0.0
    %v3008 = vmax.f32 %v2991, 0.0
    %v3009 = vld [vmem:[#allocation8 + $0x1000] sm:$0xff]
    %v3010 = vld [vmem:[#allocation8 + $0x1008] sm:$0xff]
    %v3011 = vld [vmem:[#allocation8 + $0x1010] sm:$0xff]
    %v3012 = vld [vmem:[#allocation8 + $0x1018] sm:$0xff]
    %v3013 = vld [vmem:[#allocation8 + $0x1020] sm:$0xff]
    %v3014 = vld [vmem:[#allocation8 + $0x1028] sm:$0xff]
    %v3015 = vld [vmem:[#allocation8 + $0x1030] sm:$0xff]
    %v3016 = vld [vmem:[#allocation8 + $0x1038] sm:$0xff]
    %v3017 = vld [vmem:[#allocation8 + $0x1040] sm:$0xff]
    %v3018 = vld [vmem:[#allocation8 + $0x1048] sm:$0xff]
    %v3019 = vld [vmem:[#allocation8 + $0x1050] sm:$0xff]
    %v3020 = vld [vmem:[#allocation8 + $0x1058] sm:$0xff]
    %v3021 = vld [vmem:[#allocation8 + $0x1060] sm:$0xff]
    %v3022 = vld [vmem:[#allocation8 + $0x1068] sm:$0xff]
    %v3023 = vld [vmem:[#allocation8 + $0x1070] sm:$0xff]
    %v3024 = vld [vmem:[#allocation8 + $0x1078] sm:$0xff]
    %v3025 = vld [vmem:[#allocation8 + $0x1080] sm:$0xff]
    %v3026 = vld [vmem:[#allocation8 + $0x1088] sm:$0xff]
    %v3027 = vld [vmem:[#allocation8 + $0x1090] sm:$0xff]
    %v3028 = vld [vmem:[#allocation8 + $0x1098] sm:$0xff]
    %v3029 = vld [vmem:[#allocation8 + $0x10a0] sm:$0xff]
    %v3030 = vld [vmem:[#allocation8 + $0x10a8] sm:$0xff]
    %v3031 = vld [vmem:[#allocation8 + $0x10b0] sm:$0xff]
    %v3032 = vld [vmem:[#allocation8 + $0x10b8] sm:$0xff]
    %v3033 = vld [vmem:[#allocation8 + $0x10c0] sm:$0xff]
    %v3034 = vld [vmem:[#allocation8 + $0x10c8] sm:$0xff]
    %v3035 = vld [vmem:[#allocation8 + $0x10d0] sm:$0xff]
    %v3036 = vld [vmem:[#allocation8 + $0x10d8] sm:$0xff]
    %v3037 = vld [vmem:[#allocation8 + $0x10e0] sm:$0xff]
    %v3038 = vld [vmem:[#allocation8 + $0x10e8] sm:$0xff]
    %v3039 = vld [vmem:[#allocation8 + $0x10f0] sm:$0xff]
    %v3040 = vld [vmem:[#allocation8 + $0x10f8] sm:$0xff]
    %v3041 = vld [vmem:[#allocation8 + $0x1100] sm:$0xff]
    %v3042 = vld [vmem:[#allocation8 + $0x1108] sm:$0xff]
    %v3043 = vld [vmem:[#allocation8 + $0x1110] sm:$0xff]
    %v3044 = vld [vmem:[#allocation8 + $0x1118] sm:$0xff]
    %v3045 = vld [vmem:[#allocation8 + $0x1120] sm:$0xff]
    %v3046 = vld [vmem:[#allocation8 + $0x1128] sm:$0xff]
    %v3047 = vld [vmem:[#allocation8 + $0x1130] sm:$0xff]
    %v3048 = vld [vmem:[#allocation8 + $0x1138] sm:$0xff]
    %v3049 = vld [vmem:[#allocation8 + $0x1140] sm:$0xff]
    %v3050 = vld [vmem:[#allocation8 + $0x1148] sm:$0xff]
    %v3051 = vld [vmem:[#allocation8 + $0x1150] sm:$0xff]
    %v3052 = vld [vmem:[#allocation8 + $0x1158] sm:$0xff]
    %v3053 = vld [vmem:[#allocation8 + $0x1160] sm:$0xff]
    %v3054 = vld [vmem:[#allocation8 + $0x1168] sm:$0xff]
    %v3055 = vld [vmem:[#allocation8 + $0x1170] sm:$0xff]
    %v3056 = vld [vmem:[#allocation8 + $0x1178] sm:$0xff]
    %v3057 = vld [vmem:[#allocation8 + $0x1180] sm:$0xff]
    %v3058 = vld [vmem:[#allocation8 + $0x1188] sm:$0xff]
    %v3059 = vld [vmem:[#allocation8 + $0x1190] sm:$0xff]
    %v3060 = vld [vmem:[#allocation8 + $0x1198] sm:$0xff]
    %v3061 = vld [vmem:[#allocation8 + $0x11a0] sm:$0xff]
    %v3062 = vld [vmem:[#allocation8 + $0x11a8] sm:$0xff]
    %v3063 = vld [vmem:[#allocation8 + $0x11b0] sm:$0xff]
    %v3064 = vld [vmem:[#allocation8 + $0x11b8] sm:$0xff]
    %v3065 = vld [vmem:[#allocation8 + $0x11c0] sm:$0xff]
    %v3066 = vld [vmem:[#allocation8 + $0x11c8] sm:$0xff]
    %v3067 = vld [vmem:[#allocation8 + $0x11d0] sm:$0xff]
    %v3068 = vld [vmem:[#allocation8 + $0x11d8] sm:$0xff]
    %v3069 = vld [vmem:[#allocation8 + $0x11e0] sm:$0xff]
    %v3070 = vld [vmem:[#allocation8 + $0x11e8] sm:$0xff]
    %v3071 = vld [vmem:[#allocation8 + $0x11f0] sm:$0xff]
    %v3072 = vld [vmem:[#allocation8 + $0x11f8] sm:$0xff]
    %v3073 = vld [vmem:[#allocation8 + $0x1200] sm:$0xff]
    %v3074 = vld [vmem:[#allocation8 + $0x1208] sm:$0xff]
    %v3075 = vld [vmem:[#allocation8 + $0x1210] sm:$0xff]
    %v3076 = vld [vmem:[#allocation8 + $0x1218] sm:$0xff]
    %v3077 = vld [vmem:[#allocation8 + $0x1220] sm:$0xff]
    %v3078 = vld [vmem:[#allocation8 + $0x1228] sm:$0xff]
    %v3079 = vld [vmem:[#allocation8 + $0x1230] sm:$0xff]
    %v3080 = vld [vmem:[#allocation8 + $0x1238] sm:$0xff]
    %v3081 = vld [vmem:[#allocation8 + $0x1240] sm:$0xff]
    %v3082 = vld [vmem:[#allocation8 + $0x1248] sm:$0xff]
    %v3083 = vld [vmem:[#allocation8 + $0x1250] sm:$0xff]
    %v3084 = vld [vmem:[#allocation8 + $0x1258] sm:$0xff]
    %v3085 = vld [vmem:[#allocation8 + $0x1260] sm:$0xff]
    %v3086 = vld [vmem:[#allocation8 + $0x1268] sm:$0xff]
    %v3087 = vld [vmem:[#allocation8 + $0x1270] sm:$0xff]
    %v3088 = vld [vmem:[#allocation8 + $0x1278] sm:$0xff]
    %v3089 = vld [vmem:[#allocation8 + $0x1280] sm:$0xff]
    %v3090 = vld [vmem:[#allocation8 + $0x1288] sm:$0xff]
    %v3091 = vld [vmem:[#allocation8 + $0x1290] sm:$0xff]
    %v3092 = vld [vmem:[#allocation8 + $0x1298] sm:$0xff]
    %v3093 = vld [vmem:[#allocation8 + $0x12a0] sm:$0xff]
    %v3094 = vld [vmem:[#allocation8 + $0x12a8] sm:$0xff]
    %v3095 = vld [vmem:[#allocation8 + $0x12b0] sm:$0xff]
    %v3096 = vld [vmem:[#allocation8 + $0x12b8] sm:$0xff]
    %v3097 = vld [vmem:[#allocation8 + $0x12c0] sm:$0xff]
    %v3098 = vld [vmem:[#allocation8 + $0x12c8] sm:$0xff]
    %v3099 = vld [vmem:[#allocation8 + $0x12d0] sm:$0xff]
    %v3100 = vld [vmem:[#allocation8 + $0x12d8] sm:$0xff]
    %v3101 = vld [vmem:[#allocation8 + $0x12e0] sm:$0xff]
    %v3102 = vld [vmem:[#allocation8 + $0x12e8] sm:$0xff]
    %v3103 = vld [vmem:[#allocation8 + $0x12f0] sm:$0xff]
    %v3104 = vld [vmem:[#allocation8 + $0x12f8] sm:$0xff]
    %v3105 = vld [vmem:[#allocation8 + $0x1300] sm:$0xff]
    %v3106 = vld [vmem:[#allocation8 + $0x1308] sm:$0xff]
    %v3107 = vld [vmem:[#allocation8 + $0x1310] sm:$0xff]
    %v3108 = vld [vmem:[#allocation8 + $0x1318] sm:$0xff]
    %v3109 = vld [vmem:[#allocation8 + $0x1320] sm:$0xff]
    %v3110 = vld [vmem:[#allocation8 + $0x1328] sm:$0xff]
    %v3111 = vld [vmem:[#allocation8 + $0x1330] sm:$0xff]
    %v3112 = vld [vmem:[#allocation8 + $0x1338] sm:$0xff]
    %v3113 = vld [vmem:[#allocation8 + $0x1340] sm:$0xff]
    %v3114 = vld [vmem:[#allocation8 + $0x1348] sm:$0xff]
    %v3115 = vld [vmem:[#allocation8 + $0x1350] sm:$0xff]
    %v3116 = vld [vmem:[#allocation8 + $0x1358] sm:$0xff]
    %v3117 = vld [vmem:[#allocation8 + $0x1360] sm:$0xff]
    %v3118 = vld [vmem:[#allocation8 + $0x1368] sm:$0xff]
    %v3119 = vld [vmem:[#allocation8 + $0x1370] sm:$0xff]
    %v3120 = vld [vmem:[#allocation8 + $0x1378] sm:$0xff]
    %v3121 = vld [vmem:[#allocation8 + $0x1380] sm:$0xff]
    %v3122 = vld [vmem:[#allocation8 + $0x1388] sm:$0xff]
    %v3123 = vld [vmem:[#allocation8 + $0x1390] sm:$0xff]
    %v3124 = vld [vmem:[#allocation8 + $0x1398] sm:$0xff]
    %v3125 = vld [vmem:[#allocation8 + $0x13a0] sm:$0xff]
    %v3126 = vld [vmem:[#allocation8 + $0x13a8] sm:$0xff]
    %v3127 = vld [vmem:[#allocation8 + $0x13b0] sm:$0xff]
    %v3128 = vld [vmem:[#allocation8 + $0x13b8] sm:$0xff]
    %v3129 = vld [vmem:[#allocation8 + $0x13c0] sm:$0xff]
    %v3130 = vld [vmem:[#allocation8 + $0x13c8] sm:$0xff]
    %v3131 = vld [vmem:[#allocation8 + $0x13d0] sm:$0xff]
    %v3132 = vld [vmem:[#allocation8 + $0x13d8] sm:$0xff]
    %v3133 = vld [vmem:[#allocation8 + $0x13e0] sm:$0xff]
    %v3134 = vld [vmem:[#allocation8 + $0x13e8] sm:$0xff]
    %v3135 = vld [vmem:[#allocation8 + $0x13f0] sm:$0xff]
    %v3136 = vld [vmem:[#allocation8 + $0x13f8] sm:$0xff]
    %v3137 = vld [vmem:[#allocation8 + $0x1400] sm:$0xff]
    %v3138 = vld [vmem:[#allocation8 + $0x1408] sm:$0xff]
    %v3139 = vld [vmem:[#allocation8 + $0x1410] sm:$0xff]
    %v3140 = vld [vmem:[#allocation8 + $0x1418] sm:$0xff]
    %v3141 = vld [vmem:[#allocation8 + $0x1420] sm:$0xff]
    %v3142 = vld [vmem:[#allocation8 + $0x1428] sm:$0xff]
    %v3143 = vld [vmem:[#allocation8 + $0x1430] sm:$0xff]
    %v3144 = vld [vmem:[#allocation8 + $0x1438] sm:$0xff]
    %v3145 = vld [vmem:[#allocation8 + $0x1440] sm:$0xff]
    %v3146 = vld [vmem:[#allocation8 + $0x1448] sm:$0xff]
    %v3147 = vld [vmem:[#allocation8 + $0x1450] sm:$0xff]
    %v3148 = vld [vmem:[#allocation8 + $0x1458] sm:$0xff]
    %v3149 = vld [vmem:[#allocation8 + $0x1460] sm:$0xff]
    %v3150 = vld [vmem:[#allocation8 + $0x1468] sm:$0xff]
    %v3151 = vld [vmem:[#allocation8 + $0x1470] sm:$0xff]
    %v3152 = vld [vmem:[#allocation8 + $0x1478] sm:$0xff]
    %v3153 = vld [vmem:[#allocation8 + $0x1480] sm:$0xff]
    %v3154 = vld [vmem:[#allocation8 + $0x1488] sm:$0xff]
    %v3155 = vld [vmem:[#allocation8 + $0x1490] sm:$0xff]
    %v3156 = vld [vmem:[#allocation8 + $0x1498] sm:$0xff]
    %v3157 = vld [vmem:[#allocation8 + $0x14a0] sm:$0xff]
    %v3158 = vld [vmem:[#allocation8 + $0x14a8] sm:$0xff]
    %v3159 = vld [vmem:[#allocation8 + $0x14b0] sm:$0xff]
    %v3160 = vld [vmem:[#allocation8 + $0x14b8] sm:$0xff]
    %v3161 = vld [vmem:[#allocation8 + $0x14c0] sm:$0xff]
    %v3162 = vld [vmem:[#allocation8 + $0x14c8] sm:$0xff]
    %v3163 = vld [vmem:[#allocation8 + $0x14d0] sm:$0xff]
    %v3164 = vld [vmem:[#allocation8 + $0x14d8] sm:$0xff]
    %v3165 = vld [vmem:[#allocation8 + $0x14e0] sm:$0xff]
    %v3166 = vld [vmem:[#allocation8 + $0x14e8] sm:$0xff]
    %v3167 = vld [vmem:[#allocation8 + $0x14f0] sm:$0xff]
    %v3168 = vld [vmem:[#allocation8 + $0x14f8] sm:$0xff]
    %v3169 = vld [vmem:[#allocation8 + $0x1500] sm:$0xff]
    %v3170 = vld [vmem:[#allocation8 + $0x1508] sm:$0xff]
    %v3171 = vld [vmem:[#allocation8 + $0x1510] sm:$0xff]
    %v3172 = vld [vmem:[#allocation8 + $0x1518] sm:$0xff]
    %v3173 = vld [vmem:[#allocation8 + $0x1520] sm:$0xff]
    %v3174 = vld [vmem:[#allocation8 + $0x1528] sm:$0xff]
    %v3175 = vld [vmem:[#allocation8 + $0x1530] sm:$0xff]
    %v3176 = vld [vmem:[#allocation8 + $0x1538] sm:$0xff]
    %v3177 = vld [vmem:[#allocation8 + $0x1540] sm:$0xff]
    %v3178 = vld [vmem:[#allocation8 + $0x1548] sm:$0xff]
    %v3179 = vld [vmem:[#allocation8 + $0x1550] sm:$0xff]
    %v3180 = vld [vmem:[#allocation8 + $0x1558] sm:$0xff]
    %v3181 = vld [vmem:[#allocation8 + $0x1560] sm:$0xff]
    %v3182 = vld [vmem:[#allocation8 + $0x1568] sm:$0xff]
    %v3183 = vld [vmem:[#allocation8 + $0x1570] sm:$0xff]
    %v3184 = vld [vmem:[#allocation8 + $0x1578] sm:$0xff]
    %v3185 = vld [vmem:[#allocation8 + $0x1580] sm:$0xff]
    %v3186 = vld [vmem:[#allocation8 + $0x1588] sm:$0xff]
    %v3187 = vld [vmem:[#allocation8 + $0x1590] sm:$0xff]
    %v3188 = vld [vmem:[#allocation8 + $0x1598] sm:$0xff]
    %v3189 = vld [vmem:[#allocation8 + $0x15a0] sm:$0xff]
    %v3190 = vld [vmem:[#allocation8 + $0x15a8] sm:$0xff]
    %v3191 = vld [vmem:[#allocation8 + $0x15b0] sm:$0xff]
    %v3192 = vld [vmem:[#allocation8 + $0x15b8] sm:$0xff]
    %v3193 = vld [vmem:[#allocation8 + $0x15c0] sm:$0xff]
    %v3194 = vld [vmem:[#allocation8 + $0x15c8] sm:$0xff]
    %v3195 = vld [vmem:[#allocation8 + $0x15d0] sm:$0xff]
    %v3196 = vld [vmem:[#allocation8 + $0x15d8] sm:$0xff]
    %v3197 = vld [vmem:[#allocation8 + $0x15e0] sm:$0xff]
    %v3198 = vld [vmem:[#allocation8 + $0x15e8] sm:$0xff]
    %v3199 = vld [vmem:[#allocation8 + $0x15f0] sm:$0xff]
    %v3200 = vld [vmem:[#allocation8 + $0x15f8] sm:$0xff]
    %v3201 = vld [vmem:[#allocation8 + $0x1600] sm:$0xff]
    %v3202 = vld [vmem:[#allocation8 + $0x1608] sm:$0xff]
    %v3203 = vld [vmem:[#allocation8 + $0x1610] sm:$0xff]
    %v3204 = vld [vmem:[#allocation8 + $0x1618] sm:$0xff]
    %v3205 = vld [vmem:[#allocation8 + $0x1620] sm:$0xff]
    %v3206 = vld [vmem:[#allocation8 + $0x1628] sm:$0xff]
    %v3207 = vld [vmem:[#allocation8 + $0x1630] sm:$0xff]
    %v3208 = vld [vmem:[#allocation8 + $0x1638] sm:$0xff]
    %v3209 = vld [vmem:[#allocation8 + $0x1640] sm:$0xff]
    %v3210 = vld [vmem:[#allocation8 + $0x1648] sm:$0xff]
    %v3211 = vld [vmem:[#allocation8 + $0x1650] sm:$0xff]
    %v3212 = vld [vmem:[#allocation8 + $0x1658] sm:$0xff]
    %v3213 = vld [vmem:[#allocation8 + $0x1660] sm:$0xff]
    %v3214 = vld [vmem:[#allocation8 + $0x1668] sm:$0xff]
    %v3215 = vld [vmem:[#allocation8 + $0x1670] sm:$0xff]
    %v3216 = vld [vmem:[#allocation8 + $0x1678] sm:$0xff]
    %v3217 = vld [vmem:[#allocation8 + $0x1680] sm:$0xff]
    %v3218 = vld [vmem:[#allocation8 + $0x1688] sm:$0xff]
    %v3219 = vld [vmem:[#allocation8 + $0x1690] sm:$0xff]
    %v3220 = vld [vmem:[#allocation8 + $0x1698] sm:$0xff]
    %v3221 = vld [vmem:[#allocation8 + $0x16a0] sm:$0xff]
    %v3222 = vld [vmem:[#allocation8 + $0x16a8] sm:$0xff]
    %v3223 = vld [vmem:[#allocation8 + $0x16b0] sm:$0xff]
    %v3224 = vld [vmem:[#allocation8 + $0x16b8] sm:$0xff]
    %v3225 = vld [vmem:[#allocation8 + $0x16c0] sm:$0xff]
    %v3226 = vld [vmem:[#allocation8 + $0x16c8] sm:$0xff]
    %v3227 = vld [vmem:[#allocation8 + $0x16d0] sm:$0xff]
    %v3228 = vld [vmem:[#allocation8 + $0x16d8] sm:$0xff]
    %v3229 = vld [vmem:[#allocation8 + $0x16e0] sm:$0xff]
    %v3230 = vld [vmem:[#allocation8 + $0x16e8] sm:$0xff]
    %v3231 = vld [vmem:[#allocation8 + $0x16f0] sm:$0xff]
    %v3232 = vld [vmem:[#allocation8 + $0x16f8] sm:$0xff]
    %v3233 = vld [vmem:[#allocation8 + $0x1700] sm:$0xff]
    %v3234 = vld [vmem:[#allocation8 + $0x1708] sm:$0xff]
    %v3235 = vld [vmem:[#allocation8 + $0x1710] sm:$0xff]
    %v3236 = vld [vmem:[#allocation8 + $0x1718] sm:$0xff]
    %v3237 = vld [vmem:[#allocation8 + $0x1720] sm:$0xff]
    %v3238 = vld [vmem:[#allocation8 + $0x1728] sm:$0xff]
    %v3239 = vld [vmem:[#allocation8 + $0x1730] sm:$0xff]
    %v3240 = vld [vmem:[#allocation8 + $0x1738] sm:$0xff]
    %v3241 = vld [vmem:[#allocation8 + $0x1740] sm:$0xff]
    %v3242 = vld [vmem:[#allocation8 + $0x1748] sm:$0xff]
    %v3243 = vld [vmem:[#allocation8 + $0x1750] sm:$0xff]
    %v3244 = vld [vmem:[#allocation8 + $0x1758] sm:$0xff]
    %v3245 = vld [vmem:[#allocation8 + $0x1760] sm:$0xff]
    %v3246 = vld [vmem:[#allocation8 + $0x1768] sm:$0xff]
    %v3247 = vld [vmem:[#allocation8 + $0x1770] sm:$0xff]
    %v3248 = vld [vmem:[#allocation8 + $0x1778] sm:$0xff]
    %v3249 = vld [vmem:[#allocation8 + $0x1780] sm:$0xff]
    %v3250 = vld [vmem:[#allocation8 + $0x1788] sm:$0xff]
    %v3251 = vld [vmem:[#allocation8 + $0x1790] sm:$0xff]
    %v3252 = vld [vmem:[#allocation8 + $0x1798] sm:$0xff]
    %v3253 = vld [vmem:[#allocation8 + $0x17a0] sm:$0xff]
    %v3254 = vld [vmem:[#allocation8 + $0x17a8] sm:$0xff]
    %v3255 = vld [vmem:[#allocation8 + $0x17b0] sm:$0xff]
    %v3256 = vld [vmem:[#allocation8 + $0x17b8] sm:$0xff]
    %v3257 = vld [vmem:[#allocation8 + $0x17c0] sm:$0xff]
    %v3258 = vld [vmem:[#allocation8 + $0x17c8] sm:$0xff]
    %v3259 = vld [vmem:[#allocation8 + $0x17d0] sm:$0xff]
    %v3260 = vld [vmem:[#allocation8 + $0x17d8] sm:$0xff]
    %v3261 = vld [vmem:[#allocation8 + $0x17e0] sm:$0xff]
    %v3262 = vld [vmem:[#allocation8 + $0x17e8] sm:$0xff]
    %v3263 = vld [vmem:[#allocation8 + $0x17f0] sm:$0xff]
    %v3264 = vld [vmem:[#allocation8 + $0x17f8] sm:$0xff]
    %v3265 = vld [vmem:[#allocation8 + $0x1800] sm:$0xff]
    %v3266 = vld [vmem:[#allocation8 + $0x1808] sm:$0xff]
    %v3267 = vld [vmem:[#allocation8 + $0x1810] sm:$0xff]
    %v3268 = vld [vmem:[#allocation8 + $0x1818] sm:$0xff]
    %v3269 = vld [vmem:[#allocation8 + $0x1820] sm:$0xff]
    %v3270 = vld [vmem:[#allocation8 + $0x1828] sm:$0xff]
    %v3271 = vld [vmem:[#allocation8 + $0x1830] sm:$0xff]
    %v3272 = vld [vmem:[#allocation8 + $0x1838] sm:$0xff]
    %v3273 = vld [vmem:[#allocation8 + $0x1840] sm:$0xff]
    %v3274 = vld [vmem:[#allocation8 + $0x1848] sm:$0xff]
    %v3275 = vld [vmem:[#allocation8 + $0x1850] sm:$0xff]
    %v3276 = vld [vmem:[#allocation8 + $0x1858] sm:$0xff]
    %v3277 = vld [vmem:[#allocation8 + $0x1860] sm:$0xff]
    %v3278 = vld [vmem:[#allocation8 + $0x1868] sm:$0xff]
    %v3279 = vld [vmem:[#allocation8 + $0x1870] sm:$0xff]
    %v3280 = vld [vmem:[#allocation8 + $0x1878] sm:$0xff]
    %v3281 = vld [vmem:[#allocation8 + $0x1880] sm:$0xff]
    %v3282 = vld [vmem:[#allocation8 + $0x1888] sm:$0xff]
    %v3283 = vld [vmem:[#allocation8 + $0x1890] sm:$0xff]
    %v3284 = vld [vmem:[#allocation8 + $0x1898] sm:$0xff]
    %v3285 = vld [vmem:[#allocation8 + $0x18a0] sm:$0xff]
    %v3286 = vld [vmem:[#allocation8 + $0x18a8] sm:$0xff]
    %v3287 = vld [vmem:[#allocation8 + $0x18b0] sm:$0xff]
    %v3288 = vld [vmem:[#allocation8 + $0x18b8] sm:$0xff]
    %v3289 = vld [vmem:[#allocation8 + $0x18c0] sm:$0xff]
    %v3290 = vld [vmem:[#allocation8 + $0x18c8] sm:$0xff]
    %v3291 = vld [vmem:[#allocation8 + $0x18d0] sm:$0xff]
    %v3292 = vld [vmem:[#allocation8 + $0x18d8] sm:$0xff]
    %v3293 = vld [vmem:[#allocation8 + $0x18e0] sm:$0xff]
    %v3294 = vld [vmem:[#allocation8 + $0x18e8] sm:$0xff]
    %v3295 = vld [vmem:[#allocation8 + $0x18f0] sm:$0xff]
    %v3296 = vld [vmem:[#allocation8 + $0x18f8] sm:$0xff]
    %v3297 = vld [vmem:[#allocation8 + $0x1900] sm:$0xff]
    %v3298 = vld [vmem:[#allocation8 + $0x1908] sm:$0xff]
    %v3299 = vld [vmem:[#allocation8 + $0x1910] sm:$0xff]
    %v3300 = vld [vmem:[#allocation8 + $0x1918] sm:$0xff]
    %v3301 = vld [vmem:[#allocation8 + $0x1920] sm:$0xff]
    %v3302 = vld [vmem:[#allocation8 + $0x1928] sm:$0xff]
    %v3303 = vld [vmem:[#allocation8 + $0x1930] sm:$0xff]
    %v3304 = vld [vmem:[#allocation8 + $0x1938] sm:$0xff]
    %v3305 = vld [vmem:[#allocation8 + $0x1940] sm:$0xff]
    %v3306 = vld [vmem:[#allocation8 + $0x1948] sm:$0xff]
    %v3307 = vld [vmem:[#allocation8 + $0x1950] sm:$0xff]
    %v3308 = vld [vmem:[#allocation8 + $0x1958] sm:$0xff]
    %v3309 = vld [vmem:[#allocation8 + $0x1960] sm:$0xff]
    %v3310 = vld [vmem:[#allocation8 + $0x1968] sm:$0xff]
    %v3311 = vld [vmem:[#allocation8 + $0x1970] sm:$0xff]
    %v3312 = vld [vmem:[#allocation8 + $0x1978] sm:$0xff]
    %v3313 = vld [vmem:[#allocation8 + $0x1980] sm:$0xff]
    %v3314 = vld [vmem:[#allocation8 + $0x1988] sm:$0xff]
    %v3315 = vld [vmem:[#allocation8 + $0x1990] sm:$0xff]
    %v3316 = vld [vmem:[#allocation8 + $0x1998] sm:$0xff]
    %v3317 = vld [vmem:[#allocation8 + $0x19a0] sm:$0xff]
    %v3318 = vld [vmem:[#allocation8 + $0x19a8] sm:$0xff]
    %v3319 = vld [vmem:[#allocation8 + $0x19b0] sm:$0xff]
    %v3320 = vld [vmem:[#allocation8 + $0x19b8] sm:$0xff]
    %v3321 = vld [vmem:[#allocation8 + $0x19c0] sm:$0xff]
    %v3322 = vld [vmem:[#allocation8 + $0x19c8] sm:$0xff]
    %v3323 = vld [vmem:[#allocation8 + $0x19d0] sm:$0xff]
    %v3324 = vld [vmem:[#allocation8 + $0x19d8] sm:$0xff]
    %v3325 = vld [vmem:[#allocation8 + $0x19e0] sm:$0xff]
    %v3326 = vld [vmem:[#allocation8 + $0x19e8] sm:$0xff]
    %v3327 = vld [vmem:[#allocation8 + $0x19f0] sm:$0xff]
    %v3328 = vld [vmem:[#allocation8 + $0x19f8] sm:$0xff]
    %v3329 = vld [vmem:[#allocation8 + $0x1a00] sm:$0xff]
    %v3330 = vld [vmem:[#allocation8 + $0x1a08] sm:$0xff]
    %v3331 = vld [vmem:[#allocation8 + $0x1a10] sm:$0xff]
    %v3332 = vld [vmem:[#allocation8 + $0x1a18] sm:$0xff]
    %v3333 = vld [vmem:[#allocation8 + $0x1a20] sm:$0xff]
    %v3334 = vld [vmem:[#allocation8 + $0x1a28] sm:$0xff]
    %v3335 = vld [vmem:[#allocation8 + $0x1a30] sm:$0xff]
    %v3336 = vld [vmem:[#allocation8 + $0x1a38] sm:$0xff]
    %v3337 = vld [vmem:[#allocation8 + $0x1a40] sm:$0xff]
    %v3338 = vld [vmem:[#allocation8 + $0x1a48] sm:$0xff]
    %v3339 = vld [vmem:[#allocation8 + $0x1a50] sm:$0xff]
    %v3340 = vld [vmem:[#allocation8 + $0x1a58] sm:$0xff]
    %v3341 = vld [vmem:[#allocation8 + $0x1a60] sm:$0xff]
    %v3342 = vld [vmem:[#allocation8 + $0x1a68] sm:$0xff]
    %v3343 = vld [vmem:[#allocation8 + $0x1a70] sm:$0xff]
    %v3344 = vld [vmem:[#allocation8 + $0x1a78] sm:$0xff]
    %v3345 = vld [vmem:[#allocation8 + $0x1a80] sm:$0xff]
    %v3346 = vld [vmem:[#allocation8 + $0x1a88] sm:$0xff]
    %v3347 = vld [vmem:[#allocation8 + $0x1a90] sm:$0xff]
    %v3348 = vld [vmem:[#allocation8 + $0x1a98] sm:$0xff]
    %v3349 = vld [vmem:[#allocation8 + $0x1aa0] sm:$0xff]
    %v3350 = vld [vmem:[#allocation8 + $0x1aa8] sm:$0xff]
    %v3351 = vld [vmem:[#allocation8 + $0x1ab0] sm:$0xff]
    %v3352 = vld [vmem:[#allocation8 + $0x1ab8] sm:$0xff]
    %v3353 = vld [vmem:[#allocation8 + $0x1ac0] sm:$0xff]
    %v3354 = vld [vmem:[#allocation8 + $0x1ac8] sm:$0xff]
    %v3355 = vld [vmem:[#allocation8 + $0x1ad0] sm:$0xff]
    %v3356 = vld [vmem:[#allocation8 + $0x1ad8] sm:$0xff]
    %v3357 = vld [vmem:[#allocation8 + $0x1ae0] sm:$0xff]
    %v3358 = vld [vmem:[#allocation8 + $0x1ae8] sm:$0xff]
    %v3359 = vld [vmem:[#allocation8 + $0x1af0] sm:$0xff]
    %v3360 = vld [vmem:[#allocation8 + $0x1af8] sm:$0xff]
    %v3361 = vld [vmem:[#allocation8 + $0x1b00] sm:$0xff]
    %v3362 = vld [vmem:[#allocation8 + $0x1b08] sm:$0xff]
    %v3363 = vld [vmem:[#allocation8 + $0x1b10] sm:$0xff]
    %v3364 = vld [vmem:[#allocation8 + $0x1b18] sm:$0xff]
    %v3365 = vld [vmem:[#allocation8 + $0x1b20] sm:$0xff]
    %v3366 = vld [vmem:[#allocation8 + $0x1b28] sm:$0xff]
    %v3367 = vld [vmem:[#allocation8 + $0x1b30] sm:$0xff]
    %v3368 = vld [vmem:[#allocation8 + $0x1b38] sm:$0xff]
    %v3369 = vld [vmem:[#allocation8 + $0x1b40] sm:$0xff]
    %v3370 = vld [vmem:[#allocation8 + $0x1b48] sm:$0xff]
    %v3371 = vld [vmem:[#allocation8 + $0x1b50] sm:$0xff]
    %v3372 = vld [vmem:[#allocation8 + $0x1b58] sm:$0xff]
    %v3373 = vld [vmem:[#allocation8 + $0x1b60] sm:$0xff]
    %v3374 = vld [vmem:[#allocation8 + $0x1b68] sm:$0xff]
    %v3375 = vld [vmem:[#allocation8 + $0x1b70] sm:$0xff]
    %v3376 = vld [vmem:[#allocation8 + $0x1b78] sm:$0xff]
    %v3377 = vld [vmem:[#allocation8 + $0x1b80] sm:$0xff]
    %v3378 = vld [vmem:[#allocation8 + $0x1b88] sm:$0xff]
    %v3379 = vld [vmem:[#allocation8 + $0x1b90] sm:$0xff]
    %v3380 = vld [vmem:[#allocation8 + $0x1b98] sm:$0xff]
    %v3381 = vld [vmem:[#allocation8 + $0x1ba0] sm:$0xff]
    %v3382 = vld [vmem:[#allocation8 + $0x1ba8] sm:$0xff]
    %v3383 = vld [vmem:[#allocation8 + $0x1bb0] sm:$0xff]
    %v3384 = vld [vmem:[#allocation8 + $0x1bb8] sm:$0xff]
    %v3385 = vld [vmem:[#allocation8 + $0x1bc0] sm:$0xff]
    %v3386 = vld [vmem:[#allocation8 + $0x1bc8] sm:$0xff]
    %v3387 = vld [vmem:[#allocation8 + $0x1bd0] sm:$0xff]
    %v3388 = vld [vmem:[#allocation8 + $0x1bd8] sm:$0xff]
    %v3389 = vld [vmem:[#allocation8 + $0x1be0] sm:$0xff]
    %v3390 = vld [vmem:[#allocation8 + $0x1be8] sm:$0xff]
    %v3391 = vld [vmem:[#allocation8 + $0x1bf0] sm:$0xff]
    %v3392 = vld [vmem:[#allocation8 + $0x1bf8] sm:$0xff]
    %v3393 = vld [vmem:[#allocation8 + $0x1c00] sm:$0xff]
    %v3394 = vld [vmem:[#allocation8 + $0x1c08] sm:$0xff]
    %v3395 = vld [vmem:[#allocation8 + $0x1c10] sm:$0xff]
    %v3396 = vld [vmem:[#allocation8 + $0x1c18] sm:$0xff]
    %v3397 = vld [vmem:[#allocation8 + $0x1c20] sm:$0xff]
    %v3398 = vld [vmem:[#allocation8 + $0x1c28] sm:$0xff]
    %v3399 = vld [vmem:[#allocation8 + $0x1c30] sm:$0xff]
    %v3400 = vld [vmem:[#allocation8 + $0x1c38] sm:$0xff]
    %v3401 = vld [vmem:[#allocation8 + $0x1c40] sm:$0xff]
    %v3402 = vld [vmem:[#allocation8 + $0x1c48] sm:$0xff]
    %v3403 = vld [vmem:[#allocation8 + $0x1c50] sm:$0xff]
    %v3404 = vld [vmem:[#allocation8 + $0x1c58] sm:$0xff]
    %v3405 = vld [vmem:[#allocation8 + $0x1c60] sm:$0xff]
    %v3406 = vld [vmem:[#allocation8 + $0x1c68] sm:$0xff]
    %v3407 = vld [vmem:[#allocation8 + $0x1c70] sm:$0xff]
    %v3408 = vld [vmem:[#allocation8 + $0x1c78] sm:$0xff]
    %v3409 = vld [vmem:[#allocation8 + $0x1c80] sm:$0xff]
    %v3410 = vld [vmem:[#allocation8 + $0x1c88] sm:$0xff]
    %v3411 = vld [vmem:[#allocation8 + $0x1c90] sm:$0xff]
    %v3412 = vld [vmem:[#allocation8 + $0x1c98] sm:$0xff]
    %v3413 = vld [vmem:[#allocation8 + $0x1ca0] sm:$0xff]
    %v3414 = vld [vmem:[#allocation8 + $0x1ca8] sm:$0xff]
    %v3415 = vld [vmem:[#allocation8 + $0x1cb0] sm:$0xff]
    %v3416 = vld [vmem:[#allocation8 + $0x1cb8] sm:$0xff]
    %v3417 = vld [vmem:[#allocation8 + $0x1cc0] sm:$0xff]
    %v3418 = vld [vmem:[#allocation8 + $0x1cc8] sm:$0xff]
    %v3419 = vld [vmem:[#allocation8 + $0x1cd0] sm:$0xff]
    %v3420 = vld [vmem:[#allocation8 + $0x1cd8] sm:$0xff]
    %v3421 = vld [vmem:[#allocation8 + $0x1ce0] sm:$0xff]
    %v3422 = vld [vmem:[#allocation8 + $0x1ce8] sm:$0xff]
    %v3423 = vld [vmem:[#allocation8 + $0x1cf0] sm:$0xff]
    %v3424 = vld [vmem:[#allocation8 + $0x1cf8] sm:$0xff]
    %v3425 = vld [vmem:[#allocation8 + $0x1d00] sm:$0xff]
    %v3426 = vld [vmem:[#allocation8 + $0x1d08] sm:$0xff]
    %v3427 = vld [vmem:[#allocation8 + $0x1d10] sm:$0xff]
    %v3428 = vld [vmem:[#allocation8 + $0x1d18] sm:$0xff]
    %v3429 = vld [vmem:[#allocation8 + $0x1d20] sm:$0xff]
    %v3430 = vld [vmem:[#allocation8 + $0x1d28] sm:$0xff]
    %v3431 = vld [vmem:[#allocation8 + $0x1d30] sm:$0xff]
    %v3432 = vld [vmem:[#allocation8 + $0x1d38] sm:$0xff]
    %v3433 = vld [vmem:[#allocation8 + $0x1d40] sm:$0xff]
    %v3434 = vld [vmem:[#allocation8 + $0x1d48] sm:$0xff]
    %v3435 = vld [vmem:[#allocation8 + $0x1d50] sm:$0xff]
    %v3436 = vld [vmem:[#allocation8 + $0x1d58] sm:$0xff]
    %v3437 = vld [vmem:[#allocation8 + $0x1d60] sm:$0xff]
    %v3438 = vld [vmem:[#allocation8 + $0x1d68] sm:$0xff]
    %v3439 = vld [vmem:[#allocation8 + $0x1d70] sm:$0xff]
    %v3440 = vld [vmem:[#allocation8 + $0x1d78] sm:$0xff]
    %v3441 = vld [vmem:[#allocation8 + $0x1d80] sm:$0xff]
    %v3442 = vld [vmem:[#allocation8 + $0x1d88] sm:$0xff]
    %v3443 = vld [vmem:[#allocation8 + $0x1d90] sm:$0xff]
    %v3444 = vld [vmem:[#allocation8 + $0x1d98] sm:$0xff]
    %v3445 = vld [vmem:[#allocation8 + $0x1da0] sm:$0xff]
    %v3446 = vld [vmem:[#allocation8 + $0x1da8] sm:$0xff]
    %v3447 = vld [vmem:[#allocation8 + $0x1db0] sm:$0xff]
    %v3448 = vld [vmem:[#allocation8 + $0x1db8] sm:$0xff]
    %v3449 = vld [vmem:[#allocation8 + $0x1dc0] sm:$0xff]
    %v3450 = vld [vmem:[#allocation8 + $0x1dc8] sm:$0xff]
    %v3451 = vld [vmem:[#allocation8 + $0x1dd0] sm:$0xff]
    %v3452 = vld [vmem:[#allocation8 + $0x1dd8] sm:$0xff]
    %v3453 = vld [vmem:[#allocation8 + $0x1de0] sm:$0xff]
    %v3454 = vld [vmem:[#allocation8 + $0x1de8] sm:$0xff]
    %v3455 = vld [vmem:[#allocation8 + $0x1df0] sm:$0xff]
    %v3456 = vld [vmem:[#allocation8 + $0x1df8] sm:$0xff]
    %v3457 = vld [vmem:[#allocation8 + $0x1e00] sm:$0xff]
    %v3458 = vld [vmem:[#allocation8 + $0x1e08] sm:$0xff]
    %v3459 = vld [vmem:[#allocation8 + $0x1e10] sm:$0xff]
    %v3460 = vld [vmem:[#allocation8 + $0x1e18] sm:$0xff]
    %v3461 = vld [vmem:[#allocation8 + $0x1e20] sm:$0xff]
    %v3462 = vld [vmem:[#allocation8 + $0x1e28] sm:$0xff]
    %v3463 = vld [vmem:[#allocation8 + $0x1e30] sm:$0xff]
    %v3464 = vld [vmem:[#allocation8 + $0x1e38] sm:$0xff]
    %v3465 = vld [vmem:[#allocation8 + $0x1e40] sm:$0xff]
    %v3466 = vld [vmem:[#allocation8 + $0x1e48] sm:$0xff]
    %v3467 = vld [vmem:[#allocation8 + $0x1e50] sm:$0xff]
    %v3468 = vld [vmem:[#allocation8 + $0x1e58] sm:$0xff]
    %v3469 = vld [vmem:[#allocation8 + $0x1e60] sm:$0xff]
    %v3470 = vld [vmem:[#allocation8 + $0x1e68] sm:$0xff]
    %v3471 = vld [vmem:[#allocation8 + $0x1e70] sm:$0xff]
    %v3472 = vld [vmem:[#allocation8 + $0x1e78] sm:$0xff]
    %v3473 = vld [vmem:[#allocation8 + $0x1e80] sm:$0xff]
    %v3474 = vld [vmem:[#allocation8 + $0x1e88] sm:$0xff]
    %v3475 = vld [vmem:[#allocation8 + $0x1e90] sm:$0xff]
    %v3476 = vld [vmem:[#allocation8 + $0x1e98] sm:$0xff]
    %v3477 = vld [vmem:[#allocation8 + $0x1ea0] sm:$0xff]
    %v3478 = vld [vmem:[#allocation8 + $0x1ea8] sm:$0xff]
    %v3479 = vld [vmem:[#allocation8 + $0x1eb0] sm:$0xff]
    %v3480 = vld [vmem:[#allocation8 + $0x1eb8] sm:$0xff]
    %v3481 = vld [vmem:[#allocation8 + $0x1ec0] sm:$0xff]
    %v3482 = vld [vmem:[#allocation8 + $0x1ec8] sm:$0xff]
    %v3483 = vld [vmem:[#allocation8 + $0x1ed0] sm:$0xff]
    %v3484 = vld [vmem:[#allocation8 + $0x1ed8] sm:$0xff]
    %v3485 = vld [vmem:[#allocation8 + $0x1ee0] sm:$0xff]
    %v3486 = vld [vmem:[#allocation8 + $0x1ee8] sm:$0xff]
    %v3487 = vld [vmem:[#allocation8 + $0x1ef0] sm:$0xff]
    %v3488 = vld [vmem:[#allocation8 + $0x1ef8] sm:$0xff]
    %v3489 = vld [vmem:[#allocation8 + $0x1f00] sm:$0xff]
    %v3490 = vld [vmem:[#allocation8 + $0x1f08] sm:$0xff]
    %v3491 = vld [vmem:[#allocation8 + $0x1f10] sm:$0xff]
    %v3492 = vld [vmem:[#allocation8 + $0x1f18] sm:$0xff]
    %v3493 = vld [vmem:[#allocation8 + $0x1f20] sm:$0xff]
    %v3494 = vld [vmem:[#allocation8 + $0x1f28] sm:$0xff]
    %v3495 = vld [vmem:[#allocation8 + $0x1f30] sm:$0xff]
    %v3496 = vld [vmem:[#allocation8 + $0x1f38] sm:$0xff]
    %v3497 = vld [vmem:[#allocation8 + $0x1f40] sm:$0xff]
    %v3498 = vld [vmem:[#allocation8 + $0x1f48] sm:$0xff]
    %v3499 = vld [vmem:[#allocation8 + $0x1f50] sm:$0xff]
    %v3500 = vld [vmem:[#allocation8 + $0x1f58] sm:$0xff]
    %v3501 = vld [vmem:[#allocation8 + $0x1f60] sm:$0xff]
    %v3502 = vld [vmem:[#allocation8 + $0x1f68] sm:$0xff]
    %v3503 = vld [vmem:[#allocation8 + $0x1f70] sm:$0xff]
    %v3504 = vld [vmem:[#allocation8 + $0x1f78] sm:$0xff]
    %v3505 = vld [vmem:[#allocation8 + $0x1f80] sm:$0xff]
    %v3506 = vld [vmem:[#allocation8 + $0x1f88] sm:$0xff]
    %v3507 = vld [vmem:[#allocation8 + $0x1f90] sm:$0xff]
    %v3508 = vld [vmem:[#allocation8 + $0x1f98] sm:$0xff]
    %v3509 = vld [vmem:[#allocation8 + $0x1fa0] sm:$0xff]
    %v3510 = vld [vmem:[#allocation8 + $0x1fa8] sm:$0xff]
    %v3511 = vld [vmem:[#allocation8 + $0x1fb0] sm:$0xff]
    %v3512 = vld [vmem:[#allocation8 + $0x1fb8] sm:$0xff]
    %v3513 = vld [vmem:[#allocation8 + $0x1fc0] sm:$0xff]
    %v3514 = vld [vmem:[#allocation8 + $0x1fc8] sm:$0xff]
    %v3515 = vld [vmem:[#allocation8 + $0x1fd0] sm:$0xff]
    %v3516 = vld [vmem:[#allocation8 + $0x1fd8] sm:$0xff]
    %v3517 = vld [vmem:[#allocation8 + $0x1fe0] sm:$0xff]
    %v3518 = vld [vmem:[#allocation8 + $0x1fe8] sm:$0xff]
    %v3519 = vld [vmem:[#allocation8 + $0x1ff0] sm:$0xff]
    %v3520 = vld [vmem:[#allocation8 + $0x1ff8] sm:$0xff]
    %3521 = vmatprep.subr.mxu0 %v3010
    %3522 = vmatpush1.msra.mxu0 %v3009
    %3523 = vmatprep.subr.mxu0 %v3014
    %3524 = vmatpush1.msra.mxu0 %v3013
    %3525 = vmatprep.subr.mxu0 %v3018
    %3526 = vmatpush1.msra.mxu0 %v3017
    %3527 = vmatprep.subr.mxu0 %v3022
    %3528 = vmatpush1.msra.mxu0 %v3021
    %3529 = vmatprep.subr.mxu0 %v3026
    %3530 = vmatpush1.msra.mxu0 %v3025
    %3531 = vmatprep.subr.mxu0 %v3030
    %3532 = vmatpush1.msra.mxu0 %v3029
    %3533 = vmatprep.subr.mxu0 %v3034
    %3534 = vmatpush1.msra.mxu0 %v3033
    %3535 = vmatprep.subr.mxu0 %v3038
    %3536 = vmatpush1.msra.mxu0 %v3037
    %3537 = vmatprep.subr.mxu0 %v3042
    %3538 = vmatpush1.msra.mxu0 %v3041
    %3539 = vmatprep.subr.mxu0 %v3046
    %3540 = vmatpush1.msra.mxu0 %v3045
    %3541 = vmatprep.subr.mxu0 %v3050
    %3542 = vmatpush1.msra.mxu0 %v3049
    %3543 = vmatprep.subr.mxu0 %v3054
    %3544 = vmatpush1.msra.mxu0 %v3053
    %3545 = vmatprep.subr.mxu0 %v3058
    %3546 = vmatpush1.msra.mxu0 %v3057
    %3547 = vmatprep.subr.mxu0 %v3062
    %3548 = vmatpush1.msra.mxu0 %v3061
    %3549 = vmatprep.subr.mxu0 %v3066
    %3550 = vmatpush1.msra.mxu0 %v3065
    %3551 = vmatprep.subr.mxu0 %v3070
    %3552 = vmatpush1.msra.mxu0 %v3069
    %3553 = vmatprep.subr.mxu0 %v3074
    %3554 = vmatpush1.msra.mxu0 %v3073
    %3555 = vmatprep.subr.mxu0 %v3078
    %3556 = vmatpush1.msra.mxu0 %v3077
    %3557 = vmatprep.subr.mxu0 %v3082
    %3558 = vmatpush1.msra.mxu0 %v3081
    %3559 = vmatprep.subr.mxu0 %v3086
    %3560 = vmatpush1.msra.mxu0 %v3085
    %3561 = vmatprep.subr.mxu0 %v3090
    %3562 = vmatpush1.msra.mxu0 %v3089
    %3563 = vmatprep.subr.mxu0 %v3094
    %3564 = vmatpush1.msra.mxu0 %v3093
    %3565 = vmatprep.subr.mxu0 %v3098
    %3566 = vmatpush1.msra.mxu0 %v3097
    %3567 = vmatprep.subr.mxu0 %v3102
    %3568 = vmatpush1.msra.mxu0 %v3101
    %3569 = vmatprep.subr.mxu0 %v3106
    %3570 = vmatpush1.msra.mxu0 %v3105
    %3571 = vmatprep.subr.mxu0 %v3110
    %3572 = vmatpush1.msra.mxu0 %v3109
    %3573 = vmatprep.subr.mxu0 %v3114
    %3574 = vmatpush1.msra.mxu0 %v3113
    %3575 = vmatprep.subr.mxu0 %v3118
    %3576 = vmatpush1.msra.mxu0 %v3117
    %3577 = vmatprep.subr.mxu0 %v3122
    %3578 = vmatpush1.msra.mxu0 %v3121
    %3579 = vmatprep.subr.mxu0 %v3126
    %3580 = vmatpush1.msra.mxu0 %v3125
    %3581 = vmatprep.subr.mxu0 %v3130
    %3582 = vmatpush1.msra.mxu0 %v3129
    %3583 = vmatprep.subr.mxu0 %v3134
    %3584 = vmatpush1.msra.mxu0 %v3133
    %3585 = vmatprep.mubr.f32.mxu0 %v2994
    %3586 = vmatmul.mubr.f32.gmra.mrb[0].mxu0 %v2993
    %v3587 = vpop.f32.mrb[0].mxu0
    %v3588 = vadd.f32 0.0, %v3587
    %v3589 = vpop.f32.mrb[0].mxu0
    %v3590 = vadd.f32 0.0, %v3589
    %3591 = vmatprep.mubr.f32.mxu0 %v3002
    %3592 = vmatmul.mubr.f32.gmra.mrb[0].mxu0 %v3001
    %v3593 = vpop.f32.mrb[0].mxu0
    %v3594 = vadd.f32 0.0, %v3593
    %v3595 = vpop.f32.mrb[0].mxu0
    %v3596 = vadd.f32 0.0, %v3595
    %3597 = vdwg.mxu0
    %3598 = vmatprep.subr.mxu0 %v3138
    %3599 = vmatpush1.msra.mxu0 %v3137
    %3600 = vmatprep.subr.mxu0 %v3142
    %3601 = vmatpush1.msra.mxu0 %v3141
    %3602 = vmatprep.subr.mxu0 %v3146
    %3603 = vmatpush1.msra.mxu0 %v3145
    %3604 = vmatprep.subr.mxu0 %v3150
    %3605 = vmatpush1.msra.mxu0 %v3149
    %3606 = vmatprep.subr.mxu0 %v3154
    %3607 = vmatpush1.msra.mxu0 %v3153
    %3608 = vmatprep.subr.mxu0 %v3158
    %3609 = vmatpush1.msra.mxu0 %v3157
    %3610 = vmatprep.subr.mxu0 %v3162
    %3611 = vmatpush1.msra.mxu0 %v3161
    %3612 = vmatprep.subr.mxu0 %v3166
    %3613 = vmatpush1.msra.mxu0 %v3165
    %3614 = vmatprep.subr.mxu0 %v3170
    %3615 = vmatpush1.msra.mxu0 %v3169
    %3616 = vmatprep.subr.mxu0 %v3174
    %3617 = vmatpush1.msra.mxu0 %v3173
    %3618 = vmatprep.subr.mxu0 %v3178
    %3619 = vmatpush1.msra.mxu0 %v3177
    %3620 = vmatprep.subr.mxu0 %v3182
    %3621 = vmatpush1.msra.mxu0 %v3181
    %3622 = vmatprep.subr.mxu0 %v3186
    %3623 = vmatpush1.msra.mxu0 %v3185
    %3624 = vmatprep.subr.mxu0 %v3190
    %3625 = vmatpush1.msra.mxu0 %v3189
    %3626 = vmatprep.subr.mxu0 %v3194
    %3627 = vmatpush1.msra.mxu0 %v3193
    %3628 = vmatprep.subr.mxu0 %v3198
    %3629 = vmatpush1.msra.mxu0 %v3197
    %3630 = vmatprep.subr.mxu0 %v3202
    %3631 = vmatpush1.msra.mxu0 %v3201
    %3632 = vmatprep.subr.mxu0 %v3206
    %3633 = vmatpush1.msra.mxu0 %v3205
    %3634 = vmatprep.subr.mxu0 %v3210
    %3635 = vmatpush1.msra.mxu0 %v3209
    %3636 = vmatprep.subr.mxu0 %v3214
    %3637 = vmatpush1.msra.mxu0 %v3213
    %3638 = vmatprep.subr.mxu0 %v3218
    %3639 = vmatpush1.msra.mxu0 %v3217
    %3640 = vmatprep.subr.mxu0 %v3222
    %3641 = vmatpush1.msra.mxu0 %v3221
    %3642 = vmatprep.subr.mxu0 %v3226
    %3643 = vmatpush1.msra.mxu0 %v3225
    %3644 = vmatprep.subr.mxu0 %v3230
    %3645 = vmatpush1.msra.mxu0 %v3229
    %3646 = vmatprep.subr.mxu0 %v3234
    %3647 = vmatpush1.msra.mxu0 %v3233
    %3648 = vmatprep.subr.mxu0 %v3238
    %3649 = vmatpush1.msra.mxu0 %v3237
    %3650 = vmatprep.subr.mxu0 %v3242
    %3651 = vmatpush1.msra.mxu0 %v3241
    %3652 = vmatprep.subr.mxu0 %v3246
    %3653 = vmatpush1.msra.mxu0 %v3245
    %3654 = vmatprep.subr.mxu0 %v3250
    %3655 = vmatpush1.msra.mxu0 %v3249
    %3656 = vmatprep.subr.mxu0 %v3254
    %3657 = vmatpush1.msra.mxu0 %v3253
    %3658 = vmatprep.subr.mxu0 %v3258
    %3659 = vmatpush1.msra.mxu0 %v3257
    %3660 = vmatprep.subr.mxu0 %v3262
    %3661 = vmatpush1.msra.mxu0 %v3261
    %3662 = vmatprep.mubr.f32.mxu0 %v2996
    %3663 = vmatmul.mubr.f32.gmra.mrb[0].mxu0 %v2995
    %v3664 = vpop.f32.mrb[0].mxu0
    %v3665 = vadd.f32 %v3588, %v3664
    %v3666 = vpop.f32.mrb[0].mxu0
    %v3667 = vadd.f32 %v3590, %v3666
    %3668 = vmatprep.mubr.f32.mxu0 %v3004
    %3669 = vmatmul.mubr.f32.gmra.mrb[0].mxu0 %v3003
    %v3670 = vpop.f32.mrb[0].mxu0
    %v3671 = vadd.f32 %v3594, %v3670
    %v3672 = vpop.f32.mrb[0].mxu0
    %v3673 = vadd.f32 %v3596, %v3672
    %3674 = vdwg.mxu0
    %3675 = vmatprep.subr.mxu0 %v3266
    %3676 = vmatpush1.msra.mxu0 %v3265
    %3677 = vmatprep.subr.mxu0 %v3270
    %3678 = vmatpush1.msra.mxu0 %v3269
    %3679 = vmatprep.subr.mxu0 %v3274
    %3680 = vmatpush1.msra.mxu0 %v3273
    %3681 = vmatprep.subr.mxu0 %v3278
    %3682 = vmatpush1.msra.mxu0 %v3277
    %3683 = vmatprep.subr.mxu0 %v3282
    %3684 = vmatpush1.msra.mxu0 %v3281
    %3685 = vmatprep.subr.mxu0 %v3286
    %3686 = vmatpush1.msra.mxu0 %v3285
    %3687 = vmatprep.subr.mxu0 %v3290
    %3688 = vmatpush1.msra.mxu0 %v3289
    %3689 = vmatprep.subr.mxu0 %v3294
    %3690 = vmatpush1.msra.mxu0 %v3293
    %3691 = vmatprep.subr.mxu0 %v3298
    %3692 = vmatpush1.msra.mxu0 %v3297
    %3693 = vmatprep.subr.mxu0 %v3302
    %3694 = vmatpush1.msra.mxu0 %v3301
    %3695 = vmatprep.subr.mxu0 %v3306
    %3696 = vmatpush1.msra.mxu0 %v3305
    %3697 = vmatprep.subr.mxu0 %v3310
    %3698 = vmatpush1.msra.mxu0 %v3309
    %3699 = vmatprep.subr.mxu0 %v3314
    %3700 = vmatpush1.msra.mxu0 %v3313
    %3701 = vmatprep.subr.mxu0 %v3318
    %3702 = vmatpush1.msra.mxu0 %v3317
    %3703 = vmatprep.subr.mxu0 %v3322
    %3704 = vmatpush1.msra.mxu0 %v3321
    %3705 = vmatprep.subr.mxu0 %v3326
    %3706 = vmatpush1.msra.mxu0 %v3325
    %3707 = vmatprep.subr.mxu0 %v3330
    %3708 = vmatpush1.msra.mxu0 %v3329
    %3709 = vmatprep.subr.mxu0 %v3334
    %3710 = vmatpush1.msra.mxu0 %v3333
    %3711 = vmatprep.subr.mxu0 %v3338
    %3712 = vmatpush1.msra.mxu0 %v3337
    %3713 = vmatprep.subr.mxu0 %v3342
    %3714 = vmatpush1.msra.mxu0 %v3341
    %3715 = vmatprep.subr.mxu0 %v3346
    %3716 = vmatpush1.msra.mxu0 %v3345
    %3717 = vmatprep.subr.mxu0 %v3350
    %3718 = vmatpush1.msra.mxu0 %v3349
    %3719 = vmatprep.subr.mxu0 %v3354
    %3720 = vmatpush1.msra.mxu0 %v3353
    %3721 = vmatprep.subr.mxu0 %v3358
    %3722 = vmatpush1.msra.mxu0 %v3357
    %3723 = vmatprep.subr.mxu0 %v3362
    %3724 = vmatpush1.msra.mxu0 %v3361
    %3725 = vmatprep.subr.mxu0 %v3366
    %3726 = vmatpush1.msra.mxu0 %v3365
    %3727 = vmatprep.subr.mxu0 %v3370
    %3728 = vmatpush1.msra.mxu0 %v3369
    %3729 = vmatprep.subr.mxu0 %v3374
    %3730 = vmatpush1.msra.mxu0 %v3373
    %3731 = vmatprep.subr.mxu0 %v3378
    %3732 = vmatpush1.msra.mxu0 %v3377
    %3733 = vmatprep.subr.mxu0 %v3382
    %3734 = vmatpush1.msra.mxu0 %v3381
    %3735 = vmatprep.subr.mxu0 %v3386
    %3736 = vmatpush1.msra.mxu0 %v3385
    %3737 = vmatprep.subr.mxu0 %v3390
    %3738 = vmatpush1.msra.mxu0 %v3389
    %3739 = vmatprep.mubr.f32.mxu0 %v2998
    %3740 = vmatmul.mubr.f32.gmra.mrb[0].mxu0 %v2997
    %v3741 = vpop.f32.mrb[0].mxu0
    %v3742 = vadd.f32 %v3665, %v3741
    %v3743 = vpop.f32.mrb[0].mxu0
    %v3744 = vadd.f32 %v3667, %v3743
    %3745 = vmatprep.mubr.f32.mxu0 %v3006
    %3746 = vmatmul.mubr.f32.gmra.mrb[0].mxu0 %v3005
    %v3747 = vpop.f32.mrb[0].mxu0
    %v3748 = vadd.f32 %v3671, %v3747
    %v3749 = vpop.f32.mrb[0].mxu0
    %v3750 = vadd.f32 %v3673, %v3749
    %3751 = vdwg.mxu0
    %3752 = vmatprep.subr.mxu0 %v3394
    %3753 = vmatpush1.msra.mxu0 %v3393
    %3754 = vmatprep.subr.mxu0 %v3398
    %3755 = vmatpush1.msra.mxu0 %v3397
    %3756 = vmatprep.subr.mxu0 %v3402
    %3757 = vmatpush1.msra.mxu0 %v3401
    %3758 = vmatprep.subr.mxu0 %v3406
    %3759 = vmatpush1.msra.mxu0 %v3405
    %3760 = vmatprep.subr.mxu0 %v3410
    %3761 = vmatpush1.msra.mxu0 %v3409
    %3762 = vmatprep.subr.mxu0 %v3414
    %3763 = vmatpush1.msra.mxu0 %v3413
    %3764 = vmatprep.subr.mxu0 %v3418
    %3765 = vmatpush1.msra.mxu0 %v3417
    %3766 = vmatprep.subr.mxu0 %v3422
    %3767 = vmatpush1.msra.mxu0 %v3421
    %3768 = vmatprep.subr.mxu0 %v3426
    %3769 = vmatpush1.msra.mxu0 %v3425
    %3770 = vmatprep.subr.mxu0 %v3430
    %3771 = vmatpush1.msra.mxu0 %v3429
    %3772 = vmatprep.subr.mxu0 %v3434
    %3773 = vmatpush1.msra.mxu0 %v3433
    %3774 = vmatprep.subr.mxu0 %v3438
    %3775 = vmatpush1.msra.mxu0 %v3437
    %3776 = vmatprep.subr.mxu0 %v3442
    %3777 = vmatpush1.msra.mxu0 %v3441
    %3778 = vmatprep.subr.mxu0 %v3446
    %3779 = vmatpush1.msra.mxu0 %v3445
    %3780 = vmatprep.subr.mxu0 %v3450
    %3781 = vmatpush1.msra.mxu0 %v3449
    %3782 = vmatprep.subr.mxu0 %v3454
    %3783 = vmatpush1.msra.mxu0 %v3453
    %3784 = vmatprep.subr.mxu0 %v3458
    %3785 = vmatpush1.msra.mxu0 %v3457
    %3786 = vmatprep.subr.mxu0 %v3462
    %3787 = vmatpush1.msra.mxu0 %v3461
    %3788 = vmatprep.subr.mxu0 %v3466
    %3789 = vmatpush1.msra.mxu0 %v3465
    %3790 = vmatprep.subr.mxu0 %v3470
    %3791 = vmatpush1.msra.mxu0 %v3469
    %3792 = vmatprep.subr.mxu0 %v3474
    %3793 = vmatpush1.msra.mxu0 %v3473
    %3794 = vmatprep.subr.mxu0 %v3478
    %3795 = vmatpush1.msra.mxu0 %v3477
    %3796 = vmatprep.subr.mxu0 %v3482
    %3797 = vmatpush1.msra.mxu0 %v3481
    %3798 = vmatprep.subr.mxu0 %v3486
    %3799 = vmatpush1.msra.mxu0 %v3485
    %3800 = vmatprep.subr.mxu0 %v3490
    %3801 = vmatpush1.msra.mxu0 %v3489
    %3802 = vmatprep.subr.mxu0 %v3494
    %3803 = vmatpush1.msra.mxu0 %v3493
    %3804 = vmatprep.subr.mxu0 %v3498
    %3805 = vmatpush1.msra.mxu0 %v3497
    %3806 = vmatprep.subr.mxu0 %v3502
    %3807 = vmatpush1.msra.mxu0 %v3501
    %3808 = vmatprep.subr.mxu0 %v3506
    %3809 = vmatpush1.msra.mxu0 %v3505
    %3810 = vmatprep.subr.mxu0 %v3510
    %3811 = vmatpush1.msra.mxu0 %v3509
    %3812 = vmatprep.subr.mxu0 %v3514
    %3813 = vmatpush1.msra.mxu0 %v3513
    %3814 = vmatprep.subr.mxu0 %v3518
    %3815 = vmatpush1.msra.mxu0 %v3517
    %3816 = vmatprep.mubr.f32.mxu0 %v3000
    %3817 = vmatmul.mubr.f32.gmra.mrb[0].mxu0 %v2999
    %v3818 = vpop.f32.mrb[0].mxu0
    %v3819 = vadd.f32 %v3742, %v3818
    %v3820 = vpop.f32.mrb[0].mxu0
    %v3821 = vadd.f32 %v3744, %v3820
    %3822 = vmatprep.mubr.f32.mxu0 %v3008
    %3823 = vmatmul.mubr.f32.gmra.mrb[0].mxu0 %v3007
    %v3824 = vpop.f32.mrb[0].mxu0
    %v3825 = vadd.f32 %v3748, %v3824
    %v3826 = vpop.f32.mrb[0].mxu0
    %v3827 = vadd.f32 %v3750, %v3826
    %3828 = vdwg.mxu0
    %3829 = vmatprep.subr.mxu0 %v3012
    %3830 = vmatpush1.msra.mxu0 %v3011
    %3831 = vmatprep.subr.mxu0 %v3016
    %3832 = vmatpush1.msra.mxu0 %v3015
    %3833 = vmatprep.subr.mxu0 %v3020
    %3834 = vmatpush1.msra.mxu0 %v3019
    %3835 = vmatprep.subr.mxu0 %v3024
    %3836 = vmatpush1.msra.mxu0 %v3023
    %3837 = vmatprep.subr.mxu0 %v3028
    %3838 = vmatpush1.msra.mxu0 %v3027
    %3839 = vmatprep.subr.mxu0 %v3032
    %3840 = vmatpush1.msra.mxu0 %v3031
    %3841 = vmatprep.subr.mxu0 %v3036
    %3842 = vmatpush1.msra.mxu0 %v3035
    %3843 = vmatprep.subr.mxu0 %v3040
    %3844 = vmatpush1.msra.mxu0 %v3039
    %3845 = vmatprep.subr.mxu0 %v3044
    %3846 = vmatpush1.msra.mxu0 %v3043
    %3847 = vmatprep.subr.mxu0 %v3048
    %3848 = vmatpush1.msra.mxu0 %v3047
    %3849 = vmatprep.subr.mxu0 %v3052
    %3850 = vmatpush1.msra.mxu0 %v3051
    %3851 = vmatprep.subr.mxu0 %v3056
    %3852 = vmatpush1.msra.mxu0 %v3055
    %3853 = vmatprep.subr.mxu0 %v3060
    %3854 = vmatpush1.msra.mxu0 %v3059
    %3855 = vmatprep.subr.mxu0 %v3064
    %3856 = vmatpush1.msra.mxu0 %v3063
    %3857 = vmatprep.subr.mxu0 %v3068
    %3858 = vmatpush1.msra.mxu0 %v3067
    %3859 = vmatprep.subr.mxu0 %v3072
    %3860 = vmatpush1.msra.mxu0 %v3071
    %3861 = vmatprep.subr.mxu0 %v3076
    %3862 = vmatpush1.msra.mxu0 %v3075
    %3863 = vmatprep.subr.mxu0 %v3080
    %3864 = vmatpush1.msra.mxu0 %v3079
    %3865 = vmatprep.subr.mxu0 %v3084
    %3866 = vmatpush1.msra.mxu0 %v3083
    %3867 = vmatprep.subr.mxu0 %v3088
    %3868 = vmatpush1.msra.mxu0 %v3087
    %3869 = vmatprep.subr.mxu0 %v3092
    %3870 = vmatpush1.msra.mxu0 %v3091
    %3871 = vmatprep.subr.mxu0 %v3096
    %3872 = vmatpush1.msra.mxu0 %v3095
    %3873 = vmatprep.subr.mxu0 %v3100
    %3874 = vmatpush1.msra.mxu0 %v3099
    %3875 = vmatprep.subr.mxu0 %v3104
    %3876 = vmatpush1.msra.mxu0 %v3103
    %3877 = vmatprep.subr.mxu0 %v3108
    %3878 = vmatpush1.msra.mxu0 %v3107
    %3879 = vmatprep.subr.mxu0 %v3112
    %3880 = vmatpush1.msra.mxu0 %v3111
    %3881 = vmatprep.subr.mxu0 %v3116
    %3882 = vmatpush1.msra.mxu0 %v3115
    %3883 = vmatprep.subr.mxu0 %v3120
    %3884 = vmatpush1.msra.mxu0 %v3119
    %3885 = vmatprep.subr.mxu0 %v3124
    %3886 = vmatpush1.msra.mxu0 %v3123
    %3887 = vmatprep.subr.mxu0 %v3128
    %3888 = vmatpush1.msra.mxu0 %v3127
    %3889 = vmatprep.subr.mxu0 %v3132
    %3890 = vmatpush1.msra.mxu0 %v3131
    %3891 = vmatprep.subr.mxu0 %v3136
    %3892 = vmatpush1.msra.mxu0 %v3135
    %3893 = vmatprep.mubr.f32.mxu0 %v2994
    %3894 = vmatmul.mubr.f32.gmra.mrb[0].mxu0 %v2993
    %v3895 = vpop.f32.mrb[0].mxu0
    %v3896 = vadd.f32 0.0, %v3895
    %v3897 = vpop.f32.mrb[0].mxu0
    %v3898 = vadd.f32 0.0, %v3897
    %3899 = vmatprep.mubr.f32.mxu0 %v3002
    %3900 = vmatmul.mubr.f32.gmra.mrb[0].mxu0 %v3001
    %v3901 = vpop.f32.mrb[0].mxu0
    %v3902 = vadd.f32 0.0, %v3901
    %v3903 = vpop.f32.mrb[0].mxu0
    %v3904 = vadd.f32 0.0, %v3903
    %3905 = vdwg.mxu0
    %3906 = vmatprep.subr.mxu0 %v3140
    %3907 = vmatpush1.msra.mxu0 %v3139
    %3908 = vmatprep.subr.mxu0 %v3144
    %3909 = vmatpush1.msra.mxu0 %v3143
    %3910 = vmatprep.subr.mxu0 %v3148
    %3911 = vmatpush1.msra.mxu0 %v3147
    %3912 = vmatprep.subr.mxu0 %v3152
    %3913 = vmatpush1.msra.mxu0 %v3151
    %3914 = vmatprep.subr.mxu0 %v3156
    %3915 = vmatpush1.msra.mxu0 %v3155
    %3916 = vmatprep.subr.mxu0 %v3160
    %3917 = vmatpush1.msra.mxu0 %v3159
    %3918 = vmatprep.subr.mxu0 %v3164
    %3919 = vmatpush1.msra.mxu0 %v3163
    %3920 = vmatprep.subr.mxu0 %v3168
    %3921 = vmatpush1.msra.mxu0 %v3167
    %3922 = vmatprep.subr.mxu0 %v3172
    %3923 = vmatpush1.msra.mxu0 %v3171
    %3924 = vmatprep.subr.mxu0 %v3176
    %3925 = vmatpush1.msra.mxu0 %v3175
    %3926 = vmatprep.subr.mxu0 %v3180
    %3927 = vmatpush1.msra.mxu0 %v3179
    %3928 = vmatprep.subr.mxu0 %v3184
    %3929 = vmatpush1.msra.mxu0 %v3183
    %3930 = vmatprep.subr.mxu0 %v3188
    %3931 = vmatpush1.msra.mxu0 %v3187
    %3932 = vmatprep.subr.mxu0 %v3192
    %3933 = vmatpush1.msra.mxu0 %v3191
    %3934 = vmatprep.subr.mxu0 %v3196
    %3935 = vmatpush1.msra.mxu0 %v3195
    %3936 = vmatprep.subr.mxu0 %v3200
    %3937 = vmatpush1.msra.mxu0 %v3199
    %3938 = vmatprep.subr.mxu0 %v3204
    %3939 = vmatpush1.msra.mxu0 %v3203
    %3940 = vmatprep.subr.mxu0 %v3208
    %3941 = vmatpush1.msra.mxu0 %v3207
    %3942 = vmatprep.subr.mxu0 %v3212
    %3943 = vmatpush1.msra.mxu0 %v3211
    %3944 = vmatprep.subr.mxu0 %v3216
    %3945 = vmatpush1.msra.mxu0 %v3215
    %3946 = vmatprep.subr.mxu0 %v3220
    %3947 = vmatpush1.msra.mxu0 %v3219
    %3948 = vmatprep.subr.mxu0 %v3224
    %3949 = vmatpush1.msra.mxu0 %v3223
    %3950 = vmatprep.subr.mxu0 %v3228
    %3951 = vmatpush1.msra.mxu0 %v3227
    %3952 = vmatprep.subr.mxu0 %v3232
    %3953 = vmatpush1.msra.mxu0 %v3231
    %3954 = vmatprep.subr.mxu0 %v3236
    %3955 = vmatpush1.msra.mxu0 %v3235
    %3956 = vmatprep.subr.mxu0 %v3240
    %3957 = vmatpush1.msra.mxu0 %v3239
    %3958 = vmatprep.subr.mxu0 %v3244
    %3959 = vmatpush1.msra.mxu0 %v3243
    %3960 = vmatprep.subr.mxu0 %v3248
    %3961 = vmatpush1.msra.mxu0 %v3247
    %3962 = vmatprep.subr.mxu0 %v3252
    %3963 = vmatpush1.msra.mxu0 %v3251
    %3964 = vmatprep.subr.mxu0 %v3256
    %3965 = vmatpush1.msra.mxu0 %v3255
    %3966 = vmatprep.subr.mxu0 %v3260
    %3967 = vmatpush1.msra.mxu0 %v3259
    %3968 = vmatprep.subr.mxu0 %v3264
    %3969 = vmatpush1.msra.mxu0 %v3263
    %3970 = vmatprep.mubr.f32.mxu0 %v2996
    %3971 = vmatmul.mubr.f32.gmra.mrb[0].mxu0 %v2995
    %v3972 = vpop.f32.mrb[0].mxu0
    %v3973 = vadd.f32 %v3896, %v3972
    %v3974 = vpop.f32.mrb[0].mxu0
    %v3975 = vadd.f32 %v3898, %v3974
    %3976 = vmatprep.mubr.f32.mxu0 %v3004
    %3977 = vmatmul.mubr.f32.gmra.mrb[0].mxu0 %v3003
    %v3978 = vpop.f32.mrb[0].mxu0
    %v3979 = vadd.f32 %v3902, %v3978
    %v3980 = vpop.f32.mrb[0].mxu0
    %v3981 = vadd.f32 %v3904, %v3980
    %3982 = vdwg.mxu0
    %3983 = vmatprep.subr.mxu0 %v3268
    %3984 = vmatpush1.msra.mxu0 %v3267
    %3985 = vmatprep.subr.mxu0 %v3272
    %3986 = vmatpush1.msra.mxu0 %v3271
    %3987 = vmatprep.subr.mxu0 %v3276
    %3988 = vmatpush1.msra.mxu0 %v3275
    %3989 = vmatprep.subr.mxu0 %v3280
    %3990 = vmatpush1.msra.mxu0 %v3279
    %3991 = vmatprep.subr.mxu0 %v3284
    %3992 = vmatpush1.msra.mxu0 %v3283
    %3993 = vmatprep.subr.mxu0 %v3288
    %3994 = vmatpush1.msra.mxu0 %v3287
    %3995 = vmatprep.subr.mxu0 %v3292
    %3996 = vmatpush1.msra.mxu0 %v3291
    %3997 = vmatprep.subr.mxu0 %v3296
    %3998 = vmatpush1.msra.mxu0 %v3295
    %3999 = vmatprep.subr.mxu0 %v3300
    %4000 = vmatpush1.msra.mxu0 %v3299
    %4001 = vmatprep.subr.mxu0 %v3304
    %4002 = vmatpush1.msra.mxu0 %v3303
    %4003 = vmatprep.subr.mxu0 %v3308
    %4004 = vmatpush1.msra.mxu0 %v3307
    %4005 = vmatprep.subr.mxu0 %v3312
    %4006 = vmatpush1.msra.mxu0 %v3311
    %4007 = vmatprep.subr.mxu0 %v3316
    %4008 = vmatpush1.msra.mxu0 %v3315
    %4009 = vmatprep.subr.mxu0 %v3320
    %4010 = vmatpush1.msra.mxu0 %v3319
    %4011 = vmatprep.subr.mxu0 %v3324
    %4012 = vmatpush1.msra.mxu0 %v3323
    %4013 = vmatprep.subr.mxu0 %v3328
    %4014 = vmatpush1.msra.mxu0 %v3327
    %4015 = vmatprep.subr.mxu0 %v3332
    %4016 = vmatpush1.msra.mxu0 %v3331
    %4017 = vmatprep.subr.mxu0 %v3336
    %4018 = vmatpush1.msra.mxu0 %v3335
    %4019 = vmatprep.subr.mxu0 %v3340
    %4020 = vmatpush1.msra.mxu0 %v3339
    %4021 = vmatprep.subr.mxu0 %v3344
    %4022 = vmatpush1.msra.mxu0 %v3343
    %4023 = vmatprep.subr.mxu0 %v3348
    %4024 = vmatpush1.msra.mxu0 %v3347
    %4025 = vmatprep.subr.mxu0 %v3352
    %4026 = vmatpush1.msra.mxu0 %v3351
    %4027 = vmatprep.subr.mxu0 %v3356
    %4028 = vmatpush1.msra.mxu0 %v3355
    %4029 = vmatprep.subr.mxu0 %v3360
    %4030 = vmatpush1.msra.mxu0 %v3359
    %4031 = vmatprep.subr.mxu0 %v3364
    %4032 = vmatpush1.msra.mxu0 %v3363
    %4033 = vmatprep.subr.mxu0 %v3368
    %4034 = vmatpush1.msra.mxu0 %v3367
    %4035 = vmatprep.subr.mxu0 %v3372
    %4036 = vmatpush1.msra.mxu0 %v3371
    %4037 = vmatprep.subr.mxu0 %v3376
    %4038 = vmatpush1.msra.mxu0 %v3375
    %4039 = vmatprep.subr.mxu0 %v3380
    %4040 = vmatpush1.msra.mxu0 %v3379
    %4041 = vmatprep.subr.mxu0 %v3384
    %4042 = vmatpush1.msra.mxu0 %v3383
    %4043 = vmatprep.subr.mxu0 %v3388
    %4044 = vmatpush1.msra.mxu0 %v3387
    %4045 = vmatprep.subr.mxu0 %v3392
    %4046 = vmatpush1.msra.mxu0 %v3391
    %4047 = vmatprep.mubr.f32.mxu0 %v2998
    %4048 = vmatmul.mubr.f32.gmra.mrb[0].mxu0 %v2997
    %v4049 = vpop.f32.mrb[0].mxu0
    %v4050 = vadd.f32 %v3973, %v4049
    %v4051 = vpop.f32.mrb[0].mxu0
    %v4052 = vadd.f32 %v3975, %v4051
    %4053 = vmatprep.mubr.f32.mxu0 %v3006
    %4054 = vmatmul.mubr.f32.gmra.mrb[0].mxu0 %v3005
    %v4055 = vpop.f32.mrb[0].mxu0
    %v4056 = vadd.f32 %v3979, %v4055
    %v4057 = vpop.f32.mrb[0].mxu0
    %v4058 = vadd.f32 %v3981, %v4057
    %4059 = vdwg.mxu0
    %4060 = vmatprep.subr.mxu0 %v3396
    %4061 = vmatpush1.msra.mxu0 %v3395
    %4062 = vmatprep.subr.mxu0 %v3400
    %4063 = vmatpush1.msra.mxu0 %v3399
    %4064 = vmatprep.subr.mxu0 %v3404
    %4065 = vmatpush1.msra.mxu0 %v3403
    %4066 = vmatprep.subr.mxu0 %v3408
    %4067 = vmatpush1.msra.mxu0 %v3407
    %4068 = vmatprep.subr.mxu0 %v3412
    %4069 = vmatpush1.msra.mxu0 %v3411
    %4070 = vmatprep.subr.mxu0 %v3416
    %4071 = vmatpush1.msra.mxu0 %v3415
    %4072 = vmatprep.subr.mxu0 %v3420
    %4073 = vmatpush1.msra.mxu0 %v3419
    %4074 = vmatprep.subr.mxu0 %v3424
    %4075 = vmatpush1.msra.mxu0 %v3423
    %4076 = vmatprep.subr.mxu0 %v3428
    %4077 = vmatpush1.msra.mxu0 %v3427
    %4078 = vmatprep.subr.mxu0 %v3432
    %4079 = vmatpush1.msra.mxu0 %v3431
    %4080 = vmatprep.subr.mxu0 %v3436
    %4081 = vmatpush1.msra.mxu0 %v3435
    %4082 = vmatprep.subr.mxu0 %v3440
    %4083 = vmatpush1.msra.mxu0 %v3439
    %4084 = vmatprep.subr.mxu0 %v3444
    %4085 = vmatpush1.msra.mxu0 %v3443
    %4086 = vmatprep.subr.mxu0 %v3448
    %4087 = vmatpush1.msra.mxu0 %v3447
    %4088 = vmatprep.subr.mxu0 %v3452
    %4089 = vmatpush1.msra.mxu0 %v3451
    %4090 = vmatprep.subr.mxu0 %v3456
    %4091 = vmatpush1.msra.mxu0 %v3455
    %4092 = vmatprep.subr.mxu0 %v3460
    %4093 = vmatpush1.msra.mxu0 %v3459
    %4094 = vmatprep.subr.mxu0 %v3464
    %4095 = vmatpush1.msra.mxu0 %v3463
    %4096 = vmatprep.subr.mxu0 %v3468
    %4097 = vmatpush1.msra.mxu0 %v3467
    %4098 = vmatprep.subr.mxu0 %v3472
    %4099 = vmatpush1.msra.mxu0 %v3471
    %4100 = vmatprep.subr.mxu0 %v3476
    %4101 = vmatpush1.msra.mxu0 %v3475
    %4102 = vmatprep.subr.mxu0 %v3480
    %4103 = vmatpush1.msra.mxu0 %v3479
    %4104 = vmatprep.subr.mxu0 %v3484
    %4105 = vmatpush1.msra.mxu0 %v3483
    %4106 = vmatprep.subr.mxu0 %v3488
    %4107 = vmatpush1.msra.mxu0 %v3487
    %4108 = vmatprep.subr.mxu0 %v3492
    %4109 = vmatpush1.msra.mxu0 %v3491
    %4110 = vmatprep.subr.mxu0 %v3496
    %4111 = vmatpush1.msra.mxu0 %v3495
    %4112 = vmatprep.subr.mxu0 %v3500
    %4113 = vmatpush1.msra.mxu0 %v3499
    %4114 = vmatprep.subr.mxu0 %v3504
    %4115 = vmatpush1.msra.mxu0 %v3503
    %4116 = vmatprep.subr.mxu0 %v3508
    %4117 = vmatpush1.msra.mxu0 %v3507
    %4118 = vmatprep.subr.mxu0 %v3512
    %4119 = vmatpush1.msra.mxu0 %v3511
    %4120 = vmatprep.subr.mxu0 %v3516
    %4121 = vmatpush1.msra.mxu0 %v3515
    %4122 = vmatprep.subr.mxu0 %v3520
    %4123 = vmatpush1.msra.mxu0 %v3519
    %4124 = vmatprep.mubr.f32.mxu0 %v3000
    %4125 = vmatmul.mubr.f32.gmra.mrb[0].mxu0 %v2999
    %v4126 = vpop.f32.mrb[0].mxu0
    %v4127 = vadd.f32 %v4050, %v4126
    %v4128 = vpop.f32.mrb[0].mxu0
    %v4129 = vadd.f32 %v4052, %v4128
    %4130 = vmatprep.mubr.f32.mxu0 %v3008
    %4131 = vmatmul.mubr.f32.gmra.mrb[0].mxu0 %v3007
    %v4132 = vpop.f32.mrb[0].mxu0
    %v4133 = vadd.f32 %v4056, %v4132
    %v4134 = vpop.f32.mrb[0].mxu0
    %v4135 = vadd.f32 %v4058, %v4134
    %4136 = vdwg.mxu0
    %4137 = vmatprep.subr.mxu0 %v1312
    %4138 = vmatpush1.msra.mxu0 %v1311
    %4139 = vmatprep.subr.mxu0 %v1316
    %4140 = vmatpush1.msra.mxu0 %v1315
    %4141 = vmatprep.subr.mxu0 %v1320
    %4142 = vmatpush1.msra.mxu0 %v1319
    %4143 = vmatprep.subr.mxu0 %v1324
    %4144 = vmatpush1.msra.mxu0 %v1323
    %4145 = vmatprep.subr.mxu0 %v1328
    %4146 = vmatpush1.msra.mxu0 %v1327
    %4147 = vmatprep.subr.mxu0 %v1332
    %4148 = vmatpush1.msra.mxu0 %v1331
    %4149 = vmatprep.subr.mxu0 %v1336
    %4150 = vmatpush1.msra.mxu0 %v1335
    %4151 = vmatprep.subr.mxu0 %v1340
    %4152 = vmatpush1.msra.mxu0 %v1339
    %4153 = vmatprep.subr.mxu0 %v1344
    %4154 = vmatpush1.msra.mxu0 %v1343
    %4155 = vmatprep.subr.mxu0 %v1348
    %4156 = vmatpush1.msra.mxu0 %v1347
    %4157 = vmatprep.subr.mxu0 %v1352
    %4158 = vmatpush1.msra.mxu0 %v1351
    %4159 = vmatprep.subr.mxu0 %v1356
    %4160 = vmatpush1.msra.mxu0 %v1355
    %4161 = vmatprep.subr.mxu0 %v1360
    %4162 = vmatpush1.msra.mxu0 %v1359
    %4163 = vmatprep.subr.mxu0 %v1364
    %4164 = vmatpush1.msra.mxu0 %v1363
    %4165 = vmatprep.subr.mxu0 %v1368
    %4166 = vmatpush1.msra.mxu0 %v1367
    %4167 = vmatprep.subr.mxu0 %v1372
    %4168 = vmatpush1.msra.mxu0 %v1371
    %4169 = vmatprep.subr.mxu0 %v1376
    %4170 = vmatpush1.msra.mxu0 %v1375
    %4171 = vmatprep.subr.mxu0 %v1380
    %4172 = vmatpush1.msra.mxu0 %v1379
    %4173 = vmatprep.subr.mxu0 %v1384
    %4174 = vmatpush1.msra.mxu0 %v1383
    %4175 = vmatprep.subr.mxu0 %v1388
    %4176 = vmatpush1.msra.mxu0 %v1387
    %4177 = vmatprep.subr.mxu0 %v1392
    %4178 = vmatpush1.msra.mxu0 %v1391
    %4179 = vmatprep.subr.mxu0 %v1396
    %4180 = vmatpush1.msra.mxu0 %v1395
    %4181 = vmatprep.subr.mxu0 %v1400
    %4182 = vmatpush1.msra.mxu0 %v1399
    %4183 = vmatprep.subr.mxu0 %v1404
    %4184 = vmatpush1.msra.mxu0 %v1403
    %4185 = vmatprep.subr.mxu0 %v1408
    %4186 = vmatpush1.msra.mxu0 %v1407
    %4187 = vmatprep.subr.mxu0 %v1412
    %4188 = vmatpush1.msra.mxu0 %v1411
    %4189 = vmatprep.subr.mxu0 %v1416
    %4190 = vmatpush1.msra.mxu0 %v1415
    %4191 = vmatprep.subr.mxu0 %v1420
    %4192 = vmatpush1.msra.mxu0 %v1419
    %4193 = vmatprep.subr.mxu0 %v1424
    %4194 = vmatpush1.msra.mxu0 %v1423
    %4195 = vmatprep.subr.mxu0 %v1428
    %4196 = vmatpush1.msra.mxu0 %v1427
    %4197 = vmatprep.subr.mxu0 %v1432
    %4198 = vmatpush1.msra.mxu0 %v1431
    %4199 = vmatprep.subr.mxu0 %v1436
    %4200 = vmatpush1.msra.mxu0 %v1435
    %4201 = vmatprep.mubr.f32.mxu0 %v1296
    %4202 = vmatmul.mubr.f32.gmra.mrb[0].mxu0 %v1295
    %v4203 = vpop.f32.mrb[0].mxu0
    %v4204 = vadd.f32 %v3819, %v4203
    %v4205 = vpop.f32.mrb[0].mxu0
    %v4206 = vadd.f32 %v3821, %v4205
    %4207 = vmatprep.mubr.f32.mxu0 %v1304
    %4208 = vmatmul.mubr.f32.gmra.mrb[0].mxu0 %v1303
    %v4209 = vpop.f32.mrb[0].mxu0
    %v4210 = vadd.f32 %v3825, %v4209
    %v4211 = vpop.f32.mrb[0].mxu0
    %v4212 = vadd.f32 %v3827, %v4211
    %4213 = vdwg.mxu0
    %4214 = vmatprep.subr.mxu0 %v1440
    %4215 = vmatpush1.msra.mxu0 %v1439
    %4216 = vmatprep.subr.mxu0 %v1444
    %4217 = vmatpush1.msra.mxu0 %v1443
    %4218 = vmatprep.subr.mxu0 %v1448
    %4219 = vmatpush1.msra.mxu0 %v1447
    %4220 = vmatprep.subr.mxu0 %v1452
    %4221 = vmatpush1.msra.mxu0 %v1451
    %4222 = vmatprep.subr.mxu0 %v1456
    %4223 = vmatpush1.msra.mxu0 %v1455
    %4224 = vmatprep.subr.mxu0 %v1460
    %4225 = vmatpush1.msra.mxu0 %v1459
    %4226 = vmatprep.subr.mxu0 %v1464
    %4227 = vmatpush1.msra.mxu0 %v1463
    %4228 = vmatprep.subr.mxu0 %v1468
    %4229 = vmatpush1.msra.mxu0 %v1467
    %4230 = vmatprep.subr.mxu0 %v1472
    %4231 = vmatpush1.msra.mxu0 %v1471
    %4232 = vmatprep.subr.mxu0 %v1476
    %4233 = vmatpush1.msra.mxu0 %v1475
    %4234 = vmatprep.subr.mxu0 %v1480
    %4235 = vmatpush1.msra.mxu0 %v1479
    %4236 = vmatprep.subr.mxu0 %v1484
    %4237 = vmatpush1.msra.mxu0 %v1483
    %4238 = vmatprep.subr.mxu0 %v1488
    %4239 = vmatpush1.msra.mxu0 %v1487
    %4240 = vmatprep.subr.mxu0 %v1492
    %4241 = vmatpush1.msra.mxu0 %v1491
    %4242 = vmatprep.subr.mxu0 %v1496
    %4243 = vmatpush1.msra.mxu0 %v1495
    %4244 = vmatprep.subr.mxu0 %v1500
    %4245 = vmatpush1.msra.mxu0 %v1499
    %4246 = vmatprep.subr.mxu0 %v1504
    %4247 = vmatpush1.msra.mxu0 %v1503
    %4248 = vmatprep.subr.mxu0 %v1508
    %4249 = vmatpush1.msra.mxu0 %v1507
    %4250 = vmatprep.subr.mxu0 %v1512
    %4251 = vmatpush1.msra.mxu0 %v1511
    %4252 = vmatprep.subr.mxu0 %v1516
    %4253 = vmatpush1.msra.mxu0 %v1515
    %4254 = vmatprep.subr.mxu0 %v1520
    %4255 = vmatpush1.msra.mxu0 %v1519
    %4256 = vmatprep.subr.mxu0 %v1524
    %4257 = vmatpush1.msra.mxu0 %v1523
    %4258 = vmatprep.subr.mxu0 %v1528
    %4259 = vmatpush1.msra.mxu0 %v1527
    %4260 = vmatprep.subr.mxu0 %v1532
    %4261 = vmatpush1.msra.mxu0 %v1531
    %4262 = vmatprep.subr.mxu0 %v1536
    %4263 = vmatpush1.msra.mxu0 %v1535
    %4264 = vmatprep.subr.mxu0 %v1540
    %4265 = vmatpush1.msra.mxu0 %v1539
    %4266 = vmatprep.subr.mxu0 %v1544
    %4267 = vmatpush1.msra.mxu0 %v1543
    %4268 = vmatprep.subr.mxu0 %v1548
    %4269 = vmatpush1.msra.mxu0 %v1547
    %4270 = vmatprep.subr.mxu0 %v1552
    %4271 = vmatpush1.msra.mxu0 %v1551
    %4272 = vmatprep.subr.mxu0 %v1556
    %4273 = vmatpush1.msra.mxu0 %v1555
    %4274 = vmatprep.subr.mxu0 %v1560
    %4275 = vmatpush1.msra.mxu0 %v1559
    %4276 = vmatprep.subr.mxu0 %v1564
    %4277 = vmatpush1.msra.mxu0 %v1563
    %4278 = vmatprep.mubr.f32.mxu0 %v1298
    %4279 = vmatmul.mubr.f32.gmra.mrb[0].mxu0 %v1297
    %v4280 = vpop.f32.mrb[0].mxu0
    %v4281 = vadd.f32 %v4204, %v4280
    %v4282 = vpop.f32.mrb[0].mxu0
    %v4283 = vadd.f32 %v4206, %v4282
    %4284 = vmatprep.mubr.f32.mxu0 %v1306
    %4285 = vmatmul.mubr.f32.gmra.mrb[0].mxu0 %v1305
    %v4286 = vpop.f32.mrb[0].mxu0
    %v4287 = vadd.f32 %v4210, %v4286
    %v4288 = vpop.f32.mrb[0].mxu0
    %v4289 = vadd.f32 %v4212, %v4288
    %4290 = vdwg.mxu0
    %4291 = vmatprep.subr.mxu0 %v1568
    %4292 = vmatpush1.msra.mxu0 %v1567
    %4293 = vmatprep.subr.mxu0 %v1572
    %4294 = vmatpush1.msra.mxu0 %v1571
    %4295 = vmatprep.subr.mxu0 %v1576
    %4296 = vmatpush1.msra.mxu0 %v1575
    %4297 = vmatprep.subr.mxu0 %v1580
    %4298 = vmatpush1.msra.mxu0 %v1579
    %4299 = vmatprep.subr.mxu0 %v1584
    %4300 = vmatpush1.msra.mxu0 %v1583
    %4301 = vmatprep.subr.mxu0 %v1588
    %4302 = vmatpush1.msra.mxu0 %v1587
    %4303 = vmatprep.subr.mxu0 %v1592
    %4304 = vmatpush1.msra.mxu0 %v1591
    %4305 = vmatprep.subr.mxu0 %v1596
    %4306 = vmatpush1.msra.mxu0 %v1595
    %4307 = vmatprep.subr.mxu0 %v1600
    %4308 = vmatpush1.msra.mxu0 %v1599
    %4309 = vmatprep.subr.mxu0 %v1604
    %4310 = vmatpush1.msra.mxu0 %v1603
    %4311 = vmatprep.subr.mxu0 %v1608
    %4312 = vmatpush1.msra.mxu0 %v1607
    %4313 = vmatprep.subr.mxu0 %v1612
    %4314 = vmatpush1.msra.mxu0 %v1611
    %4315 = vmatprep.subr.mxu0 %v1616
    %4316 = vmatpush1.msra.mxu0 %v1615
    %4317 = vmatprep.subr.mxu0 %v1620
    %4318 = vmatpush1.msra.mxu0 %v1619
    %4319 = vmatprep.subr.mxu0 %v1624
    %4320 = vmatpush1.msra.mxu0 %v1623
    %4321 = vmatprep.subr.mxu0 %v1628
    %4322 = vmatpush1.msra.mxu0 %v1627
    %4323 = vmatprep.subr.mxu0 %v1632
    %4324 = vmatpush1.msra.mxu0 %v1631
    %4325 = vmatprep.subr.mxu0 %v1636
    %4326 = vmatpush1.msra.mxu0 %v1635
    %4327 = vmatprep.subr.mxu0 %v1640
    %4328 = vmatpush1.msra.mxu0 %v1639
    %4329 = vmatprep.subr.mxu0 %v1644
    %4330 = vmatpush1.msra.mxu0 %v1643
    %4331 = vmatprep.subr.mxu0 %v1648
    %4332 = vmatpush1.msra.mxu0 %v1647
    %4333 = vmatprep.subr.mxu0 %v1652
    %4334 = vmatpush1.msra.mxu0 %v1651
    %4335 = vmatprep.subr.mxu0 %v1656
    %4336 = vmatpush1.msra.mxu0 %v1655
    %4337 = vmatprep.subr.mxu0 %v1660
    %4338 = vmatpush1.msra.mxu0 %v1659
    %4339 = vmatprep.subr.mxu0 %v1664
    %4340 = vmatpush1.msra.mxu0 %v1663
    %4341 = vmatprep.subr.mxu0 %v1668
    %4342 = vmatpush1.msra.mxu0 %v1667
    %4343 = vmatprep.subr.mxu0 %v1672
    %4344 = vmatpush1.msra.mxu0 %v1671
    %4345 = vmatprep.subr.mxu0 %v1676
    %4346 = vmatpush1.msra.mxu0 %v1675
    %4347 = vmatprep.subr.mxu0 %v1680
    %4348 = vmatpush1.msra.mxu0 %v1679
    %4349 = vmatprep.subr.mxu0 %v1684
    %4350 = vmatpush1.msra.mxu0 %v1683
    %4351 = vmatprep.subr.mxu0 %v1688
    %4352 = vmatpush1.msra.mxu0 %v1687
    %4353 = vmatprep.subr.mxu0 %v1692
    %4354 = vmatpush1.msra.mxu0 %v1691
    %4355 = vmatprep.mubr.f32.mxu0 %v1300
    %4356 = vmatmul.mubr.f32.gmra.mrb[0].mxu0 %v1299
    %v4357 = vpop.f32.mrb[0].mxu0
    %v4358 = vadd.f32 %v4281, %v4357
    %v4359 = vpop.f32.mrb[0].mxu0
    %v4360 = vadd.f32 %v4283, %v4359
    %4361 = vmatprep.mubr.f32.mxu0 %v1308
    %4362 = vmatmul.mubr.f32.gmra.mrb[0].mxu0 %v1307
    %v4363 = vpop.f32.mrb[0].mxu0
    %v4364 = vadd.f32 %v4287, %v4363
    %v4365 = vpop.f32.mrb[0].mxu0
    %v4366 = vadd.f32 %v4289, %v4365
    %4367 = vdwg.mxu0
    %4368 = vmatprep.subr.mxu0 %v1696
    %4369 = vmatpush1.msra.mxu0 %v1695
    %4370 = vmatprep.subr.mxu0 %v1700
    %4371 = vmatpush1.msra.mxu0 %v1699
    %4372 = vmatprep.subr.mxu0 %v1704
    %4373 = vmatpush1.msra.mxu0 %v1703
    %4374 = vmatprep.subr.mxu0 %v1708
    %4375 = vmatpush1.msra.mxu0 %v1707
    %4376 = vmatprep.subr.mxu0 %v1712
    %4377 = vmatpush1.msra.mxu0 %v1711
    %4378 = vmatprep.subr.mxu0 %v1716
    %4379 = vmatpush1.msra.mxu0 %v1715
    %4380 = vmatprep.subr.mxu0 %v1720
    %4381 = vmatpush1.msra.mxu0 %v1719
    %4382 = vmatprep.subr.mxu0 %v1724
    %4383 = vmatpush1.msra.mxu0 %v1723
    %4384 = vmatprep.subr.mxu0 %v1728
    %4385 = vmatpush1.msra.mxu0 %v1727
    %4386 = vmatprep.subr.mxu0 %v1732
    %4387 = vmatpush1.msra.mxu0 %v1731
    %4388 = vmatprep.subr.mxu0 %v1736
    %4389 = vmatpush1.msra.mxu0 %v1735
    %4390 = vmatprep.subr.mxu0 %v1740
    %4391 = vmatpush1.msra.mxu0 %v1739
    %4392 = vmatprep.subr.mxu0 %v1744
    %4393 = vmatpush1.msra.mxu0 %v1743
    %4394 = vmatprep.subr.mxu0 %v1748
    %4395 = vmatpush1.msra.mxu0 %v1747
    %4396 = vmatprep.subr.mxu0 %v1752
    %4397 = vmatpush1.msra.mxu0 %v1751
    %4398 = vmatprep.subr.mxu0 %v1756
    %4399 = vmatpush1.msra.mxu0 %v1755
    %4400 = vmatprep.subr.mxu0 %v1760
    %4401 = vmatpush1.msra.mxu0 %v1759
    %4402 = vmatprep.subr.mxu0 %v1764
    %4403 = vmatpush1.msra.mxu0 %v1763
    %4404 = vmatprep.subr.mxu0 %v1768
    %4405 = vmatpush1.msra.mxu0 %v1767
    %4406 = vmatprep.subr.mxu0 %v1772
    %4407 = vmatpush1.msra.mxu0 %v1771
    %4408 = vmatprep.subr.mxu0 %v1776
    %4409 = vmatpush1.msra.mxu0 %v1775
    %4410 = vmatprep.subr.mxu0 %v1780
    %4411 = vmatpush1.msra.mxu0 %v1779
    %4412 = vmatprep.subr.mxu0 %v1784
    %4413 = vmatpush1.msra.mxu0 %v1783
    %4414 = vmatprep.subr.mxu0 %v1788
    %4415 = vmatpush1.msra.mxu0 %v1787
    %4416 = vmatprep.subr.mxu0 %v1792
    %4417 = vmatpush1.msra.mxu0 %v1791
    %4418 = vmatprep.subr.mxu0 %v1796
    %4419 = vmatpush1.msra.mxu0 %v1795
    %4420 = vmatprep.subr.mxu0 %v1800
    %4421 = vmatpush1.msra.mxu0 %v1799
    %4422 = vmatprep.subr.mxu0 %v1804
    %4423 = vmatpush1.msra.mxu0 %v1803
    %4424 = vmatprep.subr.mxu0 %v1808
    %4425 = vmatpush1.msra.mxu0 %v1807
    %4426 = vmatprep.subr.mxu0 %v1812
    %4427 = vmatpush1.msra.mxu0 %v1811
    %4428 = vmatprep.subr.mxu0 %v1816
    %4429 = vmatpush1.msra.mxu0 %v1815
    %4430 = vmatprep.subr.mxu0 %v1820
    %4431 = vmatpush1.msra.mxu0 %v1819
    %4432 = vmatprep.mubr.f32.mxu0 %v1302
    %4433 = vmatmul.mubr.f32.gmra.mrb[0].mxu0 %v1301
    %v4434 = vpop.f32.mrb[0].mxu0
    %v4435 = vadd.f32 %v4358, %v4434
    %v4436 = vpop.f32.mrb[0].mxu0
    %v4437 = vadd.f32 %v4360, %v4436
    %4438 = vmatprep.mubr.f32.mxu0 %v1310
    %4439 = vmatmul.mubr.f32.gmra.mrb[0].mxu0 %v1309
    %v4440 = vpop.f32.mrb[0].mxu0
    %v4441 = vadd.f32 %v4364, %v4440
    %v4442 = vpop.f32.mrb[0].mxu0
    %v4443 = vadd.f32 %v4366, %v4442
    %4444 = vdwg.mxu0
    %4445 = vmatprep.subr.mxu0 %v1314
    %4446 = vmatpush1.msra.mxu0 %v1313
    %4447 = vmatprep.subr.mxu0 %v1318
    %4448 = vmatpush1.msra.mxu0 %v1317
    %4449 = vmatprep.subr.mxu0 %v1322
    %4450 = vmatpush1.msra.mxu0 %v1321
    %4451 = vmatprep.subr.mxu0 %v1326
    %4452 = vmatpush1.msra.mxu0 %v1325
    %4453 = vmatprep.subr.mxu0 %v1330
    %4454 = vmatpush1.msra.mxu0 %v1329
    %4455 = vmatprep.subr.mxu0 %v1334
    %4456 = vmatpush1.msra.mxu0 %v1333
    %4457 = vmatprep.subr.mxu0 %v1338
    %4458 = vmatpush1.msra.mxu0 %v1337
    %4459 = vmatprep.subr.mxu0 %v1342
    %4460 = vmatpush1.msra.mxu0 %v1341
    %4461 = vmatprep.subr.mxu0 %v1346
    %4462 = vmatpush1.msra.mxu0 %v1345
    %4463 = vmatprep.subr.mxu0 %v1350
    %4464 = vmatpush1.msra.mxu0 %v1349
    %4465 = vmatprep.subr.mxu0 %v1354
    %4466 = vmatpush1.msra.mxu0 %v1353
    %4467 = vmatprep.subr.mxu0 %v1358
    %4468 = vmatpush1.msra.mxu0 %v1357
    %4469 = vmatprep.subr.mxu0 %v1362
    %4470 = vmatpush1.msra.mxu0 %v1361
    %4471 = vmatprep.subr.mxu0 %v1366
    %4472 = vmatpush1.msra.mxu0 %v1365
    %4473 = vmatprep.subr.mxu0 %v1370
    %4474 = vmatpush1.msra.mxu0 %v1369
    %4475 = vmatprep.subr.mxu0 %v1374
    %4476 = vmatpush1.msra.mxu0 %v1373
    %4477 = vmatprep.subr.mxu0 %v1378
    %4478 = vmatpush1.msra.mxu0 %v1377
    %4479 = vmatprep.subr.mxu0 %v1382
    %4480 = vmatpush1.msra.mxu0 %v1381
    %4481 = vmatprep.subr.mxu0 %v1386
    %4482 = vmatpush1.msra.mxu0 %v1385
    %4483 = vmatprep.subr.mxu0 %v1390
    %4484 = vmatpush1.msra.mxu0 %v1389
    %4485 = vmatprep.subr.mxu0 %v1394
    %4486 = vmatpush1.msra.mxu0 %v1393
    %4487 = vmatprep.subr.mxu0 %v1398
    %4488 = vmatpush1.msra.mxu0 %v1397
    %4489 = vmatprep.subr.mxu0 %v1402
    %4490 = vmatpush1.msra.mxu0 %v1401
    %4491 = vmatprep.subr.mxu0 %v1406
    %4492 = vmatpush1.msra.mxu0 %v1405
    %4493 = vmatprep.subr.mxu0 %v1410
    %4494 = vmatpush1.msra.mxu0 %v1409
    %4495 = vmatprep.subr.mxu0 %v1414
    %4496 = vmatpush1.msra.mxu0 %v1413
    %4497 = vmatprep.subr.mxu0 %v1418
    %4498 = vmatpush1.msra.mxu0 %v1417
    %4499 = vmatprep.subr.mxu0 %v1422
    %4500 = vmatpush1.msra.mxu0 %v1421
    %4501 = vmatprep.subr.mxu0 %v1426
    %4502 = vmatpush1.msra.mxu0 %v1425
    %4503 = vmatprep.subr.mxu0 %v1430
    %4504 = vmatpush1.msra.mxu0 %v1429
    %4505 = vmatprep.subr.mxu0 %v1434
    %4506 = vmatpush1.msra.mxu0 %v1433
    %4507 = vmatprep.subr.mxu0 %v1438
    %4508 = vmatpush1.msra.mxu0 %v1437
    %4509 = vmatprep.mubr.f32.mxu0 %v1296
    %4510 = vmatmul.mubr.f32.gmra.mrb[0].mxu0 %v1295
    %v4511 = vpop.f32.mrb[0].mxu0
    %v4512 = vadd.f32 %v4127, %v4511
    %v4513 = vpop.f32.mrb[0].mxu0
    %v4514 = vadd.f32 %v4129, %v4513
    %4515 = vmatprep.mubr.f32.mxu0 %v1304
    %4516 = vmatmul.mubr.f32.gmra.mrb[0].mxu0 %v1303
    %v4517 = vpop.f32.mrb[0].mxu0
    %v4518 = vadd.f32 %v4133, %v4517
    %v4519 = vpop.f32.mrb[0].mxu0
    %v4520 = vadd.f32 %v4135, %v4519
    %4521 = vdwg.mxu0
    %4522 = vmatprep.subr.mxu0 %v1442
    %4523 = vmatpush1.msra.mxu0 %v1441
    %4524 = vmatprep.subr.mxu0 %v1446
    %4525 = vmatpush1.msra.mxu0 %v1445
    %4526 = vmatprep.subr.mxu0 %v1450
    %4527 = vmatpush1.msra.mxu0 %v1449
    %4528 = vmatprep.subr.mxu0 %v1454
    %4529 = vmatpush1.msra.mxu0 %v1453
    %4530 = vmatprep.subr.mxu0 %v1458
    %4531 = vmatpush1.msra.mxu0 %v1457
    %4532 = vmatprep.subr.mxu0 %v1462
    %4533 = vmatpush1.msra.mxu0 %v1461
    %4534 = vmatprep.subr.mxu0 %v1466
    %4535 = vmatpush1.msra.mxu0 %v1465
    %4536 = vmatprep.subr.mxu0 %v1470
    %4537 = vmatpush1.msra.mxu0 %v1469
    %4538 = vmatprep.subr.mxu0 %v1474
    %4539 = vmatpush1.msra.mxu0 %v1473
    %4540 = vmatprep.subr.mxu0 %v1478
    %4541 = vmatpush1.msra.mxu0 %v1477
    %4542 = vmatprep.subr.mxu0 %v1482
    %4543 = vmatpush1.msra.mxu0 %v1481
    %4544 = vmatprep.subr.mxu0 %v1486
    %4545 = vmatpush1.msra.mxu0 %v1485
    %4546 = vmatprep.subr.mxu0 %v1490
    %4547 = vmatpush1.msra.mxu0 %v1489
    %4548 = vmatprep.subr.mxu0 %v1494
    %4549 = vmatpush1.msra.mxu0 %v1493
    %4550 = vmatprep.subr.mxu0 %v1498
    %4551 = vmatpush1.msra.mxu0 %v1497
    %4552 = vmatprep.subr.mxu0 %v1502
    %4553 = vmatpush1.msra.mxu0 %v1501
    %4554 = vmatprep.subr.mxu0 %v1506
    %4555 = vmatpush1.msra.mxu0 %v1505
    %4556 = vmatprep.subr.mxu0 %v1510
    %4557 = vmatpush1.msra.mxu0 %v1509
    %4558 = vmatprep.subr.mxu0 %v1514
    %4559 = vmatpush1.msra.mxu0 %v1513
    %4560 = vmatprep.subr.mxu0 %v1518
    %4561 = vmatpush1.msra.mxu0 %v1517
    %4562 = vmatprep.subr.mxu0 %v1522
    %4563 = vmatpush1.msra.mxu0 %v1521
    %4564 = vmatprep.subr.mxu0 %v1526
    %4565 = vmatpush1.msra.mxu0 %v1525
    %4566 = vmatprep.subr.mxu0 %v1530
    %4567 = vmatpush1.msra.mxu0 %v1529
    %4568 = vmatprep.subr.mxu0 %v1534
    %4569 = vmatpush1.msra.mxu0 %v1533
    %4570 = vmatprep.subr.mxu0 %v1538
    %4571 = vmatpush1.msra.mxu0 %v1537
    %4572 = vmatprep.subr.mxu0 %v1542
    %4573 = vmatpush1.msra.mxu0 %v1541
    %4574 = vmatprep.subr.mxu0 %v1546
    %4575 = vmatpush1.msra.mxu0 %v1545
    %4576 = vmatprep.subr.mxu0 %v1550
    %4577 = vmatpush1.msra.mxu0 %v1549
    %4578 = vmatprep.subr.mxu0 %v1554
    %4579 = vmatpush1.msra.mxu0 %v1553
    %4580 = vmatprep.subr.mxu0 %v1558
    %4581 = vmatpush1.msra.mxu0 %v1557
    %4582 = vmatprep.subr.mxu0 %v1562
    %4583 = vmatpush1.msra.mxu0 %v1561
    %4584 = vmatprep.subr.mxu0 %v1566
    %4585 = vmatpush1.msra.mxu0 %v1565
    %4586 = vmatprep.mubr.f32.mxu0 %v1298
    %4587 = vmatmul.mubr.f32.gmra.mrb[0].mxu0 %v1297
    %v4588 = vpop.f32.mrb[0].mxu0
    %v4589 = vadd.f32 %v4512, %v4588
    %v4590 = vpop.f32.mrb[0].mxu0
    %v4591 = vadd.f32 %v4514, %v4590
    %4592 = vmatprep.mubr.f32.mxu0 %v1306
    %4593 = vmatmul.mubr.f32.gmra.mrb[0].mxu0 %v1305
    %v4594 = vpop.f32.mrb[0].mxu0
    %v4595 = vadd.f32 %v4518, %v4594
    %v4596 = vpop.f32.mrb[0].mxu0
    %v4597 = vadd.f32 %v4520, %v4596
    %4598 = vdwg.mxu0
    %4599 = vmatprep.subr.mxu0 %v1570
    %4600 = vmatpush1.msra.mxu0 %v1569
    %4601 = vmatprep.subr.mxu0 %v1574
    %4602 = vmatpush1.msra.mxu0 %v1573
    %4603 = vmatprep.subr.mxu0 %v1578
    %4604 = vmatpush1.msra.mxu0 %v1577
    %4605 = vmatprep.subr.mxu0 %v1582
    %4606 = vmatpush1.msra.mxu0 %v1581
    %4607 = vmatprep.subr.mxu0 %v1586
    %4608 = vmatpush1.msra.mxu0 %v1585
    %4609 = vmatprep.subr.mxu0 %v1590
    %4610 = vmatpush1.msra.mxu0 %v1589
    %4611 = vmatprep.subr.mxu0 %v1594
    %4612 = vmatpush1.msra.mxu0 %v1593
    %4613 = vmatprep.subr.mxu0 %v1598
    %4614 = vmatpush1.msra.mxu0 %v1597
    %4615 = vmatprep.subr.mxu0 %v1602
    %4616 = vmatpush1.msra.mxu0 %v1601
    %4617 = vmatprep.subr.mxu0 %v1606
    %4618 = vmatpush1.msra.mxu0 %v1605
    %4619 = vmatprep.subr.mxu0 %v1610
    %4620 = vmatpush1.msra.mxu0 %v1609
    %4621 = vmatprep.subr.mxu0 %v1614
    %4622 = vmatpush1.msra.mxu0 %v1613
    %4623 = vmatprep.subr.mxu0 %v1618
    %4624 = vmatpush1.msra.mxu0 %v1617
    %4625 = vmatprep.subr.mxu0 %v1622
    %4626 = vmatpush1.msra.mxu0 %v1621
    %4627 = vmatprep.subr.mxu0 %v1626
    %4628 = vmatpush1.msra.mxu0 %v1625
    %4629 = vmatprep.subr.mxu0 %v1630
    %4630 = vmatpush1.msra.mxu0 %v1629
    %4631 = vmatprep.subr.mxu0 %v1634
    %4632 = vmatpush1.msra.mxu0 %v1633
    %4633 = vmatprep.subr.mxu0 %v1638
    %4634 = vmatpush1.msra.mxu0 %v1637
    %4635 = vmatprep.subr.mxu0 %v1642
    %4636 = vmatpush1.msra.mxu0 %v1641
    %4637 = vmatprep.subr.mxu0 %v1646
    %4638 = vmatpush1.msra.mxu0 %v1645
    %4639 = vmatprep.subr.mxu0 %v1650
    %4640 = vmatpush1.msra.mxu0 %v1649
    %4641 = vmatprep.subr.mxu0 %v1654
    %4642 = vmatpush1.msra.mxu0 %v1653
    %4643 = vmatprep.subr.mxu0 %v1658
    %4644 = vmatpush1.msra.mxu0 %v1657
    %4645 = vmatprep.subr.mxu0 %v1662
    %4646 = vmatpush1.msra.mxu0 %v1661
    %4647 = vmatprep.subr.mxu0 %v1666
    %4648 = vmatpush1.msra.mxu0 %v1665
    %4649 = vmatprep.subr.mxu0 %v1670
    %4650 = vmatpush1.msra.mxu0 %v1669
    %4651 = vmatprep.subr.mxu0 %v1674
    %4652 = vmatpush1.msra.mxu0 %v1673
    %4653 = vmatprep.subr.mxu0 %v1678
    %4654 = vmatpush1.msra.mxu0 %v1677
    %4655 = vmatprep.subr.mxu0 %v1682
    %4656 = vmatpush1.msra.mxu0 %v1681
    %4657 = vmatprep.subr.mxu0 %v1686
    %4658 = vmatpush1.msra.mxu0 %v1685
    %4659 = vmatprep.subr.mxu0 %v1690
    %4660 = vmatpush1.msra.mxu0 %v1689
    %4661 = vmatprep.subr.mxu0 %v1694
    %4662 = vmatpush1.msra.mxu0 %v1693
    %4663 = vmatprep.mubr.f32.mxu0 %v1300
    %4664 = vmatmul.mubr.f32.gmra.mrb[0].mxu0 %v1299
    %v4665 = vpop.f32.mrb[0].mxu0
    %v4666 = vadd.f32 %v4589, %v4665
    %v4667 = vpop.f32.mrb[0].mxu0
    %v4668 = vadd.f32 %v4591, %v4667
    %4669 = vmatprep.mubr.f32.mxu0 %v1308
    %4670 = vmatmul.mubr.f32.gmra.mrb[0].mxu0 %v1307
    %v4671 = vpop.f32.mrb[0].mxu0
    %v4672 = vadd.f32 %v4595, %v4671
    %v4673 = vpop.f32.mrb[0].mxu0
    %v4674 = vadd.f32 %v4597, %v4673
    %4675 = vdwg.mxu0
    %4676 = vmatprep.subr.mxu0 %v1698
    %4677 = vmatpush1.msra.mxu0 %v1697
    %4678 = vmatprep.subr.mxu0 %v1702
    %4679 = vmatpush1.msra.mxu0 %v1701
    %4680 = vmatprep.subr.mxu0 %v1706
    %4681 = vmatpush1.msra.mxu0 %v1705
    %4682 = vmatprep.subr.mxu0 %v1710
    %4683 = vmatpush1.msra.mxu0 %v1709
    %4684 = vmatprep.subr.mxu0 %v1714
    %4685 = vmatpush1.msra.mxu0 %v1713
    %4686 = vmatprep.subr.mxu0 %v1718
    %4687 = vmatpush1.msra.mxu0 %v1717
    %4688 = vmatprep.subr.mxu0 %v1722
    %4689 = vmatpush1.msra.mxu0 %v1721
    %4690 = vmatprep.subr.mxu0 %v1726
    %4691 = vmatpush1.msra.mxu0 %v1725
    %4692 = vmatprep.subr.mxu0 %v1730
    %4693 = vmatpush1.msra.mxu0 %v1729
    %4694 = vmatprep.subr.mxu0 %v1734
    %4695 = vmatpush1.msra.mxu0 %v1733
    %4696 = vmatprep.subr.mxu0 %v1738
    %4697 = vmatpush1.msra.mxu0 %v1737
    %4698 = vmatprep.subr.mxu0 %v1742
    %4699 = vmatpush1.msra.mxu0 %v1741
    %4700 = vmatprep.subr.mxu0 %v1746
    %4701 = vmatpush1.msra.mxu0 %v1745
    %4702 = vmatprep.subr.mxu0 %v1750
    %4703 = vmatpush1.msra.mxu0 %v1749
    %4704 = vmatprep.subr.mxu0 %v1754
    %4705 = vmatpush1.msra.mxu0 %v1753
    %4706 = vmatprep.subr.mxu0 %v1758
    %4707 = vmatpush1.msra.mxu0 %v1757
    %4708 = vmatprep.subr.mxu0 %v1762
    %4709 = vmatpush1.msra.mxu0 %v1761
    %4710 = vmatprep.subr.mxu0 %v1766
    %4711 = vmatpush1.msra.mxu0 %v1765
    %4712 = vmatprep.subr.mxu0 %v1770
    %4713 = vmatpush1.msra.mxu0 %v1769
    %4714 = vmatprep.subr.mxu0 %v1774
    %4715 = vmatpush1.msra.mxu0 %v1773
    %4716 = vmatprep.subr.mxu0 %v1778
    %4717 = vmatpush1.msra.mxu0 %v1777
    %4718 = vmatprep.subr.mxu0 %v1782
    %4719 = vmatpush1.msra.mxu0 %v1781
    %4720 = vmatprep.subr.mxu0 %v1786
    %4721 = vmatpush1.msra.mxu0 %v1785
    %4722 = vmatprep.subr.mxu0 %v1790
    %4723 = vmatpush1.msra.mxu0 %v1789
    %4724 = vmatprep.subr.mxu0 %v1794
    %4725 = vmatpush1.msra.mxu0 %v1793
    %4726 = vmatprep.subr.mxu0 %v1798
    %4727 = vmatpush1.msra.mxu0 %v1797
    %4728 = vmatprep.subr.mxu0 %v1802
    %4729 = vmatpush1.msra.mxu0 %v1801
    %4730 = vmatprep.subr.mxu0 %v1806
    %4731 = vmatpush1.msra.mxu0 %v1805
    %4732 = vmatprep.subr.mxu0 %v1810
    %4733 = vmatpush1.msra.mxu0 %v1809
    %4734 = vmatprep.subr.mxu0 %v1814
    %4735 = vmatpush1.msra.mxu0 %v1813
    %4736 = vmatprep.subr.mxu0 %v1818
    %4737 = vmatpush1.msra.mxu0 %v1817
    %4738 = vmatprep.subr.mxu0 %v1822
    %4739 = vmatpush1.msra.mxu0 %v1821
    %4740 = vmatprep.mubr.f32.mxu0 %v1302
    %4741 = vmatmul.mubr.f32.gmra.mrb[0].mxu0 %v1301
    %v4742 = vpop.f32.mrb[0].mxu0
    %v4743 = vadd.f32 %v4666, %v4742
    %v4744 = vpop.f32.mrb[0].mxu0
    %v4745 = vadd.f32 %v4668, %v4744
    %4746 = vmatprep.mubr.f32.mxu0 %v1310
    %4747 = vmatmul.mubr.f32.gmra.mrb[0].mxu0 %v1309
    %v4748 = vpop.f32.mrb[0].mxu0
    %v4749 = vadd.f32 %v4672, %v4748
    %v4750 = vpop.f32.mrb[0].mxu0
    %v4751 = vadd.f32 %v4674, %v4750
    %4752 = vdwg.mxu0
    %v4754 = vlaneseq
    %v4755 = vshrl.u32 %v4754, 7
    %v4756 = vsub.s32 0, %v4755
    %v4757 = vrot.slane %v122, %v4756
    %v4758 = vlaneseq
    %v4759 = vshrl.u32 %v4758, 7
    %v4760 = vsub.s32 1, %v4759
    %v4761 = vrot.slane %v122, %v4760
    %v4762 = vlaneseq
    %v4763 = vshrl.u32 %v4762, 7
    %v4764 = vsub.s32 2, %v4763
    %v4765 = vrot.slane %v122, %v4764
    %v4766 = vlaneseq
    %v4767 = vshrl.u32 %v4766, 7
    %v4768 = vsub.s32 3, %v4767
    %v4769 = vrot.slane %v122, %v4768
    %v4774 = vadd.f32 %v4435, %v4757
    %v4775 = vadd.f32 %v4437, %v4761
    %v4776 = vadd.f32 %v4743, %v4765
    %v4777 = vadd.f32 %v4745, %v4769
    %v4778 = vadd.f32 %v4441, %v4757
    %v4779 = vadd.f32 %v4443, %v4761
    %v4780 = vadd.f32 %v4749, %v4765
    %v4781 = vadd.f32 %v4751, %v4769
    %v4782 = vadd.f32 %v4774, %v114
    %v4783 = vadd.f32 %v4775, %v115
    %v4784 = vadd.f32 %v4776, %v116
    %v4785 = vadd.f32 %v4777, %v117
    %v4786 = vadd.f32 %v4778, %v118
    %v4787 = vadd.f32 %v4779, %v119
    %v4788 = vadd.f32 %v4780, %v120
    %v4789 = vadd.f32 %v4781, %v121
    %v4790 = vadd.f32 %v4782, %v4783
    %v4791 = vadd.f32 %v4790, %v4784
    %v4792 = vadd.f32 %v4791, %v4785
    %4793 = vadd.xlane.f32.xlu0 %v4792
    %v4794 = vpop.xlane.xlu0 %4793
    %v4795 = vadd.f32 %v4786, %v4787
    %v4796 = vadd.f32 %v4795, %v4788
    %v4797 = vadd.f32 %v4796, %v4789
    %4798 = vadd.xlane.f32.xlu0 %v4797
    %v4799 = vpop.xlane.xlu0 %4798
    %v4800 = vrcp.pop 512.0
    %v4801 = vmul.f32 %v4794, %v4800
    %v4802 = vmul.f32 %v4799, %v4800
    %v4803 = vsub.f32 %v4782, %v4801
    %v4804 = vsub.f32 %v4783, %v4801
    %v4805 = vsub.f32 %v4784, %v4801
    %v4806 = vsub.f32 %v4785, %v4801
    %v4807 = vsub.f32 %v4786, %v4802
    %v4808 = vsub.f32 %v4787, %v4802
    %v4809 = vsub.f32 %v4788, %v4802
    %v4810 = vsub.f32 %v4789, %v4802
    %v4811 = vmul.f32 %v4803, %v4803
    %v4812 = vmul.f32 %v4804, %v4804
    %v4813 = vmul.f32 %v4805, %v4805
    %v4814 = vmul.f32 %v4806, %v4806
    %v4815 = vmul.f32 %v4807, %v4807
    %v4816 = vmul.f32 %v4808, %v4808
    %v4817 = vmul.f32 %v4809, %v4809
    %v4818 = vmul.f32 %v4810, %v4810
    %v4819 = vadd.f32 %v4811, %v4812
    %v4820 = vadd.f32 %v4819, %v4813
    %v4821 = vadd.f32 %v4820, %v4814
    %4822 = vadd.xlane.f32.xlu0 %v4821
    %v4823 = vpop.xlane.xlu0 %4822
    %v4824 = vadd.f32 %v4815, %v4816
    %v4825 = vadd.f32 %v4824, %v4817
    %v4826 = vadd.f32 %v4825, %v4818
    %4827 = vadd.xlane.f32.xlu0 %v4826
    %v4828 = vpop.xlane.xlu0 %4827
    %v4829 = vmul.f32 %v4823, %v4800
    %v4830 = vmul.f32 %v4828, %v4800
    %v4831 = vadd.f32 %v4829, 1e-05
    %v4832 = vadd.f32 %v4830, 1e-05
    %v4833 = vrsqrt.pop %v4831
    %v4834 = vrsqrt.pop %v4832
    %v4835 = vmul.f32 %v4803, %v4833
    %v4836 = vmul.f32 %v4804, %v4833
    %v4837 = vmul.f32 %v4805, %v4833
    %v4838 = vmul.f32 %v4806, %v4833
    %v4839 = vmul.f32 %v4807, %v4834
    %v4840 = vmul.f32 %v4808, %v4834
    %v4841 = vmul.f32 %v4809, %v4834
    %v4842 = vmul.f32 %v4810, %v4834
    %v4844 = vlaneseq
    %v4845 = vshrl.u32 %v4844, 7
    %v4846 = vsub.s32 0, %v4845
    %v4847 = vrot.slane %v123, %v4846
    %v4848 = vlaneseq
    %v4849 = vshrl.u32 %v4848, 7
    %v4850 = vsub.s32 1, %v4849
    %v4851 = vrot.slane %v123, %v4850
    %v4852 = vlaneseq
    %v4853 = vshrl.u32 %v4852, 7
    %v4854 = vsub.s32 2, %v4853
    %v4855 = vrot.slane %v123, %v4854
    %v4856 = vlaneseq
    %v4857 = vshrl.u32 %v4856, 7
    %v4858 = vsub.s32 3, %v4857
    %v4859 = vrot.slane %v123, %v4858
    %v4864 = vmul.f32 %v4835, %v4847
    %v4865 = vmul.f32 %v4836, %v4851
    %v4866 = vmul.f32 %v4837, %v4855
    %v4867 = vmul.f32 %v4838, %v4859
    %v4868 = vmul.f32 %v4839, %v4847
    %v4869 = vmul.f32 %v4840, %v4851
    %v4870 = vmul.f32 %v4841, %v4855
    %v4871 = vmul.f32 %v4842, %v4859
    %v4873 = vlaneseq
    %v4874 = vshrl.u32 %v4873, 7
    %v4875 = vsub.s32 0, %v4874
    %v4876 = vrot.slane %v124, %v4875
    %v4877 = vlaneseq
    %v4878 = vshrl.u32 %v4877, 7
    %v4879 = vsub.s32 1, %v4878
    %v4880 = vrot.slane %v124, %v4879
    %v4881 = vlaneseq
    %v4882 = vshrl.u32 %v4881, 7
    %v4883 = vsub.s32 2, %v4882
    %v4884 = vrot.slane %v124, %v4883
    %v4885 = vlaneseq
    %v4886 = vshrl.u32 %v4885, 7
    %v4887 = vsub.s32 3, %v4886
    %v4888 = vrot.slane %v124, %v4887
    %v4893 = vadd.f32 %v4864, %v4876
    %v4894 = vadd.f32 %v4865, %v4880
    %v4895 = vadd.f32 %v4866, %v4884
    %v4896 = vadd.f32 %v4867, %v4888
    %v4897 = vadd.f32 %v4868, %v4876
    %v4898 = vadd.f32 %v4869, %v4880
    %v4899 = vadd.f32 %v4870, %v4884
    %v4900 = vadd.f32 %v4871, %v4888
    %4901 = vst [vmem:[#allocation14] sm:$0xff] %v4893
    %4902 = vst [vmem:[#allocation14 + $0x8] sm:$0xff] %v4894
    %4903 = vst [vmem:[#allocation14 + $0x10] sm:$0xff] %v4895
    %4904 = vst [vmem:[#allocation14 + $0x18] sm:$0xff] %v4896
    %4905 = vst [vmem:[#allocation14 + $0x20] sm:$0xff] %v4897
    %4906 = vst [vmem:[#allocation14 + $0x28] sm:$0xff] %v4898
    %4907 = vst [vmem:[#allocation14 + $0x30] sm:$0xff] %v4899
    %4908 = vst [vmem:[#allocation14 + $0x38] sm:$0xff] %v4900
    // Predicated region
    $region58: #{pos_wise_ffn.1} parent=1 // pred_check
      _
    $region59: #{pos_wise_ffn.1} parent=1 // pred_check_branch
      %4910 = sbr.rel (0) target = $region61
    $region60: #{pos_wise_ffn.1} parent=1 // pred_region
      %s4912 = ssub.s32 1024, 1024
      %4913 = vsyncadd [#allocation4], %s4912
      %s4914 = sshll.u32 [#allocation14], 4
      %s4915 = int_to_ptr.vmem [resolvable:$true] %s4914
      %4920 = dma.vmem_to_hbm [thread:$0]  %s4915, 1024, %s7, [#allocation4], 512, 512, 32
    $region61: #{pos_wise_ffn.1} parent=1 // pred_fallthru
      _
    // Predicated region
    $region62: #{pos_wise_ffn.1} parent=1 // pred_check
      _
    $region63: #{pos_wise_ffn.1} parent=1 // pred_check_branch
      %4922 = sbr.rel (0) target = $region65
    $region64: #{pos_wise_ffn.1} parent=1 // pred_region
      %4923 = dma.done [#allocation4], 1024
    $region65: #{pos_wise_ffn.1} parent=1 // pred_fallthru
      _
    %4924 = vsyncpa [#allocation3], 1
    %4925 = vsyncpa [#allocation6], 1
    %4926 = vsyncpa [#allocation9], 1
    %4927 = vsyncpa [#allocation12], 1
    %4928 = vsyncpa [#allocation4], 1

</llo_original>
